<compile_context>
chip_gen: v6e
topology: v6e:2x2x1
jax: 0.10.0
libtpu: 0.0.40
codegen_flags: <defaults>
</compile_context>

<pallas_src>
import functools

import numpy as np
import jax
import jax.numpy as jnp
from jax import lax
from jax.experimental import pallas as pl
from jax.experimental.pallas import tpu as pltpu

EPS = 1e-5
KSIZES = (5, 7, 9, 11)
DILS = (2, 3, 4, 5)
# f5 (k=9 / dil=4) never reaches the module's output (the reference appends f3
# twice instead) -> skip that branch entirely; output is identical.
LIVE_BRANCHES = (0, 1, 3)

_CPARAMS = pltpu.CompilerParams(
    dimension_semantics=("parallel",),
    vmem_limit_bytes=32 * 1024 * 1024,
)


# --------------------------------------------------------------------------
# Pallas kernels
# --------------------------------------------------------------------------
def _f12_mid_kernel(a33_ref, ah_ref, w12_ref, wb1_ref,
                    s12_ref, t12_ref, sm_ref, tm_ref,
                    f12_ref, mid_ref):
    # f12 = relu((a33 @ W[1x1 | 3x3]) * s + t)         -> (tm, 2*Cout)
    # mid = relu((a_h @ W[1xk, all branches]) * s + t) -> (tm, nb)
    y = jnp.dot(a33_ref[...], w12_ref[...], preferred_element_type=jnp.float32)
    f12_ref[...] = jnp.maximum(y * s12_ref[...] + t12_ref[...], 0.0)
    z = jnp.dot(ah_ref[...], wb1_ref[...], preferred_element_type=jnp.float32)
    mid_ref[...] = jnp.maximum(z * sm_ref[...] + tm_ref[...], 0.0)


def _branch_kernel(av_ref, asep_ref, wb2_ref, wsep_ref,
                   sb_ref, tb_ref, so_ref, to_ref, fbr_ref):
    # bi  = relu((a_v  @ W[kx1, blockdiag]) * sb + tb)      (BiConv stage 2)
    # fbr = relu(((a_sep @ W[dw∘pw, blockdiag]) + bi) * so + to)
    ybi = jnp.dot(av_ref[...], wb2_ref[...], preferred_element_type=jnp.float32)
    bi = jnp.maximum(ybi * sb_ref[...] + tb_ref[...], 0.0)
    ysep = jnp.dot(asep_ref[...], wsep_ref[...], preferred_element_type=jnp.float32)
    fbr_ref[...] = jnp.maximum((ysep + bi) * so_ref[...] + to_ref[...], 0.0)


def _concat_scale_kernel(f12_ref, fbr_ref, w_ref, o_ref, *, cout):
    # Fused "torch.cat + CA scalar scale": write each chunk directly into its
    # slot of the (6, tm, Cout) output block. f3 appears twice (reference
    # appends f3 in place of f5); f5 was never computed.
    w = w_ref[0, 0]
    f12 = f12_ref[...]
    fbr = fbr_ref[...]
    f3 = fbr[:, 0:cout] * w
    o_ref[0] = f12[:, :cout] * w              # f1
    o_ref[1] = f12[:, cout:] * w              # f2
    o_ref[2] = f3                             # f3
    o_ref[3] = fbr[:, cout:2 * cout] * w      # f4
    o_ref[4] = f3                             # f3 again (reference behaviour)
    o_ref[5] = fbr[:, 2 * cout:3 * cout] * w  # f6


def _pick_tm(m, max_tile=1024):
    """Largest power-of-two row tile (<= max_tile) that divides M and keeps
    >= 2 grid steps so both v7x TensorCores get work."""
    best = None
    for cand in (1024, 512, 256, 128, 64, 32, 16, 8):
        if cand <= max_tile and m % cand == 0:
            if m // cand >= 2:
                return cand
            if best is None:
                best = cand
    return best if best is not None else m


# --------------------------------------------------------------------------
# Pallas wrappers
# --------------------------------------------------------------------------
def fused_f12_mid(a33, ah, w12, wb1, s12, t12, s_mid, t_mid):
    M, K1 = a33.shape
    K2 = ah.shape[1]
    N1 = w12.shape[1]
    N2 = wb1.shape[1]
    tm = _pick_tm(M)
    return pl.pallas_call(
        _f12_mid_kernel,
        out_shape=(jax.ShapeDtypeStruct((M, N1), jnp.float32),
                   jax.ShapeDtypeStruct((M, N2), jnp.float32)),
        grid=(M // tm,),
        in_specs=[
            pl.BlockSpec((tm, K1), lambda i: (i, 0)),
            pl.BlockSpec((tm, K2), lambda i: (i, 0)),
            pl.BlockSpec((K1, N1), lambda i: (0, 0)),
            pl.BlockSpec((K2, N2), lambda i: (0, 0)),
            pl.BlockSpec((1, N1), lambda i: (0, 0)),
            pl.BlockSpec((1, N1), lambda i: (0, 0)),
            pl.BlockSpec((1, N2), lambda i: (0, 0)),
            pl.BlockSpec((1, N2), lambda i: (0, 0)),
        ],
        out_specs=(
            pl.BlockSpec((tm, N1), lambda i: (i, 0)),
            pl.BlockSpec((tm, N2), lambda i: (i, 0)),
        ),
        compiler_params=_CPARAMS,
    )(a33, ah, w12, wb1, s12, t12, s_mid, t_mid)


def fused_branch(a_v, a_sep, wb2, wsep, sb, tb, so, to):
    M, Kv = a_v.shape
    Ks = a_sep.shape[1]
    N = wb2.shape[1]
    tm = _pick_tm(M)
    return pl.pallas_call(
        _branch_kernel,
        out_shape=jax.ShapeDtypeStruct((M, N), jnp.float32),
        grid=(M // tm,),
        in_specs=[
            pl.BlockSpec((tm, Kv), lambda i: (i, 0)),
            pl.BlockSpec((tm, Ks), lambda i: (i, 0)),
            pl.BlockSpec((Kv, N), lambda i: (0, 0)),
            pl.BlockSpec((Ks, N), lambda i: (0, 0)),
            pl.BlockSpec((1, N), lambda i: (0, 0)),
            pl.BlockSpec((1, N), lambda i: (0, 0)),
            pl.BlockSpec((1, N), lambda i: (0, 0)),
            pl.BlockSpec((1, N), lambda i: (0, 0)),
        ],
        out_specs=pl.BlockSpec((tm, N), lambda i: (i, 0)),
        compiler_params=_CPARAMS,
    )(a_v, a_sep, wb2, wsep, sb, tb, so, to)


def concat_scale(f12, fbr, wvec, cout):
    """Fused concat([f1,f2,f3,f4,f3,f6]) * weight_scalar -> (6, M, Cout)."""
    M = f12.shape[0]
    tm = _pick_tm(M)
    return pl.pallas_call(
        functools.partial(_concat_scale_kernel, cout=cout),
        out_shape=jax.ShapeDtypeStruct((6, M, cout), jnp.float32),
        grid=(M // tm,),
        in_specs=[
            pl.BlockSpec((tm, 2 * cout), lambda i: (i, 0)),
            pl.BlockSpec((tm, 3 * cout), lambda i: (i, 0)),
            pl.BlockSpec((1, 1), lambda i: (0, 0)),
        ],
        out_specs=pl.BlockSpec((6, tm, cout), lambda i: (0, i, 0)),
        compiler_params=_CPARAMS,
    )(f12.astype(jnp.float32), fbr.astype(jnp.float32),
      wvec.reshape(1, 1).astype(jnp.float32))


# --------------------------------------------------------------------------
# JAX glue: im2col, BN folding, parameters
# --------------------------------------------------------------------------
def _extract_taps(x, kh, kw, dh, dw, ph, pw):
    """NHWC im2col: returns (N, H, W, kh*kw, C) taps (stride 1, 'same' output)."""
    N, H, W, C = x.shape
    xp = jnp.pad(x, ((0, 0), (ph, ph), (pw, pw), (0, 0)))
    taps = []
    for i in range(kh):
        for j in range(kw):
            taps.append(xp[:, i * dh:i * dh + H, j * dw:j * dw + W, :])
    return jnp.stack(taps, axis=3)


def bn_fold(gamma, beta, mean, var, bias=None):
    """Fold inference BatchNorm (+ optional conv bias) into scale/shift."""
    s = gamma / jnp.sqrt(var + EPS)
    t = beta - mean * s
    if bias is not None:
        t = t + bias * s
    return s, t


def init_params(key, cin, cout):
    ks = iter(jax.random.split(key, 128))

    def nrm(shape, scale=0.1):
        return jax.random.normal(next(ks), shape, jnp.float32) * scale

    def bn(c):
        return dict(
            gamma=jax.random.uniform(next(ks), (c,), jnp.float32, 0.5, 1.5),
            beta=nrm((c,)),
            mean=nrm((c,)),
            var=jax.random.uniform(next(ks), (c,), jnp.float32, 0.5, 1.5),
        )

    p = {}
    p["w11"] = nrm((cin, cout)); p["b11"] = nrm((cout,)); p["bn1"] = bn(cout)
    p["w33"] = nrm((3, 3, cin, cout)); p["b33"] = nrm((cout,)); p["bn3"] = bn(cout)
    for k in KSIZES:
        br = {}
        br["w_dw"] = nrm((3, 3, cin))          # depthwise 3x3 (per-channel)
        br["w_pw"] = nrm((cin, cout))          # pointwise 1x1 (no bias)
        br["w_1k"] = nrm((k, cin)); br["b_1k"] = nrm((1,)); br["bn_a"] = bn(1)
        br["w_k1"] = nrm((k, cout)); br["b_k1"] = nrm((cout,)); br["bn_b"] = bn(cout)
        br["bn_out"] = bn(cout)
        p[f"br{k}"] = br
    hid = max(cout // 8, 1)
    p["w_ca1"] = nrm((cout, hid))
    p["w_ca2"] = nrm((hid, cout))
    return p


# --------------------------------------------------------------------------
# MAG_Block forward (Pallas)
# --------------------------------------------------------------------------
def mag_block_forward(x_nhwc, p):
    N, H, W, Cin = x_nhwc.shape
    M = N * H * W
    Cout = p["w11"].shape[1]
    live = [(KSIZES[i], DILS[i]) for i in LIVE_BRANCHES]   # (5,2),(7,3),(11,5)
    nb = len(live)
    maxk = max(k for k, _ in live)
    maxpad = (maxk - 1) // 2

    # ---- fused f1 + f2 weights: one (9Cin, 2Cout) block --------------------
    a33 = _extract_taps(x_nhwc, 3, 3, 1, 1, 1, 1).reshape(M, 9 * Cin)
    w1_col = jnp.zeros((9 * Cin, Cout), jnp.float32).at[4 * Cin:5 * Cin, :].set(p["w11"])
    Wf12 = jnp.concatenate([w1_col, p["w33"].reshape(9 * Cin, Cout)], axis=1)
    s1, t1 = bn_fold(**p["bn1"], bias=p["b11"])
    s2, t2 = bn_fold(**p["bn3"], bias=p["b33"])
    s12 = jnp.concatenate([s1, s2]).reshape(1, 2 * Cout).astype(jnp.float32)
    t12 = jnp.concatenate([t1, t2]).reshape(1, 2 * Cout).astype(jnp.float32)

    # ---- BiConv stage 1 (1xk for all live branches) weights ----------------
    a_h = _extract_taps(x_nhwc, 1, maxk, 1, 1, 0, maxpad).reshape(M, maxk * Cin)
    Wb1 = jnp.zeros((maxk * Cin, nb), jnp.float32)
    sa, ta = [], []
    for b_idx, (k, _) in enumerate(live):
        br = p[f"br{k}"]
        pad = (k - 1) // 2
        Wb1 = Wb1.at[(maxpad - pad) * Cin:(maxpad + pad + 1) * Cin, b_idx].set(
            br["w_1k"].reshape(k * Cin))
        s_, t_ = bn_fold(**br["bn_a"], bias=br["b_1k"])
        sa.append(s_); ta.append(t_)
    s_mid = jnp.concatenate(sa).reshape(1, nb).astype(jnp.float32)
    t_mid = jnp.concatenate(ta).reshape(1, nb).astype(jnp.float32)

    # one pallas_call -> f12 (M, 2Cout) and mid (M, nb)
    f12, mid = fused_f12_mid(a33.astype(jnp.float32), a_h.astype(jnp.float32),
                             Wf12, Wb1, s12, t12, s_mid, t_mid)

    # ---- BiConv stage 2 + SeparableConv, fused per row tile ----------------
    a_v = _extract_taps(mid.reshape(N, H, W, nb), maxk, 1, 1, 1,
                        maxpad, 0).reshape(M, maxk * nb)
    Wb2 = jnp.zeros((maxk * nb, nb * Cout), jnp.float32)
    Wsep = jnp.zeros((nb * 9 * Cin, nb * Cout), jnp.float32)
    a_parts, sb, tb, so, to = [], [], [], [], []
    for b_idx, (k, d) in enumerate(live):
        br = p[f"br{k}"]
        pad = (k - 1) // 2
        # kx1 conv over this branch's single mid channel (block-diagonal)
        blockcol = jnp.zeros((maxk, Cout), jnp.float32).at[
            maxpad - pad:maxpad + pad + 1, :].set(br["w_k1"])
        Wb2 = Wb2.at[b_idx::nb, b_idx * Cout:(b_idx + 1) * Cout].set(blockcol)
        s_, t_ = bn_fold(**br["bn_b"], bias=br["b_k1"])
        sb.append(s_); tb.append(t_)
        # dw(3x3 dilated) ∘ pw(1x1) folded: W_eff[(t,c), o] = w_dw[t,c]*w_pw[c,o]
        a_parts.append(_extract_taps(x_nhwc, 3, 3, d, d, d, d).reshape(M, 9 * Cin))
        weff = jnp.einsum("tc,co->tco", br["w_dw"].reshape(9, Cin),
                          br["w_pw"]).reshape(9 * Cin, Cout)
        Wsep = Wsep.at[b_idx * 9 * Cin:(b_idx + 1) * 9 * Cin,
                       b_idx * Cout:(b_idx + 1) * Cout].set(weff)
        s2_, t2_ = bn_fold(**br["bn_out"])
        so.append(s2_); to.append(t2_)
    a_sep = jnp.concatenate(a_parts, axis=1)                       # (M, nb*9*Cin)
    fbr = fused_branch(
        a_v.astype(jnp.float32), a_sep.astype(jnp.float32), Wb2, Wsep,
        jnp.concatenate(sb).reshape(1, nb * Cout).astype(jnp.float32),
        jnp.concatenate(tb).reshape(1, nb * Cout).astype(jnp.float32),
        jnp.concatenate(so).reshape(1, nb * Cout).astype(jnp.float32),
        jnp.concatenate(to).reshape(1, nb * Cout).astype(jnp.float32),
    )                                                              # (M, nb*Cout)
    # fbr columns: [f3 | f4 | f6]

    # ---- CA_Block tail in plain JAX (tiny tensors; no kernel launch) -------
    pooled12 = f12.reshape(N, H * W, 2 * Cout).mean(axis=1)        # (N, 2*Cout)
    pooledbr = fbr.reshape(N, H * W, nb * Cout).mean(axis=1)       # (N, nb*Cout)
    pooled = jnp.concatenate([
        pooled12[:, :Cout], pooled12[:, Cout:],
        pooledbr[:, 0:Cout], pooledbr[:, Cout:2 * Cout],
        pooledbr[:, 0:Cout], pooledbr[:, 2 * Cout:3 * Cout]], axis=0)  # (6N, Cout)
    h1 = jnp.maximum(pooled @ p["w_ca1"], 0.0)
    att = jax.nn.sigmoid(h1 @ p["w_ca2"])
    wvec = jnp.mean(att)                                           # scalar

    # ---- fused concat + scale -> (6, M, Cout) ------------------------------
    out6 = concat_scale(f12, fbr, wvec, Cout)
    return out6.reshape(6 * N, H, W, Cout)


# --------------------------------------------------------------------------
# Pure-JAX reference (lax.conv) for correctness checking — full 4-branch
# torch semantics, including the dead f5 branch.
# --------------------------------------------------------------------------
def reference_forward(x_nhwc, p, ksizes=KSIZES, dils=DILS):
    def conv(x, w, padding, rhs_dil=(1, 1), groups=1):
        return lax.conv_general_dilated(
            x, w, (1, 1), padding, rhs_dilation=rhs_dil,
            dimension_numbers=("NHWC", "HWIO", "NHWC"),
            feature_group_count=groups, precision=lax.Precision.HIGHEST)

    def bn(x, prm):
        return (x - prm["mean"]) / jnp.sqrt(prm["var"] + EPS) * prm["gamma"] + prm["beta"]

    relu = lambda v: jnp.maximum(v, 0.0)
    Cin = x_nhwc.shape[-1]
    Cout = p["w11"].shape[1]

    f1 = relu(bn(conv(x_nhwc, p["w11"].reshape(1, 1, Cin, Cout),
                      [(0, 0), (0, 0)]) + p["b11"], p["bn1"]))
    f2 = relu(bn(conv(x_nhwc, p["w33"], [(1, 1), (1, 1)]) + p["b33"], p["bn3"]))
    outs = []
    for k, d in zip(ksizes, dils):
        br = p[f"br{k}"]
        pad = (k - 1) // 2
        dw = conv(x_nhwc, br["w_dw"].reshape(3, 3, 1, Cin),
                  [(d, d), (d, d)], rhs_dil=(d, d), groups=Cin)
        sep = conv(dw, br["w_pw"].reshape(1, 1, Cin, Cout), [(0, 0), (0, 0)])
        a = relu(bn(conv(x_nhwc, br["w_1k"].reshape(1, k, Cin, 1),
                         [(0, 0), (pad, pad)]) + br["b_1k"], br["bn_a"]))
        bi = relu(bn(conv(a, br["w_k1"].reshape(k, 1, 1, Cout),
                          [(pad, pad), (0, 0)]) + br["b_k1"], br["bn_b"]))
        outs.append(relu(bn(sep + bi, br["bn_out"])))
    f3, f4, f5, f6 = outs
    cat = jnp.concatenate([f1, f2, f3, f4, f3, f6], axis=0)  # f3 twice, f5 dropped
    pooled = jnp.mean(cat, axis=(1, 2))
    h1 = jnp.maximum(pooled @ p["w_ca1"], 0.0)
    att = jax.nn.sigmoid(h1 @ p["w_ca2"])
    return cat * jnp.mean(att)


if __name__ == "__main__":
    key = jax.random.PRNGKey(0)
    kx, kp = jax.random.split(key)
    N, Cin, H, W = 2, 4, 16, 16
    Cout = 8

    x_nchw = jax.random.normal(kx, (N, Cin, H, W), jnp.float32)  # PyTorch NCHW
    x_nhwc = jnp.transpose(x_nchw, (0, 2, 3, 1))                 # kernel layout
    params = init_params(kp, Cin, Cout)

    fwd = jax.jit(mag_block_forward)
    out = fwd(x_nhwc, params)
    out = jax.block_until_ready(out)                             # (6N, H, W, Cout)

    ref = reference_forward(x_nhwc, params)
    assert out.shape == (6 * N, H, W, Cout)
    assert np.allclose(np.asarray(out), np.asarray(ref), rtol=2e-3, atol=2e-3)
    print("KERNEL_OK")
</pallas_src>

<mosaic_0001>
module attributes {stable_mosaic.version = 11 : i64} {
  func.func @_f12_mid_kernel(%arg0: i32, %arg1: memref<256x36xf32, #tpu.memory_space<vmem>>, %arg2: memref<256x44xf32, #tpu.memory_space<vmem>>, %arg3: memref<36x16xf32, #tpu.memory_space<vmem>>, %arg4: memref<44x3xf32, #tpu.memory_space<vmem>>, %arg5: memref<1x16xf32, #tpu.memory_space<vmem>>, %arg6: memref<1x16xf32, #tpu.memory_space<vmem>>, %arg7: memref<1x3xf32, #tpu.memory_space<vmem>>, %arg8: memref<1x3xf32, #tpu.memory_space<vmem>>, %arg9: memref<256x16xf32, #tpu.memory_space<vmem>>, %arg10: memref<256x3xf32, #tpu.memory_space<vmem>>) attributes {dimension_semantics = [#tpu.dimension_semantics<parallel>], iteration_bounds = array<i64: 2>, scalar_prefetch = 0 : i64, scratch_operands = 0 : i64, tpu.core_type = #tpu.core_type<tc>, window_params = [{transform_indices = @transform_0, window_bounds = array<i64: 256, 36>}, {transform_indices = @transform_1, window_bounds = array<i64: 256, 44>}, {pipeline_mode = #tpu.pipeline_mode<synchronous>, transform_indices = @transform_2, window_bounds = array<i64: 36, 16>}, {pipeline_mode = #tpu.pipeline_mode<synchronous>, transform_indices = @transform_3, window_bounds = array<i64: 44, 3>}, {pipeline_mode = #tpu.pipeline_mode<synchronous>, transform_indices = @transform_4, window_bounds = array<i64: 1, 16>}, {pipeline_mode = #tpu.pipeline_mode<synchronous>, transform_indices = @transform_5, window_bounds = array<i64: 1, 16>}, {pipeline_mode = #tpu.pipeline_mode<synchronous>, transform_indices = @transform_6, window_bounds = array<i64: 1, 3>}, {pipeline_mode = #tpu.pipeline_mode<synchronous>, transform_indices = @transform_7, window_bounds = array<i64: 1, 3>}, {transform_indices = @transform_8, window_bounds = array<i64: 256, 16>}, {transform_indices = @transform_9, window_bounds = array<i64: 256, 3>}]} {
    %c0 = arith.constant 0 : index
    %c0_0 = arith.constant 0 : index
    %0 = vector.load %arg1[%c0, %c0_0] : memref<256x36xf32, #tpu.memory_space<vmem>>, vector<256x36xf32>
    %c0_1 = arith.constant 0 : index
    %c0_2 = arith.constant 0 : index
    %1 = vector.load %arg3[%c0_1, %c0_2] : memref<36x16xf32, #tpu.memory_space<vmem>>, vector<36x16xf32>
    %cst = arith.constant dense<0.000000e+00> : vector<256x16xf32>
    %2 = tpu.matmul %0, %1, %cst {dimension_numbers = #tpu.dot_dimension_numbers<[1], [0], [0], [1], [0, 0, 1, 1], [], []>} : vector<256x36xf32>, vector<36x16xf32>, vector<256x16xf32> -> vector<256x16xf32>
    %c0_3 = arith.constant 0 : index
    %c0_4 = arith.constant 0 : index
    %3 = vector.load %arg5[%c0_3, %c0_4] : memref<1x16xf32, #tpu.memory_space<vmem>>, vector<1x16xf32>
    %4 = vector.broadcast %3 : vector<1x16xf32> to vector<256x16xf32>
    %5 = arith.mulf %2, %4 : vector<256x16xf32>
    %c0_5 = arith.constant 0 : index
    %c0_6 = arith.constant 0 : index
    %6 = vector.load %arg6[%c0_5, %c0_6] : memref<1x16xf32, #tpu.memory_space<vmem>>, vector<1x16xf32>
    %7 = vector.broadcast %6 : vector<1x16xf32> to vector<256x16xf32>
    %8 = arith.addf %5, %7 : vector<256x16xf32>
    %cst_7 = arith.constant 0.000000e+00 : f32
    %9 = vector.broadcast %cst_7 : f32 to vector<256x16xf32>
    %10 = arith.maximumf %8, %9 : vector<256x16xf32>
    %c0_8 = arith.constant 0 : index
    %c0_9 = arith.constant 0 : index
    %11 = vector.load %arg9[%c0_8, %c0_9] : memref<256x16xf32, #tpu.memory_space<vmem>>, vector<256x16xf32>
    tpu.vector_store %arg9[%c0_8, %c0_9], %10 {strides = array<i32>} : memref<256x16xf32, #tpu.memory_space<vmem>>, vector<256x16xf32>,
    %c0_10 = arith.constant 0 : index
    %c0_11 = arith.constant 0 : index
    %12 = vector.load %arg2[%c0_10, %c0_11] : memref<256x44xf32, #tpu.memory_space<vmem>>, vector<256x44xf32>
    %c0_12 = arith.constant 0 : index
    %c0_13 = arith.constant 0 : index
    %13 = vector.load %arg4[%c0_12, %c0_13] : memref<44x3xf32, #tpu.memory_space<vmem>>, vector<44x3xf32>
    %cst_14 = arith.constant dense<0.000000e+00> : vector<256x3xf32>
    %14 = tpu.matmul %12, %13, %cst_14 {dimension_numbers = #tpu.dot_dimension_numbers<[1], [0], [0], [1], [0, 0, 1, 1], [], []>} : vector<256x44xf32>, vector<44x3xf32>, vector<256x3xf32> -> vector<256x3xf32>
    %c0_15 = arith.constant 0 : index
    %c0_16 = arith.constant 0 : index
    %15 = vector.load %arg7[%c0_15, %c0_16] : memref<1x3xf32, #tpu.memory_space<vmem>>, vector<1x3xf32>
    %16 = vector.broadcast %15 : vector<1x3xf32> to vector<256x3xf32>
    %17 = arith.mulf %14, %16 : vector<256x3xf32>
    %c0_17 = arith.constant 0 : index
    %c0_18 = arith.constant 0 : index
    %18 = vector.load %arg8[%c0_17, %c0_18] : memref<1x3xf32, #tpu.memory_space<vmem>>, vector<1x3xf32>
    %19 = vector.broadcast %18 : vector<1x3xf32> to vector<256x3xf32>
    %20 = arith.addf %17, %19 : vector<256x3xf32>
    %cst_19 = arith.constant 0.000000e+00 : f32
    %21 = vector.broadcast %cst_19 : f32 to vector<256x3xf32>
    %22 = arith.maximumf %20, %21 : vector<256x3xf32>
    %c0_20 = arith.constant 0 : index
    %c0_21 = arith.constant 0 : index
    %23 = vector.load %arg10[%c0_20, %c0_21] : memref<256x3xf32, #tpu.memory_space<vmem>>, vector<256x3xf32>
    tpu.vector_store %arg10[%c0_20, %c0_21], %22 {strides = array<i32>} : memref<256x3xf32, #tpu.memory_space<vmem>>, vector<256x3xf32>,
    return
  }
  func.func @transform_0(%arg0: i32) -> (i32, i32) {
    %c0_i32 = arith.constant 0 : i32
    %c0_i32_0 = arith.constant 0 : i32
    return %arg0, %c0_i32 : i32, i32
  }
  func.func @transform_1(%arg0: i32) -> (i32, i32) {
    %c0_i32 = arith.constant 0 : i32
    %c0_i32_0 = arith.constant 0 : i32
    return %arg0, %c0_i32 : i32, i32
  }
  func.func @transform_2(%arg0: i32) -> (i32, i32) {
    %c0_i32 = arith.constant 0 : i32
    %c0_i32_0 = arith.constant 0 : i32
    %c0_i32_1 = arith.constant 0 : i32
    return %c0_i32, %c0_i32_0 : i32, i32
  }
  func.func @transform_3(%arg0: i32) -> (i32, i32) {
    %c0_i32 = arith.constant 0 : i32
    %c0_i32_0 = arith.constant 0 : i32
    %c0_i32_1 = arith.constant 0 : i32
    return %c0_i32, %c0_i32_0 : i32, i32
  }
  func.func @transform_4(%arg0: i32) -> (i32, i32) {
    %c0_i32 = arith.constant 0 : i32
    %c0_i32_0 = arith.constant 0 : i32
    %c0_i32_1 = arith.constant 0 : i32
    return %c0_i32, %c0_i32_0 : i32, i32
  }
  func.func @transform_5(%arg0: i32) -> (i32, i32) {
    %c0_i32 = arith.constant 0 : i32
    %c0_i32_0 = arith.constant 0 : i32
    %c0_i32_1 = arith.constant 0 : i32
    return %c0_i32, %c0_i32_0 : i32, i32
  }
  func.func @transform_6(%arg0: i32) -> (i32, i32) {
    %c0_i32 = arith.constant 0 : i32
    %c0_i32_0 = arith.constant 0 : i32
    %c0_i32_1 = arith.constant 0 : i32
    return %c0_i32, %c0_i32_0 : i32, i32
  }
  func.func @transform_7(%arg0: i32) -> (i32, i32) {
    %c0_i32 = arith.constant 0 : i32
    %c0_i32_0 = arith.constant 0 : i32
    %c0_i32_1 = arith.constant 0 : i32
    return %c0_i32, %c0_i32_0 : i32, i32
  }
  func.func @transform_8(%arg0: i32) -> (i32, i32) {
    %c0_i32 = arith.constant 0 : i32
    %c0_i32_0 = arith.constant 0 : i32
    return %arg0, %c0_i32 : i32, i32
  }
  func.func @transform_9(%arg0: i32) -> (i32, i32) {
    %c0_i32 = arith.constant 0 : i32
    %c0_i32_0 = arith.constant 0 : i32
    return %arg0, %c0_i32 : i32, i32
  }
}

module attributes {stable_mosaic.version = 11 : i64} {
  func.func @_branch_kernel(%arg0: i32, %arg1: memref<256x33xf32, #tpu.memory_space<vmem>>, %arg2: memref<256x108xf32, #tpu.memory_space<vmem>>, %arg3: memref<33x24xf32, #tpu.memory_space<vmem>>, %arg4: memref<108x24xf32, #tpu.memory_space<vmem>>, %arg5: memref<1x24xf32, #tpu.memory_space<vmem>>, %arg6: memref<1x24xf32, #tpu.memory_space<vmem>>, %arg7: memref<1x24xf32, #tpu.memory_space<vmem>>, %arg8: memref<1x24xf32, #tpu.memory_space<vmem>>, %arg9: memref<256x24xf32, #tpu.memory_space<vmem>>) attributes {dimension_semantics = [#tpu.dimension_semantics<parallel>], iteration_bounds = array<i64: 2>, scalar_prefetch = 0 : i64, scratch_operands = 0 : i64, tpu.core_type = #tpu.core_type<tc>, window_params = [{transform_indices = @transform_0, window_bounds = array<i64: 256, 33>}, {transform_indices = @transform_1, window_bounds = array<i64: 256, 108>}, {pipeline_mode = #tpu.pipeline_mode<synchronous>, transform_indices = @transform_2, window_bounds = array<i64: 33, 24>}, {pipeline_mode = #tpu.pipeline_mode<synchronous>, transform_indices = @transform_3, window_bounds = array<i64: 108, 24>}, {pipeline_mode = #tpu.pipeline_mode<synchronous>, transform_indices = @transform_4, window_bounds = array<i64: 1, 24>}, {pipeline_mode = #tpu.pipeline_mode<synchronous>, transform_indices = @transform_5, window_bounds = array<i64: 1, 24>}, {pipeline_mode = #tpu.pipeline_mode<synchronous>, transform_indices = @transform_6, window_bounds = array<i64: 1, 24>}, {pipeline_mode = #tpu.pipeline_mode<synchronous>, transform_indices = @transform_7, window_bounds = array<i64: 1, 24>}, {transform_indices = @transform_8, window_bounds = array<i64: 256, 24>}]} {
    %c0 = arith.constant 0 : index
    %c0_0 = arith.constant 0 : index
    %0 = vector.load %arg1[%c0, %c0_0] : memref<256x33xf32, #tpu.memory_space<vmem>>, vector<256x33xf32>
    %c0_1 = arith.constant 0 : index
    %c0_2 = arith.constant 0 : index
    %1 = vector.load %arg3[%c0_1, %c0_2] : memref<33x24xf32, #tpu.memory_space<vmem>>, vector<33x24xf32>
    %cst = arith.constant dense<0.000000e+00> : vector<256x24xf32>
    %2 = tpu.matmul %0, %1, %cst {dimension_numbers = #tpu.dot_dimension_numbers<[1], [0], [0], [1], [0, 0, 1, 1], [], []>} : vector<256x33xf32>, vector<33x24xf32>, vector<256x24xf32> -> vector<256x24xf32>
    %c0_3 = arith.constant 0 : index
    %c0_4 = arith.constant 0 : index
    %3 = vector.load %arg5[%c0_3, %c0_4] : memref<1x24xf32, #tpu.memory_space<vmem>>, vector<1x24xf32>
    %4 = vector.broadcast %3 : vector<1x24xf32> to vector<256x24xf32>
    %5 = arith.mulf %2, %4 : vector<256x24xf32>
    %c0_5 = arith.constant 0 : index
    %c0_6 = arith.constant 0 : index
    %6 = vector.load %arg6[%c0_5, %c0_6] : memref<1x24xf32, #tpu.memory_space<vmem>>, vector<1x24xf32>
    %7 = vector.broadcast %6 : vector<1x24xf32> to vector<256x24xf32>
    %8 = arith.addf %5, %7 : vector<256x24xf32>
    %cst_7 = arith.constant 0.000000e+00 : f32
    %9 = vector.broadcast %cst_7 : f32 to vector<256x24xf32>
    %10 = arith.maximumf %8, %9 : vector<256x24xf32>
    %c0_8 = arith.constant 0 : index
    %c0_9 = arith.constant 0 : index
    %11 = vector.load %arg2[%c0_8, %c0_9] : memref<256x108xf32, #tpu.memory_space<vmem>>, vector<256x108xf32>
    %c0_10 = arith.constant 0 : index
    %c0_11 = arith.constant 0 : index
    %12 = vector.load %arg4[%c0_10, %c0_11] : memref<108x24xf32, #tpu.memory_space<vmem>>, vector<108x24xf32>
    %cst_12 = arith.constant dense<0.000000e+00> : vector<256x24xf32>
    %13 = tpu.matmul %11, %12, %cst_12 {dimension_numbers = #tpu.dot_dimension_numbers<[1], [0], [0], [1], [0, 0, 1, 1], [], []>} : vector<256x108xf32>, vector<108x24xf32>, vector<256x24xf32> -> vector<256x24xf32>
    %14 = arith.addf %13, %10 : vector<256x24xf32>
    %c0_13 = arith.constant 0 : index
    %c0_14 = arith.constant 0 : index
    %15 = vector.load %arg7[%c0_13, %c0_14] : memref<1x24xf32, #tpu.memory_space<vmem>>, vector<1x24xf32>
    %16 = vector.broadcast %15 : vector<1x24xf32> to vector<256x24xf32>
    %17 = arith.mulf %14, %16 : vector<256x24xf32>
    %c0_15 = arith.constant 0 : index
    %c0_16 = arith.constant 0 : index
    %18 = vector.load %arg8[%c0_15, %c0_16] : memref<1x24xf32, #tpu.memory_space<vmem>>, vector<1x24xf32>
    %19 = vector.broadcast %18 : vector<1x24xf32> to vector<256x24xf32>
    %20 = arith.addf %17, %19 : vector<256x24xf32>
    %cst_17 = arith.constant 0.000000e+00 : f32
    %21 = vector.broadcast %cst_17 : f32 to vector<256x24xf32>
    %22 = arith.maximumf %20, %21 : vector<256x24xf32>
    %c0_18 = arith.constant 0 : index
    %c0_19 = arith.constant 0 : index
    %23 = vector.load %arg9[%c0_18, %c0_19] : memref<256x24xf32, #tpu.memory_space<vmem>>, vector<256x24xf32>
    tpu.vector_store %arg9[%c0_18, %c0_19], %22 {strides = array<i32>} : memref<256x24xf32, #tpu.memory_space<vmem>>, vector<256x24xf32>,
    return
  }
  func.func @transform_0(%arg0: i32) -> (i32, i32) {
    %c0_i32 = arith.constant 0 : i32
    %c0_i32_0 = arith.constant 0 : i32
    return %arg0, %c0_i32 : i32, i32
  }
  func.func @transform_1(%arg0: i32) -> (i32, i32) {
    %c0_i32 = arith.constant 0 : i32
    %c0_i32_0 = arith.constant 0 : i32
    return %arg0, %c0_i32 : i32, i32
  }
  func.func @transform_2(%arg0: i32) -> (i32, i32) {
    %c0_i32 = arith.constant 0 : i32
    %c0_i32_0 = arith.constant 0 : i32
    %c0_i32_1 = arith.constant 0 : i32
    return %c0_i32, %c0_i32_0 : i32, i32
  }
  func.func @transform_3(%arg0: i32) -> (i32, i32) {
    %c0_i32 = arith.constant 0 : i32
    %c0_i32_0 = arith.constant 0 : i32
    %c0_i32_1 = arith.constant 0 : i32
    return %c0_i32, %c0_i32_0 : i32, i32
  }
  func.func @transform_4(%arg0: i32) -> (i32, i32) {
    %c0_i32 = arith.constant 0 : i32
    %c0_i32_0 = arith.constant 0 : i32
    %c0_i32_1 = arith.constant 0 : i32
    return %c0_i32, %c0_i32_0 : i32, i32
  }
  func.func @transform_5(%arg0: i32) -> (i32, i32) {
    %c0_i32 = arith.constant 0 : i32
    %c0_i32_0 = arith.constant 0 : i32
    %c0_i32_1 = arith.constant 0 : i32
    return %c0_i32, %c0_i32_0 : i32, i32
  }
  func.func @transform_6(%arg0: i32) -> (i32, i32) {
    %c0_i32 = arith.constant 0 : i32
    %c0_i32_0 = arith.constant 0 : i32
    %c0_i32_1 = arith.constant 0 : i32
    return %c0_i32, %c0_i32_0 : i32, i32
  }
  func.func @transform_7(%arg0: i32) -> (i32, i32) {
    %c0_i32 = arith.constant 0 : i32
    %c0_i32_0 = arith.constant 0 : i32
    %c0_i32_1 = arith.constant 0 : i32
    return %c0_i32, %c0_i32_0 : i32, i32
  }
  func.func @transform_8(%arg0: i32) -> (i32, i32) {
    %c0_i32 = arith.constant 0 : i32
    %c0_i32_0 = arith.constant 0 : i32
    return %arg0, %c0_i32 : i32, i32
  }
}

module attributes {stable_mosaic.version = 11 : i64} {
  func.func @_concat_scale_kernel(%arg0: i32, %arg1: memref<256x16xf32, #tpu.memory_space<vmem>>, %arg2: memref<256x24xf32, #tpu.memory_space<vmem>>, %arg3: memref<1x1xf32, #tpu.memory_space<vmem>>, %arg4: memref<6x256x8xf32, #tpu.memory_space<vmem>>) attributes {dimension_semantics = [#tpu.dimension_semantics<parallel>], iteration_bounds = array<i64: 2>, scalar_prefetch = 0 : i64, scratch_operands = 0 : i64, tpu.core_type = #tpu.core_type<tc>, window_params = [{transform_indices = @transform_0, window_bounds = array<i64: 256, 16>}, {transform_indices = @transform_1, window_bounds = array<i64: 256, 24>}, {pipeline_mode = #tpu.pipeline_mode<synchronous>, transform_indices = @transform_2, window_bounds = array<i64: 1, 1>}, {transform_indices = @transform_3, window_bounds = array<i64: 6, 256, 8>}]} {
    %c0 = arith.constant 0 : index
    %c0_0 = arith.constant 0 : index
    %0 = vector.load %arg3[%c0, %c0_0] : memref<1x1xf32, #tpu.memory_space<vmem>>, vector<1x1xf32>
    %1 = vector.extract %0[0, 0] : f32 from vector<1x1xf32>
    %c0_1 = arith.constant 0 : index
    %c0_2 = arith.constant 0 : index
    %2 = vector.load %arg1[%c0_1, %c0_2] : memref<256x16xf32, #tpu.memory_space<vmem>>, vector<256x16xf32>
    %c0_3 = arith.constant 0 : index
    %c0_4 = arith.constant 0 : index
    %3 = vector.load %arg2[%c0_3, %c0_4] : memref<256x24xf32, #tpu.memory_space<vmem>>, vector<256x24xf32>
    %4 = vector.extract_strided_slice %3 {offsets = [0, 0], sizes = [256, 8], strides = [1, 1]} : vector<256x24xf32> to vector<256x8xf32>
    %5 = vector.broadcast %1 : f32 to vector<256x8xf32>
    %6 = arith.mulf %4, %5 : vector<256x8xf32>
    %7 = vector.extract_strided_slice %2 {offsets = [0, 0], sizes = [256, 8], strides = [1, 1]} : vector<256x16xf32> to vector<256x8xf32>
    %8 = vector.broadcast %1 : f32 to vector<256x8xf32>
    %9 = arith.mulf %7, %8 : vector<256x8xf32>
    %c0_5 = arith.constant 0 : index
    %c0_6 = arith.constant 0 : index
    %c0_7 = arith.constant 0 : index
    %10 = vector.load %arg4[%c0_5, %c0_6, %c0_7] : memref<6x256x8xf32, #tpu.memory_space<vmem>>, vector<1x256x8xf32>
    %11 = vector.shape_cast %10 : vector<1x256x8xf32> to vector<256x8xf32>
    %12 = vector.shape_cast %9 : vector<256x8xf32> to vector<1x256x8xf32>
    tpu.vector_store %arg4[%c0_5, %c0_6, %c0_7], %12 {strides = array<i32>} : memref<6x256x8xf32, #tpu.memory_space<vmem>>, vector<1x256x8xf32>,
    %13 = vector.extract_strided_slice %2 {offsets = [0, 8], sizes = [256, 8], strides = [1, 1]} : vector<256x16xf32> to vector<256x8xf32>
    %14 = vector.broadcast %1 : f32 to vector<256x8xf32>
    %15 = arith.mulf %13, %14 : vector<256x8xf32>
    %c1 = arith.constant 1 : index
    %c0_8 = arith.constant 0 : index
    %c0_9 = arith.constant 0 : index
    %16 = vector.load %arg4[%c1, %c0_8, %c0_9] : memref<6x256x8xf32, #tpu.memory_space<vmem>>, vector<1x256x8xf32>
    %17 = vector.shape_cast %16 : vector<1x256x8xf32> to vector<256x8xf32>
    %18 = vector.shape_cast %15 : vector<256x8xf32> to vector<1x256x8xf32>
    tpu.vector_store %arg4[%c1, %c0_8, %c0_9], %18 {strides = array<i32>} : memref<6x256x8xf32, #tpu.memory_space<vmem>>, vector<1x256x8xf32>,
    %c2 = arith.constant 2 : index
    %c0_10 = arith.constant 0 : index
    %c0_11 = arith.constant 0 : index
    %19 = vector.load %arg4[%c2, %c0_10, %c0_11] : memref<6x256x8xf32, #tpu.memory_space<vmem>>, vector<1x256x8xf32>
    %20 = vector.shape_cast %19 : vector<1x256x8xf32> to vector<256x8xf32>
    %21 = vector.shape_cast %6 : vector<256x8xf32> to vector<1x256x8xf32>
    tpu.vector_store %arg4[%c2, %c0_10, %c0_11], %21 {strides = array<i32>} : memref<6x256x8xf32, #tpu.memory_space<vmem>>, vector<1x256x8xf32>,
    %22 = vector.extract_strided_slice %3 {offsets = [0, 8], sizes = [256, 8], strides = [1, 1]} : vector<256x24xf32> to vector<256x8xf32>
    %23 = vector.broadcast %1 : f32 to vector<256x8xf32>
    %24 = arith.mulf %22, %23 : vector<256x8xf32>
    %c3 = arith.constant 3 : index
    %c0_12 = arith.constant 0 : index
    %c0_13 = arith.constant 0 : index
    %25 = vector.load %arg4[%c3, %c0_12, %c0_13] : memref<6x256x8xf32, #tpu.memory_space<vmem>>, vector<1x256x8xf32>
    %26 = vector.shape_cast %25 : vector<1x256x8xf32> to vector<256x8xf32>
    %27 = vector.shape_cast %24 : vector<256x8xf32> to vector<1x256x8xf32>
    tpu.vector_store %arg4[%c3, %c0_12, %c0_13], %27 {strides = array<i32>} : memref<6x256x8xf32, #tpu.memory_space<vmem>>, vector<1x256x8xf32>,
    %c4 = arith.constant 4 : index
    %c0_14 = arith.constant 0 : index
    %c0_15 = arith.constant 0 : index
    %28 = vector.load %arg4[%c4, %c0_14, %c0_15] : memref<6x256x8xf32, #tpu.memory_space<vmem>>, vector<1x256x8xf32>
    %29 = vector.shape_cast %28 : vector<1x256x8xf32> to vector<256x8xf32>
    %30 = vector.shape_cast %6 : vector<256x8xf32> to vector<1x256x8xf32>
    tpu.vector_store %arg4[%c4, %c0_14, %c0_15], %30 {strides = array<i32>} : memref<6x256x8xf32, #tpu.memory_space<vmem>>, vector<1x256x8xf32>,
    %31 = vector.extract_strided_slice %3 {offsets = [0, 16], sizes = [256, 8], strides = [1, 1]} : vector<256x24xf32> to vector<256x8xf32>
    %32 = vector.broadcast %1 : f32 to vector<256x8xf32>
    %33 = arith.mulf %31, %32 : vector<256x8xf32>
    %c5 = arith.constant 5 : index
    %c0_16 = arith.constant 0 : index
    %c0_17 = arith.constant 0 : index
    %34 = vector.load %arg4[%c5, %c0_16, %c0_17] : memref<6x256x8xf32, #tpu.memory_space<vmem>>, vector<1x256x8xf32>
    %35 = vector.shape_cast %34 : vector<1x256x8xf32> to vector<256x8xf32>
    %36 = vector.shape_cast %33 : vector<256x8xf32> to vector<1x256x8xf32>
    tpu.vector_store %arg4[%c5, %c0_16, %c0_17], %36 {strides = array<i32>} : memref<6x256x8xf32, #tpu.memory_space<vmem>>, vector<1x256x8xf32>,
    return
  }
  func.func @transform_0(%arg0: i32) -> (i32, i32) {
    %c0_i32 = arith.constant 0 : i32
    %c0_i32_0 = arith.constant 0 : i32
    return %arg0, %c0_i32 : i32, i32
  }
  func.func @transform_1(%arg0: i32) -> (i32, i32) {
    %c0_i32 = arith.constant 0 : i32
    %c0_i32_0 = arith.constant 0 : i32
    return %arg0, %c0_i32 : i32, i32
  }
  func.func @transform_2(%arg0: i32) -> (i32, i32) {
    %c0_i32 = arith.constant 0 : i32
    %c0_i32_0 = arith.constant 0 : i32
    %c0_i32_1 = arith.constant 0 : i32
    return %c0_i32, %c0_i32_0 : i32, i32
  }
  func.func @transform_3(%arg0: i32) -> (i32, i32, i32) {
    %c0_i32 = arith.constant 0 : i32
    %c0_i32_0 = arith.constant 0 : i32
    %c0_i32_1 = arith.constant 0 : i32
    return %c0_i32, %arg0, %c0_i32_0 : i32, i32, i32
  }
}

</mosaic_0001>

<llo_original>
// kernel: mag_block_forward.3
$region0: #{mag_block_forward.3}
  #allocation0 [shape = 'u32[]', space=smem, size = 0x4, offset = 0x4, fixed_abs, tag = 'smem constant byte address 0x4 - core index']
  #allocation1 [shape = 'u32[144,128]{1,0:T(1,128)}', space=vmem, size = 0x12000, scoped, tag = 'internal scratch']
  %s0 = inlined_call_operand.vmem [shape: f32[512,36], index: 0, kind: input, shape index: {}]
  %s1 = inlined_call_operand.vmem [shape: f32[512,44], index: 1, kind: input, shape index: {}]
  %s2 = inlined_call_operand.vmem [shape: f32[36,16], index: 2, kind: input, shape index: {}]
  %s3 = inlined_call_operand.vmem [shape: f32[44,3], index: 3, kind: input, shape index: {}]
  %s4 = inlined_call_operand.vmem [shape: f32[1,16], index: 4, kind: input, shape index: {}]
  %s5 = inlined_call_operand.vmem [shape: f32[1,16], index: 5, kind: input, shape index: {}]
  %s6 = inlined_call_operand.vmem [shape: f32[1,3], index: 6, kind: input, shape index: {}]
  %s7 = inlined_call_operand.vmem [shape: f32[1,3], index: 7, kind: input, shape index: {}]
  %s8 = inlined_call_operand.vmem [shape: f32[512,16], index: 8, kind: output, shape index: {0}]
  %s9 = inlined_call_operand.vmem [shape: f32[512,3], index: 9, kind: output, shape index: {1}]
  %10 = xla_tuple %s8, %s9
  %s11 = sld [smem:[#allocation0]]
  $region73: #{mag_block_forward.3} parent=0
    _
  %s13 = ssub.s32 1, %s11
  %s14 = scalar_select 0, %s13, %s11
  loop: start=0, step=1, limit=4
  $region2: #{mag_block_forward.3} parent=0 // loop_pre_header
    _
  $region3: #{mag_block_forward.3} parent=0 // loop_header
    %s16 = sphi 0, %s20
    %p17 = scmp.ge.s32.totalorder %s16, 4
    %s26 = sphi 0, %s28
    %s29 = sphi 0, %s26
    %s30 = sphi 0, %s29
    %s46 = sphi 0, %s30
    %s52 = sphi 0, %s54
    %s55 = sphi 0, %s52
    %s56 = sphi 0, %s55
    %s72 = sphi 0, %s56
    %s76 = sphi 0, %s76
    %s78 = sphi 0, %s76
    %s79 = sphi 0, %s78
    %s93 = sphi 0, %s79
    %s97 = sphi 0, %s97
    %s99 = sphi 0, %s97
    %s100 = sphi 0, %s99
    %s114 = sphi 0, %s100
    %s118 = sphi 0, %s118
    %s120 = sphi 0, %s118
    %s121 = sphi 0, %s120
    %s135 = sphi 0, %s121
    %s139 = sphi 0, %s139
    %s141 = sphi 0, %s139
    %s142 = sphi 0, %s141
    %s156 = sphi 0, %s142
    %s160 = sphi 0, %s160
    %s162 = sphi 0, %s160
    %s163 = sphi 0, %s162
    %s177 = sphi 0, %s163
    %s181 = sphi 0, %s181
    %s183 = sphi 0, %s181
    %s184 = sphi 0, %s183
    %s198 = sphi 0, %s184
    %s204 = sphi 0, %s206
    %s207 = sphi 0, %s204
    %s208 = sphi 0, %s207
    %s224 = sphi 0, %s208
    %s230 = sphi 0, %s232
    %s233 = sphi 0, %s230
    %s234 = sphi 0, %s233
    %s250 = sphi 0, %s234
  $region4: #{mag_block_forward.3} parent=0 // loop_header_branch
    %19 = sbr.rel (%p17) target = $region8
  $region5: #{mag_block_forward.3} parent=0 // loop_body
    %s21 = ssub.s32 %s16, 1
    %s22 = ssub.s32 %s16, 2
    %s23 = sadd.s32 %s16, 1
    %s24 = ssub.s32 %s16, %s23
    %p25 = scmp.eq.s32.totalorder %s24, 0
    %s27 = sadd.s32 %s26, 1
    %s28 = scalar_select %p25, %s26, %s27
    %p31 = pneg %p25
    %p32 = scmp.eq.s32.totalorder %s16, 1
    %p33 = por %p31, %p32
    %p34 = scmp.ne.s32.totalorder %s26, %s29
    %p35 = scmp.eq.s32.totalorder %s16, 0
    %p36 = por %p34, %p35
    %p37 = scmp.ne.s32.totalorder %s26, %s29
    %p38 = scmp.eq.s32.totalorder %s21, 1
    %p39 = por %p37, %p38
    %p40 = scmp.ne.s32.totalorder %s29, %s30
    %p41 = scmp.eq.s32.totalorder %s21, 0
    %p42 = por %p40, %p41
    %p43 = scmp.ne.s32.totalorder %s29, %s30
    %p44 = scmp.eq.s32.totalorder %s22, 1
    %p45 = por %p43, %p44
    %p47 = scmp.ne.s32.totalorder %s30, %s46
    %p48 = scmp.eq.s32.totalorder %s22, 0
    %p49 = por %p47, %p48
    %s50 = ssub.s32 %s16, %s23
    %p51 = scmp.eq.s32.totalorder %s50, 0
    %s53 = sadd.s32 %s52, 1
    %s54 = scalar_select %p51, %s52, %s53
    %p57 = pneg %p51
    %p58 = scmp.eq.s32.totalorder %s16, 1
    %p59 = por %p57, %p58
    %p60 = scmp.ne.s32.totalorder %s52, %s55
    %p61 = scmp.eq.s32.totalorder %s16, 0
    %p62 = por %p60, %p61
    %p63 = scmp.ne.s32.totalorder %s52, %s55
    %p64 = scmp.eq.s32.totalorder %s21, 1
    %p65 = por %p63, %p64
    %p66 = scmp.ne.s32.totalorder %s55, %s56
    %p67 = scmp.eq.s32.totalorder %s21, 0
    %p68 = por %p66, %p67
    %p69 = scmp.ne.s32.totalorder %s55, %s56
    %p70 = scmp.eq.s32.totalorder %s22, 1
    %p71 = por %p69, %p70
    %p73 = scmp.ne.s32.totalorder %s56, %s72
    %p74 = scmp.eq.s32.totalorder %s22, 0
    %p75 = por %p73, %p74
    %s77 = sadd.s32 %s76, 1
    %p80 = scmp.eq.s32.totalorder %s16, 1
    %p81 = scmp.ne.s32.totalorder %s76, %s78
    %p82 = scmp.eq.s32.totalorder %s16, 0
    %p83 = por %p81, %p82
    %p84 = scmp.ne.s32.totalorder %s76, %s78
    %p85 = scmp.eq.s32.totalorder %s21, 1
    %p86 = por %p84, %p85
    %p87 = scmp.ne.s32.totalorder %s78, %s79
    %p88 = scmp.eq.s32.totalorder %s21, 0
    %p89 = por %p87, %p88
    %p90 = scmp.ne.s32.totalorder %s78, %s79
    %p91 = scmp.eq.s32.totalorder %s22, 1
    %p92 = por %p90, %p91
    %p94 = scmp.ne.s32.totalorder %s79, %s93
    %p95 = scmp.eq.s32.totalorder %s22, 0
    %p96 = por %p94, %p95
    %s98 = sadd.s32 %s97, 1
    %p101 = scmp.eq.s32.totalorder %s16, 1
    %p102 = scmp.ne.s32.totalorder %s97, %s99
    %p103 = scmp.eq.s32.totalorder %s16, 0
    %p104 = por %p102, %p103
    %p105 = scmp.ne.s32.totalorder %s97, %s99
    %p106 = scmp.eq.s32.totalorder %s21, 1
    %p107 = por %p105, %p106
    %p108 = scmp.ne.s32.totalorder %s99, %s100
    %p109 = scmp.eq.s32.totalorder %s21, 0
    %p110 = por %p108, %p109
    %p111 = scmp.ne.s32.totalorder %s99, %s100
    %p112 = scmp.eq.s32.totalorder %s22, 1
    %p113 = por %p111, %p112
    %p115 = scmp.ne.s32.totalorder %s100, %s114
    %p116 = scmp.eq.s32.totalorder %s22, 0
    %p117 = por %p115, %p116
    %s119 = sadd.s32 %s118, 1
    %p122 = scmp.eq.s32.totalorder %s16, 1
    %p123 = scmp.ne.s32.totalorder %s118, %s120
    %p124 = scmp.eq.s32.totalorder %s16, 0
    %p125 = por %p123, %p124
    %p126 = scmp.ne.s32.totalorder %s118, %s120
    %p127 = scmp.eq.s32.totalorder %s21, 1
    %p128 = por %p126, %p127
    %p129 = scmp.ne.s32.totalorder %s120, %s121
    %p130 = scmp.eq.s32.totalorder %s21, 0
    %p131 = por %p129, %p130
    %p132 = scmp.ne.s32.totalorder %s120, %s121
    %p133 = scmp.eq.s32.totalorder %s22, 1
    %p134 = por %p132, %p133
    %p136 = scmp.ne.s32.totalorder %s121, %s135
    %p137 = scmp.eq.s32.totalorder %s22, 0
    %p138 = por %p136, %p137
    %s140 = sadd.s32 %s139, 1
    %p143 = scmp.eq.s32.totalorder %s16, 1
    %p144 = scmp.ne.s32.totalorder %s139, %s141
    %p145 = scmp.eq.s32.totalorder %s16, 0
    %p146 = por %p144, %p145
    %p147 = scmp.ne.s32.totalorder %s139, %s141
    %p148 = scmp.eq.s32.totalorder %s21, 1
    %p149 = por %p147, %p148
    %p150 = scmp.ne.s32.totalorder %s141, %s142
    %p151 = scmp.eq.s32.totalorder %s21, 0
    %p152 = por %p150, %p151
    %p153 = scmp.ne.s32.totalorder %s141, %s142
    %p154 = scmp.eq.s32.totalorder %s22, 1
    %p155 = por %p153, %p154
    %p157 = scmp.ne.s32.totalorder %s142, %s156
    %p158 = scmp.eq.s32.totalorder %s22, 0
    %p159 = por %p157, %p158
    %s161 = sadd.s32 %s160, 1
    %p164 = scmp.eq.s32.totalorder %s16, 1
    %p165 = scmp.ne.s32.totalorder %s160, %s162
    %p166 = scmp.eq.s32.totalorder %s16, 0
    %p167 = por %p165, %p166
    %p168 = scmp.ne.s32.totalorder %s160, %s162
    %p169 = scmp.eq.s32.totalorder %s21, 1
    %p170 = por %p168, %p169
    %p171 = scmp.ne.s32.totalorder %s162, %s163
    %p172 = scmp.eq.s32.totalorder %s21, 0
    %p173 = por %p171, %p172
    %p174 = scmp.ne.s32.totalorder %s162, %s163
    %p175 = scmp.eq.s32.totalorder %s22, 1
    %p176 = por %p174, %p175
    %p178 = scmp.ne.s32.totalorder %s163, %s177
    %p179 = scmp.eq.s32.totalorder %s22, 0
    %p180 = por %p178, %p179
    %s182 = sadd.s32 %s181, 1
    %p185 = scmp.eq.s32.totalorder %s16, 1
    %p186 = scmp.ne.s32.totalorder %s181, %s183
    %p187 = scmp.eq.s32.totalorder %s16, 0
    %p188 = por %p186, %p187
    %p189 = scmp.ne.s32.totalorder %s181, %s183
    %p190 = scmp.eq.s32.totalorder %s21, 1
    %p191 = por %p189, %p190
    %p192 = scmp.ne.s32.totalorder %s183, %s184
    %p193 = scmp.eq.s32.totalorder %s21, 0
    %p194 = por %p192, %p193
    %p195 = scmp.ne.s32.totalorder %s183, %s184
    %p196 = scmp.eq.s32.totalorder %s22, 1
    %p197 = por %p195, %p196
    %p199 = scmp.ne.s32.totalorder %s184, %s198
    %p200 = scmp.eq.s32.totalorder %s22, 0
    %p201 = por %p199, %p200
    %s202 = ssub.s32 %s16, %s23
    %p203 = scmp.eq.s32.totalorder %s202, 0
    %s205 = sadd.s32 %s204, 1
    %s206 = scalar_select %p203, %s204, %s205
    %p209 = pneg %p203
    %p210 = scmp.eq.s32.totalorder %s16, 1
    %p211 = por %p209, %p210
    %p212 = scmp.ne.s32.totalorder %s204, %s207
    %p213 = scmp.eq.s32.totalorder %s16, 0
    %p214 = por %p212, %p213
    %p215 = scmp.ne.s32.totalorder %s204, %s207
    %p216 = scmp.eq.s32.totalorder %s21, 1
    %p217 = por %p215, %p216
    %p218 = scmp.ne.s32.totalorder %s207, %s208
    %p219 = scmp.eq.s32.totalorder %s21, 0
    %p220 = por %p218, %p219
    %p221 = scmp.ne.s32.totalorder %s207, %s208
    %p222 = scmp.eq.s32.totalorder %s22, 1
    %p223 = por %p221, %p222
    %p225 = scmp.ne.s32.totalorder %s208, %s224
    %p226 = scmp.eq.s32.totalorder %s22, 0
    %p227 = por %p225, %p226
    %s228 = ssub.s32 %s16, %s23
    %p229 = scmp.eq.s32.totalorder %s228, 0
    %s231 = sadd.s32 %s230, 1
    %s232 = scalar_select %p229, %s230, %s231
    %p235 = pneg %p229
    %p236 = scmp.eq.s32.totalorder %s16, 1
    %p237 = por %p235, %p236
    %p238 = scmp.ne.s32.totalorder %s230, %s233
    %p239 = scmp.eq.s32.totalorder %s16, 0
    %p240 = por %p238, %p239
    %p241 = scmp.ne.s32.totalorder %s230, %s233
    %p242 = scmp.eq.s32.totalorder %s21, 1
    %p243 = por %p241, %p242
    %p244 = scmp.ne.s32.totalorder %s233, %s234
    %p245 = scmp.eq.s32.totalorder %s21, 0
    %p246 = por %p244, %p245
    %p247 = scmp.ne.s32.totalorder %s233, %s234
    %p248 = scmp.eq.s32.totalorder %s22, 1
    %p249 = por %p247, %p248
    %p251 = scmp.ne.s32.totalorder %s234, %s250
    %p252 = scmp.eq.s32.totalorder %s22, 0
    %p253 = por %p251, %p252
    %p254 = scmp.le.s32.totalorder 1, %s16
    %p255 = scmp.lt.s32.totalorder %s16, 3
    %p256 = pnand %p254, %p255
    %p257 = pneg %p256
    // Predicated region
    $region9: #{mag_block_forward.3} parent=5 // pred_check
      _
    $region10: #{mag_block_forward.3} parent=5 // pred_check_branch
      %259 = sbr.rel (%p256) target = $region12
    $region11: #{mag_block_forward.3} parent=5 // pred_region
      %s260 = ssub.s32 %s16, 1
      // Predicated region
      $region13: #{mag_block_forward.3} parent=11 // pred_check
        %p261 = pneg %p89
      $region14: #{mag_block_forward.3} parent=11 // pred_check_branch
        %263 = sbr.rel (%p261) target = $region16
      $region15: #{mag_block_forward.3} parent=11 // pred_region
        _
      $region16: #{mag_block_forward.3} parent=11 // pred_fallthru
        _
      // Predicated region
      $region17: #{mag_block_forward.3} parent=11 // pred_check
        %p264 = pneg %p110
      $region18: #{mag_block_forward.3} parent=11 // pred_check_branch
        %266 = sbr.rel (%p264) target = $region20
      $region19: #{mag_block_forward.3} parent=11 // pred_region
        _
      $region20: #{mag_block_forward.3} parent=11 // pred_fallthru
        _
      // Predicated region
      $region21: #{mag_block_forward.3} parent=11 // pred_check
        %p267 = pneg %p131
      $region22: #{mag_block_forward.3} parent=11 // pred_check_branch
        %269 = sbr.rel (%p267) target = $region24
      $region23: #{mag_block_forward.3} parent=11 // pred_region
        _
      $region24: #{mag_block_forward.3} parent=11 // pred_fallthru
        _
      // Predicated region
      $region25: #{mag_block_forward.3} parent=11 // pred_check
        %p270 = pneg %p152
      $region26: #{mag_block_forward.3} parent=11 // pred_check_branch
        %272 = sbr.rel (%p270) target = $region28
      $region27: #{mag_block_forward.3} parent=11 // pred_region
        _
      $region28: #{mag_block_forward.3} parent=11 // pred_fallthru
        _
      // Predicated region
      $region29: #{mag_block_forward.3} parent=11 // pred_check
        %p273 = pneg %p173
      $region30: #{mag_block_forward.3} parent=11 // pred_check_branch
        %275 = sbr.rel (%p273) target = $region32
      $region31: #{mag_block_forward.3} parent=11 // pred_region
        _
      $region32: #{mag_block_forward.3} parent=11 // pred_fallthru
        _
      // Predicated region
      $region33: #{mag_block_forward.3} parent=11 // pred_check
        %p276 = pneg %p194
      $region34: #{mag_block_forward.3} parent=11 // pred_check_branch
        %278 = sbr.rel (%p276) target = $region36
      $region35: #{mag_block_forward.3} parent=11 // pred_region
        _
      $region36: #{mag_block_forward.3} parent=11 // pred_fallthru
        _
    $region12: #{mag_block_forward.3} parent=5 // pred_fallthru
      _
    %p279 = scmp.lt.s32.totalorder %s16, 2
    // Predicated region
    $region37: #{mag_block_forward.3} parent=5 // pred_check
      %p280 = pneg %p279
    $region38: #{mag_block_forward.3} parent=5 // pred_check_branch
      %282 = sbr.rel (%p280) target = $region40
    $region39: #{mag_block_forward.3} parent=5 // pred_region
      // Predicated region
      $region41: #{mag_block_forward.3} parent=39 // pred_check
        %p283 = pneg %p36
      $region42: #{mag_block_forward.3} parent=39 // pred_check_branch
        %285 = sbr.rel (%p283) target = $region44
      $region43: #{mag_block_forward.3} parent=39 // pred_region
        %s286 = smul.u32 32, %s16
        %p287 = scmp.lt.s32.totalorder %s286, 63
        %s288 = scalar_select %p287, %s286, 63
        %s289 = smul.addr %s288, 8
        %s290 = scalar_lea.vmem %s0, %s289
        %s291 = smul.u32 32, %s16
      $region44: #{mag_block_forward.3} parent=39 // pred_fallthru
        _
      // Predicated region
      $region45: #{mag_block_forward.3} parent=39 // pred_check
        %p292 = pneg %p62
      $region46: #{mag_block_forward.3} parent=39 // pred_check_branch
        %294 = sbr.rel (%p292) target = $region48
      $region47: #{mag_block_forward.3} parent=39 // pred_region
        %s295 = smul.u32 32, %s16
        %p296 = scmp.lt.s32.totalorder %s295, 63
        %s297 = scalar_select %p296, %s295, 63
        %s298 = smul.addr %s297, 8
        %s299 = scalar_lea.vmem %s1, %s298
        %s300 = smul.u32 32, %s16
      $region48: #{mag_block_forward.3} parent=39 // pred_fallthru
        _
    $region40: #{mag_block_forward.3} parent=5 // pred_fallthru
      _
    %p301 = scmp.le.s32.totalorder 1, %s16
    %p302 = scmp.lt.s32.totalorder %s16, 3
    %p303 = pnand %p301, %p302
    %p304 = pneg %p303
    // Predicated region
    $region49: #{mag_block_forward.3} parent=5 // pred_check
      _
    $region50: #{mag_block_forward.3} parent=5 // pred_check_branch
      %306 = sbr.rel (%p303) target = $region52
    $region51: #{mag_block_forward.3} parent=5 // pred_region
      %s307 = ssub.s32 %s16, 1
      %s308 = smul.u32 32, %s21
      %p309 = scmp.lt.s32.totalorder %s308, 63
      %s310 = scalar_select %p309, %s308, 63
      %s311 = smul.addr %s310, 8
      %s312 = scalar_lea.vmem %s0, %s311
      %p313 = pneg %p42
      %p314 = pneg %p39
      %s315 = smul.u32 32, %s21
      %p316 = scmp.lt.s32.totalorder %s315, 63
      %s317 = scalar_select %p316, %s315, 63
      %s318 = smul.addr %s317, 8
      %s319 = scalar_lea.vmem %s1, %s318
      %p320 = pneg %p68
      %p321 = pneg %p65
      %p322 = pneg %p89
      %p323 = pneg %p86
      %p324 = pneg %p110
      %p325 = pneg %p107
      %p326 = pneg %p131
      %p327 = pneg %p128
      %p328 = pneg %p152
      %p329 = pneg %p149
      %p330 = pneg %p173
      %p331 = pneg %p170
      %p332 = pneg %p194
      %p333 = pneg %p191
      %p334 = pneg %p220
      %p335 = pneg %p217
      %s336 = smul.u32 32, %s21
      %p337 = scmp.lt.s32.totalorder %s336, 63
      %s338 = scalar_select %p337, %s336, 63
      %s339 = smul.addr %s338, 8
      %s340 = scalar_lea.vmem %s8, %s339
      %p341 = pneg %p246
      %p342 = pneg %p243
      %s343 = smul.u32 32, %s21
      %p344 = scmp.lt.s32.totalorder %s343, 63
      %s345 = scalar_select %p344, %s343, 63
      %s346 = smul.addr %s345, 8
      %s347 = scalar_lea.vmem %s9, %s346
      %s348 = smul.u32 32, %s21
      %p349 = scmp.lt.s32.totalorder %s348, 63
      %s350 = scalar_select %p349, %s348, 63
      %s351 = smul.addr %s350, 8
      %s352 = scalar_lea.vmem %s0, %s351
      %s353 = smul.u32 32, %s21
      %s354 = smul.u32 32, %s21
      %p355 = scmp.lt.s32.totalorder %s354, 63
      %s356 = scalar_select %p355, %s354, 63
      %s357 = smul.addr %s356, 8
      %s358 = scalar_lea.vmem %s1, %s357
      %s359 = smul.u32 32, %s21
      %s360 = smul.u32 32, %s21
      %p361 = scmp.lt.s32.totalorder %s360, 63
      %s362 = scalar_select %p361, %s360, 63
      %s363 = smul.addr %s362, 8
      %s364 = scalar_lea.vmem %s8, %s363
      %s365 = smul.u32 32, %s21
      %s366 = smul.u32 32, %s21
      %p367 = scmp.lt.s32.totalorder %s366, 63
      %s368 = scalar_select %p367, %s366, 63
      %s369 = smul.addr %s368, 8
      %s370 = scalar_lea.vmem %s9, %s369
      %s371 = smul.u32 32, %s21
      %v372 = vld [vmem:[%s352] sm:$0xff]
      %v373 = vld [vmem:[%s352 + $0x8] sm:$0xff]
      %v374 = vld [vmem:[%s352 + $0x10] sm:$0xff]
      %v375 = vld [vmem:[%s352 + $0x18] sm:$0xff]
      %v376 = vld [vmem:[%s352 + $0x20] sm:$0xff]
      %v377 = vld [vmem:[%s352 + $0x28] sm:$0xff]
      %v378 = vld [vmem:[%s352 + $0x30] sm:$0xff]
      %v379 = vld [vmem:[%s352 + $0x38] sm:$0xff]
      %v380 = vld [vmem:[%s352 + $0x40] sm:$0xff]
      %v381 = vld [vmem:[%s352 + $0x48] sm:$0xff]
      %v382 = vld [vmem:[%s352 + $0x50] sm:$0xff]
      %v383 = vld [vmem:[%s352 + $0x58] sm:$0xff]
      %v384 = vld [vmem:[%s352 + $0x60] sm:$0xff]
      %v385 = vld [vmem:[%s352 + $0x68] sm:$0xff]
      %v386 = vld [vmem:[%s352 + $0x70] sm:$0xff]
      %v387 = vld [vmem:[%s352 + $0x78] sm:$0xff]
      %v388 = vld [vmem:[%s352 + $0x80] sm:$0xff]
      %v389 = vld [vmem:[%s352 + $0x88] sm:$0xff]
      %v390 = vld [vmem:[%s352 + $0x90] sm:$0xff]
      %v391 = vld [vmem:[%s352 + $0x98] sm:$0xff]
      %v392 = vld [vmem:[%s352 + $0xa0] sm:$0xff]
      %v393 = vld [vmem:[%s352 + $0xa8] sm:$0xff]
      %v394 = vld [vmem:[%s352 + $0xb0] sm:$0xff]
      %v395 = vld [vmem:[%s352 + $0xb8] sm:$0xff]
      %v396 = vld [vmem:[%s352 + $0xc0] sm:$0xff]
      %v397 = vld [vmem:[%s352 + $0xc8] sm:$0xff]
      %v398 = vld [vmem:[%s352 + $0xd0] sm:$0xff]
      %v399 = vld [vmem:[%s352 + $0xd8] sm:$0xff]
      %v400 = vld [vmem:[%s352 + $0xe0] sm:$0xff]
      %v401 = vld [vmem:[%s352 + $0xe8] sm:$0xff]
      %v402 = vld [vmem:[%s352 + $0xf0] sm:$0xff]
      %v403 = vld [vmem:[%s352 + $0xf8] sm:$0xff]
      %v404 = vld [vmem:[%s2] sm:$0xff]
      %v405 = vld [vmem:[%s2 + $0x8] sm:$0xff]
      %v406 = vld [vmem:[%s2 + $0x10] sm:$0xff]
      %v407 = vld [vmem:[%s2 + $0x18] sm:$0xff]
      %v408 = vld [vmem:[%s2 + $0x20] sm:$0xf]
      %vm409 = vcmask 293888
      %v411 = vsel %vm409, %v372, 0
      %v414 = vsel %vm409, %v373, 0
      %v417 = vsel %vm409, %v374, 0
      %v420 = vsel %vm409, %v375, 0
      %v423 = vsel %vm409, %v376, 0
      %v426 = vsel %vm409, %v377, 0
      %v429 = vsel %vm409, %v378, 0
      %v432 = vsel %vm409, %v379, 0
      %v435 = vsel %vm409, %v380, 0
      %v438 = vsel %vm409, %v381, 0
      %v441 = vsel %vm409, %v382, 0
      %v444 = vsel %vm409, %v383, 0
      %v447 = vsel %vm409, %v384, 0
      %v450 = vsel %vm409, %v385, 0
      %v453 = vsel %vm409, %v386, 0
      %v456 = vsel %vm409, %v387, 0
      %v459 = vsel %vm409, %v388, 0
      %v462 = vsel %vm409, %v389, 0
      %v465 = vsel %vm409, %v390, 0
      %v468 = vsel %vm409, %v391, 0
      %v471 = vsel %vm409, %v392, 0
      %v474 = vsel %vm409, %v393, 0
      %v477 = vsel %vm409, %v394, 0
      %v480 = vsel %vm409, %v395, 0
      %v483 = vsel %vm409, %v396, 0
      %v486 = vsel %vm409, %v397, 0
      %v489 = vsel %vm409, %v398, 0
      %v492 = vsel %vm409, %v399, 0
      %v495 = vsel %vm409, %v400, 0
      %v498 = vsel %vm409, %v401, 0
      %v501 = vsel %vm409, %v402, 0
      %v504 = vsel %vm409, %v403, 0
      %vm506 = vcmask 1043456
      %v508 = vsel %vm506, %v408, 0
      %510 = vmatprep.subr.mxu0 0.0
      %511 = vmatpush1.msra.mxu0 0.0
      %512 = vmatprep.subr.mxu0 0.0
      %513 = vmatpush1.msra.mxu0 0.0
      %514 = vmatprep.subr.mxu0 0.0
      %515 = vmatpush1.msra.mxu0 0.0
      %516 = vmatprep.subr.mxu0 0.0
      %517 = vmatpush1.msra.mxu0 0.0
      %518 = vmatprep.subr.mxu0 0.0
      %519 = vmatpush1.msra.mxu0 0.0
      %520 = vmatprep.subr.mxu0 0.0
      %521 = vmatpush1.msra.mxu0 0.0
      %522 = vmatprep.subr.mxu0 0.0
      %523 = vmatpush1.msra.mxu0 0.0
      %524 = vmatprep.subr.mxu0 0.0
      %525 = vmatpush1.msra.mxu0 0.0
      %526 = vmatprep.subr.mxu0 0.0
      %527 = vmatpush1.msra.mxu0 0.0
      %528 = vmatprep.subr.mxu0 0.0
      %529 = vmatpush1.msra.mxu0 0.0
      %530 = vmatprep.subr.mxu0 0.0
      %531 = vmatpush1.msra.mxu0 0.0
      %532 = vmatprep.subr.mxu0 0.0
      %533 = vmatpush1.msra.mxu0 %v508
      %534 = vmatprep.subr.mxu0 0.0
      %535 = vmatpush1.msra.mxu0 %v407
      %536 = vmatprep.subr.mxu0 0.0
      %537 = vmatpush1.msra.mxu0 %v406
      %538 = vmatprep.subr.mxu0 0.0
      %539 = vmatpush1.msra.mxu0 %v405
      %540 = vmatprep.subr.mxu0 0.0
      %541 = vmatpush1.msra.mxu0 %v404
      %542 = vmatprep.subr.mxu0 0.0
      %543 = vmatpush2.msra.mxu0 0.0
      %544 = vmatprep.subr.mxu0 0.0
      %545 = vmatpush2.msra.mxu0 0.0
      %546 = vmatprep.subr.mxu0 0.0
      %547 = vmatpush2.msra.mxu0 0.0
      %548 = vmatprep.subr.mxu0 0.0
      %549 = vmatpush2.msra.mxu0 0.0
      %550 = vmatprep.subr.mxu0 0.0
      %551 = vmatpush2.msra.mxu0 0.0
      %552 = vmatprep.subr.mxu0 0.0
      %553 = vmatpush2.msra.mxu0 0.0
      %554 = vmatprep.subr.mxu0 0.0
      %555 = vmatpush2.msra.mxu0 0.0
      %556 = vmatprep.subr.mxu0 0.0
      %557 = vmatpush2.msra.mxu0 0.0
      %558 = vmatprep.subr.mxu0 0.0
      %559 = vmatpush2.msra.mxu0 0.0
      %560 = vmatprep.subr.mxu0 0.0
      %561 = vmatpush2.msra.mxu0 0.0
      %562 = vmatprep.subr.mxu0 0.0
      %563 = vmatpush2.msra.mxu0 0.0
      %564 = vmatprep.subr.mxu0 0.0
      %565 = vmatpush2.msra.mxu0 0.0
      %566 = vmatprep.subr.mxu0 0.0
      %567 = vmatpush2.msra.mxu0 0.0
      %568 = vmatprep.subr.mxu0 0.0
      %569 = vmatpush2.msra.mxu0 0.0
      %570 = vmatprep.subr.mxu0 0.0
      %571 = vmatpush2.msra.mxu0 0.0
      %572 = vmatprep.subr.mxu0 0.0
      %573 = vmatpush2.msra.mxu0 0.0
      %574 = vmatprep.mubr.f32.mxu0 0.0
      %575 = vmatmul.mubr.f32.gmra.mxu0 %v411
      %v576 = vpop.f32.mrf.mxu0
      %v577 = vadd.f32 0.0, %v576
      %v578 = vpop.f32.mrf.mxu0
      %579 = vmatprep.mubr.f32.mxu0 0.0
      %580 = vmatmul.mubr.f32.gmra.mxu0 %v414
      %v581 = vpop.f32.mrf.mxu0
      %v582 = vadd.f32 0.0, %v581
      %v583 = vpop.f32.mrf.mxu0
      %584 = vmatprep.mubr.f32.mxu0 0.0
      %585 = vmatmul.mubr.f32.gmra.mxu0 %v417
      %v586 = vpop.f32.mrf.mxu0
      %v587 = vadd.f32 0.0, %v586
      %v588 = vpop.f32.mrf.mxu0
      %589 = vmatprep.mubr.f32.mxu0 0.0
      %590 = vmatmul.mubr.f32.gmra.mxu0 %v420
      %v591 = vpop.f32.mrf.mxu0
      %v592 = vadd.f32 0.0, %v591
      %v593 = vpop.f32.mrf.mxu0
      %594 = vmatprep.mubr.f32.mxu0 0.0
      %595 = vmatmul.mubr.f32.gmra.mxu0 %v423
      %v596 = vpop.f32.mrf.mxu0
      %v597 = vadd.f32 0.0, %v596
      %v598 = vpop.f32.mrf.mxu0
      %599 = vmatprep.mubr.f32.mxu0 0.0
      %600 = vmatmul.mubr.f32.gmra.mxu0 %v426
      %v601 = vpop.f32.mrf.mxu0
      %v602 = vadd.f32 0.0, %v601
      %v603 = vpop.f32.mrf.mxu0
      %604 = vmatprep.mubr.f32.mxu0 0.0
      %605 = vmatmul.mubr.f32.gmra.mxu0 %v429
      %v606 = vpop.f32.mrf.mxu0
      %v607 = vadd.f32 0.0, %v606
      %v608 = vpop.f32.mrf.mxu0
      %609 = vmatprep.mubr.f32.mxu0 0.0
      %610 = vmatmul.mubr.f32.gmra.mxu0 %v432
      %v611 = vpop.f32.mrf.mxu0
      %v612 = vadd.f32 0.0, %v611
      %v613 = vpop.f32.mrf.mxu0
      %614 = vmatprep.mubr.f32.mxu0 0.0
      %615 = vmatmul.mubr.f32.gmra.mxu0 %v435
      %v616 = vpop.f32.mrf.mxu0
      %v617 = vadd.f32 0.0, %v616
      %v618 = vpop.f32.mrf.mxu0
      %619 = vmatprep.mubr.f32.mxu0 0.0
      %620 = vmatmul.mubr.f32.gmra.mxu0 %v438
      %v621 = vpop.f32.mrf.mxu0
      %v622 = vadd.f32 0.0, %v621
      %v623 = vpop.f32.mrf.mxu0
      %624 = vmatprep.mubr.f32.mxu0 0.0
      %625 = vmatmul.mubr.f32.gmra.mxu0 %v441
      %v626 = vpop.f32.mrf.mxu0
      %v627 = vadd.f32 0.0, %v626
      %v628 = vpop.f32.mrf.mxu0
      %629 = vmatprep.mubr.f32.mxu0 0.0
      %630 = vmatmul.mubr.f32.gmra.mxu0 %v444
      %v631 = vpop.f32.mrf.mxu0
      %v632 = vadd.f32 0.0, %v631
      %v633 = vpop.f32.mrf.mxu0
      %634 = vmatprep.mubr.f32.mxu0 0.0
      %635 = vmatmul.mubr.f32.gmra.mxu0 %v447
      %v636 = vpop.f32.mrf.mxu0
      %v637 = vadd.f32 0.0, %v636
      %v638 = vpop.f32.mrf.mxu0
      %639 = vmatprep.mubr.f32.mxu0 0.0
      %640 = vmatmul.mubr.f32.gmra.mxu0 %v450
      %v641 = vpop.f32.mrf.mxu0
      %v642 = vadd.f32 0.0, %v641
      %v643 = vpop.f32.mrf.mxu0
      %644 = vmatprep.mubr.f32.mxu0 0.0
      %645 = vmatmul.mubr.f32.gmra.mxu0 %v453
      %v646 = vpop.f32.mrf.mxu0
      %v647 = vadd.f32 0.0, %v646
      %v648 = vpop.f32.mrf.mxu0
      %649 = vmatprep.mubr.f32.mxu0 0.0
      %650 = vmatmul.mubr.f32.gmra.mxu0 %v456
      %v651 = vpop.f32.mrf.mxu0
      %v652 = vadd.f32 0.0, %v651
      %v653 = vpop.f32.mrf.mxu0
      %654 = vmatprep.mubr.f32.mxu0 0.0
      %655 = vmatmul.mubr.f32.gmra.mxu0 %v459
      %v656 = vpop.f32.mrf.mxu0
      %v657 = vadd.f32 0.0, %v656
      %v658 = vpop.f32.mrf.mxu0
      %659 = vmatprep.mubr.f32.mxu0 0.0
      %660 = vmatmul.mubr.f32.gmra.mxu0 %v462
      %v661 = vpop.f32.mrf.mxu0
      %v662 = vadd.f32 0.0, %v661
      %v663 = vpop.f32.mrf.mxu0
      %664 = vmatprep.mubr.f32.mxu0 0.0
      %665 = vmatmul.mubr.f32.gmra.mxu0 %v465
      %v666 = vpop.f32.mrf.mxu0
      %v667 = vadd.f32 0.0, %v666
      %v668 = vpop.f32.mrf.mxu0
      %669 = vmatprep.mubr.f32.mxu0 0.0
      %670 = vmatmul.mubr.f32.gmra.mxu0 %v468
      %v671 = vpop.f32.mrf.mxu0
      %v672 = vadd.f32 0.0, %v671
      %v673 = vpop.f32.mrf.mxu0
      %674 = vmatprep.mubr.f32.mxu0 0.0
      %675 = vmatmul.mubr.f32.gmra.mxu0 %v471
      %v676 = vpop.f32.mrf.mxu0
      %v677 = vadd.f32 0.0, %v676
      %v678 = vpop.f32.mrf.mxu0
      %679 = vmatprep.mubr.f32.mxu0 0.0
      %680 = vmatmul.mubr.f32.gmra.mxu0 %v474
      %v681 = vpop.f32.mrf.mxu0
      %v682 = vadd.f32 0.0, %v681
      %v683 = vpop.f32.mrf.mxu0
      %684 = vmatprep.mubr.f32.mxu0 0.0
      %685 = vmatmul.mubr.f32.gmra.mxu0 %v477
      %v686 = vpop.f32.mrf.mxu0
      %v687 = vadd.f32 0.0, %v686
      %v688 = vpop.f32.mrf.mxu0
      %689 = vmatprep.mubr.f32.mxu0 0.0
      %690 = vmatmul.mubr.f32.gmra.mxu0 %v480
      %v691 = vpop.f32.mrf.mxu0
      %v692 = vadd.f32 0.0, %v691
      %v693 = vpop.f32.mrf.mxu0
      %694 = vmatprep.mubr.f32.mxu0 0.0
      %695 = vmatmul.mubr.f32.gmra.mxu0 %v483
      %v696 = vpop.f32.mrf.mxu0
      %v697 = vadd.f32 0.0, %v696
      %v698 = vpop.f32.mrf.mxu0
      %699 = vmatprep.mubr.f32.mxu0 0.0
      %700 = vmatmul.mubr.f32.gmra.mxu0 %v486
      %v701 = vpop.f32.mrf.mxu0
      %v702 = vadd.f32 0.0, %v701
      %v703 = vpop.f32.mrf.mxu0
      %704 = vmatprep.mubr.f32.mxu0 0.0
      %705 = vmatmul.mubr.f32.gmra.mxu0 %v489
      %v706 = vpop.f32.mrf.mxu0
      %v707 = vadd.f32 0.0, %v706
      %v708 = vpop.f32.mrf.mxu0
      %709 = vmatprep.mubr.f32.mxu0 0.0
      %710 = vmatmul.mubr.f32.gmra.mxu0 %v492
      %v711 = vpop.f32.mrf.mxu0
      %v712 = vadd.f32 0.0, %v711
      %v713 = vpop.f32.mrf.mxu0
      %714 = vmatprep.mubr.f32.mxu0 0.0
      %715 = vmatmul.mubr.f32.gmra.mxu0 %v495
      %v716 = vpop.f32.mrf.mxu0
      %v717 = vadd.f32 0.0, %v716
      %v718 = vpop.f32.mrf.mxu0
      %719 = vmatprep.mubr.f32.mxu0 0.0
      %720 = vmatmul.mubr.f32.gmra.mxu0 %v498
      %v721 = vpop.f32.mrf.mxu0
      %v722 = vadd.f32 0.0, %v721
      %v723 = vpop.f32.mrf.mxu0
      %724 = vmatprep.mubr.f32.mxu0 0.0
      %725 = vmatmul.mubr.f32.gmra.mxu0 %v501
      %v726 = vpop.f32.mrf.mxu0
      %v727 = vadd.f32 0.0, %v726
      %v728 = vpop.f32.mrf.mxu0
      %729 = vmatprep.mubr.f32.mxu0 0.0
      %730 = vmatmul.mubr.f32.gmra.mxu0 %v504
      %v731 = vpop.f32.mrf.mxu0
      %v732 = vadd.f32 0.0, %v731
      %v733 = vpop.f32.mrf.mxu0
      %734 = vdwg.mxu0
      %v735 = vld [vmem:[%s4] sm:$0x1]
      %v737 = vlaneseq
      %v738 = vshrl.u32 %v737, 7
      %v739 = vsub.s32 0, %v738
      %v740 = vrot.slane %v735, %v739
      %v742 = vmul.f32 %v577, %v740
      %v743 = vmul.f32 %v582, %v740
      %v744 = vmul.f32 %v587, %v740
      %v745 = vmul.f32 %v592, %v740
      %v746 = vmul.f32 %v597, %v740
      %v747 = vmul.f32 %v602, %v740
      %v748 = vmul.f32 %v607, %v740
      %v749 = vmul.f32 %v612, %v740
      %v750 = vmul.f32 %v617, %v740
      %v751 = vmul.f32 %v622, %v740
      %v752 = vmul.f32 %v627, %v740
      %v753 = vmul.f32 %v632, %v740
      %v754 = vmul.f32 %v637, %v740
      %v755 = vmul.f32 %v642, %v740
      %v756 = vmul.f32 %v647, %v740
      %v757 = vmul.f32 %v652, %v740
      %v758 = vmul.f32 %v657, %v740
      %v759 = vmul.f32 %v662, %v740
      %v760 = vmul.f32 %v667, %v740
      %v761 = vmul.f32 %v672, %v740
      %v762 = vmul.f32 %v677, %v740
      %v763 = vmul.f32 %v682, %v740
      %v764 = vmul.f32 %v687, %v740
      %v765 = vmul.f32 %v692, %v740
      %v766 = vmul.f32 %v697, %v740
      %v767 = vmul.f32 %v702, %v740
      %v768 = vmul.f32 %v707, %v740
      %v769 = vmul.f32 %v712, %v740
      %v770 = vmul.f32 %v717, %v740
      %v771 = vmul.f32 %v722, %v740
      %v772 = vmul.f32 %v727, %v740
      %v773 = vmul.f32 %v732, %v740
      %v774 = vld [vmem:[%s5] sm:$0x1]
      %v776 = vlaneseq
      %v777 = vshrl.u32 %v776, 7
      %v778 = vsub.s32 0, %v777
      %v779 = vrot.slane %v774, %v778
      %v781 = vadd.f32 %v742, %v779
      %v782 = vadd.f32 %v743, %v779
      %v783 = vadd.f32 %v744, %v779
      %v784 = vadd.f32 %v745, %v779
      %v785 = vadd.f32 %v746, %v779
      %v786 = vadd.f32 %v747, %v779
      %v787 = vadd.f32 %v748, %v779
      %v788 = vadd.f32 %v749, %v779
      %v789 = vadd.f32 %v750, %v779
      %v790 = vadd.f32 %v751, %v779
      %v791 = vadd.f32 %v752, %v779
      %v792 = vadd.f32 %v753, %v779
      %v793 = vadd.f32 %v754, %v779
      %v794 = vadd.f32 %v755, %v779
      %v795 = vadd.f32 %v756, %v779
      %v796 = vadd.f32 %v757, %v779
      %v797 = vadd.f32 %v758, %v779
      %v798 = vadd.f32 %v759, %v779
      %v799 = vadd.f32 %v760, %v779
      %v800 = vadd.f32 %v761, %v779
      %v801 = vadd.f32 %v762, %v779
      %v802 = vadd.f32 %v763, %v779
      %v803 = vadd.f32 %v764, %v779
      %v804 = vadd.f32 %v765, %v779
      %v805 = vadd.f32 %v766, %v779
      %v806 = vadd.f32 %v767, %v779
      %v807 = vadd.f32 %v768, %v779
      %v808 = vadd.f32 %v769, %v779
      %v809 = vadd.f32 %v770, %v779
      %v810 = vadd.f32 %v771, %v779
      %v811 = vadd.f32 %v772, %v779
      %v812 = vadd.f32 %v773, %v779
      %v813 = vmax.f32 %v781, 0.0
      %v814 = vmax.f32 %v782, 0.0
      %v815 = vmax.f32 %v783, 0.0
      %v816 = vmax.f32 %v784, 0.0
      %v817 = vmax.f32 %v785, 0.0
      %v818 = vmax.f32 %v786, 0.0
      %v819 = vmax.f32 %v787, 0.0
      %v820 = vmax.f32 %v788, 0.0
      %v821 = vmax.f32 %v789, 0.0
      %v822 = vmax.f32 %v790, 0.0
      %v823 = vmax.f32 %v791, 0.0
      %v824 = vmax.f32 %v792, 0.0
      %v825 = vmax.f32 %v793, 0.0
      %v826 = vmax.f32 %v794, 0.0
      %v827 = vmax.f32 %v795, 0.0
      %v828 = vmax.f32 %v796, 0.0
      %v829 = vmax.f32 %v797, 0.0
      %v830 = vmax.f32 %v798, 0.0
      %v831 = vmax.f32 %v799, 0.0
      %v832 = vmax.f32 %v800, 0.0
      %v833 = vmax.f32 %v801, 0.0
      %v834 = vmax.f32 %v802, 0.0
      %v835 = vmax.f32 %v803, 0.0
      %v836 = vmax.f32 %v804, 0.0
      %v837 = vmax.f32 %v805, 0.0
      %v838 = vmax.f32 %v806, 0.0
      %v839 = vmax.f32 %v807, 0.0
      %v840 = vmax.f32 %v808, 0.0
      %v841 = vmax.f32 %v809, 0.0
      %v842 = vmax.f32 %v810, 0.0
      %v843 = vmax.f32 %v811, 0.0
      %v844 = vmax.f32 %v812, 0.0
      %vm845 = vcmask 130048
      %846 = vst.msk [vmem:[%s364] sm:$0xff] %vm845, %v813
      %847 = vst.msk [vmem:[%s364 + $0x8] sm:$0xff] %vm845, %v814
      %848 = vst.msk [vmem:[%s364 + $0x10] sm:$0xff] %vm845, %v815
      %849 = vst.msk [vmem:[%s364 + $0x18] sm:$0xff] %vm845, %v816
      %850 = vst.msk [vmem:[%s364 + $0x20] sm:$0xff] %vm845, %v817
      %851 = vst.msk [vmem:[%s364 + $0x28] sm:$0xff] %vm845, %v818
      %852 = vst.msk [vmem:[%s364 + $0x30] sm:$0xff] %vm845, %v819
      %853 = vst.msk [vmem:[%s364 + $0x38] sm:$0xff] %vm845, %v820
      %854 = vst.msk [vmem:[%s364 + $0x40] sm:$0xff] %vm845, %v821
      %855 = vst.msk [vmem:[%s364 + $0x48] sm:$0xff] %vm845, %v822
      %856 = vst.msk [vmem:[%s364 + $0x50] sm:$0xff] %vm845, %v823
      %857 = vst.msk [vmem:[%s364 + $0x58] sm:$0xff] %vm845, %v824
      %858 = vst.msk [vmem:[%s364 + $0x60] sm:$0xff] %vm845, %v825
      %859 = vst.msk [vmem:[%s364 + $0x68] sm:$0xff] %vm845, %v826
      %860 = vst.msk [vmem:[%s364 + $0x70] sm:$0xff] %vm845, %v827
      %861 = vst.msk [vmem:[%s364 + $0x78] sm:$0xff] %vm845, %v828
      %862 = vst.msk [vmem:[%s364 + $0x80] sm:$0xff] %vm845, %v829
      %863 = vst.msk [vmem:[%s364 + $0x88] sm:$0xff] %vm845, %v830
      %864 = vst.msk [vmem:[%s364 + $0x90] sm:$0xff] %vm845, %v831
      %865 = vst.msk [vmem:[%s364 + $0x98] sm:$0xff] %vm845, %v832
      %866 = vst.msk [vmem:[%s364 + $0xa0] sm:$0xff] %vm845, %v833
      %867 = vst.msk [vmem:[%s364 + $0xa8] sm:$0xff] %vm845, %v834
      %868 = vst.msk [vmem:[%s364 + $0xb0] sm:$0xff] %vm845, %v835
      %869 = vst.msk [vmem:[%s364 + $0xb8] sm:$0xff] %vm845, %v836
      %870 = vst.msk [vmem:[%s364 + $0xc0] sm:$0xff] %vm845, %v837
      %871 = vst.msk [vmem:[%s364 + $0xc8] sm:$0xff] %vm845, %v838
      %872 = vst.msk [vmem:[%s364 + $0xd0] sm:$0xff] %vm845, %v839
      %873 = vst.msk [vmem:[%s364 + $0xd8] sm:$0xff] %vm845, %v840
      %874 = vst.msk [vmem:[%s364 + $0xe0] sm:$0xff] %vm845, %v841
      %875 = vst.msk [vmem:[%s364 + $0xe8] sm:$0xff] %vm845, %v842
      %876 = vst.msk [vmem:[%s364 + $0xf0] sm:$0xff] %vm845, %v843
      %877 = vst.msk [vmem:[%s364 + $0xf8] sm:$0xff] %vm845, %v844
      %v878 = vld [vmem:[%s358] sm:$0xff]
      %v879 = vld [vmem:[%s358 + $0x8] sm:$0xff]
      %v880 = vld [vmem:[%s358 + $0x10] sm:$0xff]
      %v881 = vld [vmem:[%s358 + $0x18] sm:$0xff]
      %v882 = vld [vmem:[%s358 + $0x20] sm:$0xff]
      %v883 = vld [vmem:[%s358 + $0x28] sm:$0xff]
      %v884 = vld [vmem:[%s358 + $0x30] sm:$0xff]
      %v885 = vld [vmem:[%s358 + $0x38] sm:$0xff]
      %v886 = vld [vmem:[%s358 + $0x40] sm:$0xff]
      %v887 = vld [vmem:[%s358 + $0x48] sm:$0xff]
      %v888 = vld [vmem:[%s358 + $0x50] sm:$0xff]
      %v889 = vld [vmem:[%s358 + $0x58] sm:$0xff]
      %v890 = vld [vmem:[%s358 + $0x60] sm:$0xff]
      %v891 = vld [vmem:[%s358 + $0x68] sm:$0xff]
      %v892 = vld [vmem:[%s358 + $0x70] sm:$0xff]
      %v893 = vld [vmem:[%s358 + $0x78] sm:$0xff]
      %v894 = vld [vmem:[%s358 + $0x80] sm:$0xff]
      %v895 = vld [vmem:[%s358 + $0x88] sm:$0xff]
      %v896 = vld [vmem:[%s358 + $0x90] sm:$0xff]
      %v897 = vld [vmem:[%s358 + $0x98] sm:$0xff]
      %v898 = vld [vmem:[%s358 + $0xa0] sm:$0xff]
      %v899 = vld [vmem:[%s358 + $0xa8] sm:$0xff]
      %v900 = vld [vmem:[%s358 + $0xb0] sm:$0xff]
      %v901 = vld [vmem:[%s358 + $0xb8] sm:$0xff]
      %v902 = vld [vmem:[%s358 + $0xc0] sm:$0xff]
      %v903 = vld [vmem:[%s358 + $0xc8] sm:$0xff]
      %v904 = vld [vmem:[%s358 + $0xd0] sm:$0xff]
      %v905 = vld [vmem:[%s358 + $0xd8] sm:$0xff]
      %v906 = vld [vmem:[%s358 + $0xe0] sm:$0xff]
      %v907 = vld [vmem:[%s358 + $0xe8] sm:$0xff]
      %v908 = vld [vmem:[%s358 + $0xf0] sm:$0xff]
      %v909 = vld [vmem:[%s358 + $0xf8] sm:$0xff]
      %v910 = vld [vmem:[%s3] sm:$0xff]
      %v911 = vld [vmem:[%s3 + $0x8] sm:$0xff]
      %v912 = vld [vmem:[%s3 + $0x10] sm:$0xff]
      %v913 = vld [vmem:[%s3 + $0x18] sm:$0xff]
      %v914 = vld [vmem:[%s3 + $0x20] sm:$0xff]
      %v915 = vld [vmem:[%s3 + $0x28] sm:$0xf]
      %vm916 = vcmask 359424
      %v918 = vsel %vm916, %v878, 0
      %v921 = vsel %vm916, %v879, 0
      %v924 = vsel %vm916, %v880, 0
      %v927 = vsel %vm916, %v881, 0
      %v930 = vsel %vm916, %v882, 0
      %v933 = vsel %vm916, %v883, 0
      %v936 = vsel %vm916, %v884, 0
      %v939 = vsel %vm916, %v885, 0
      %v942 = vsel %vm916, %v886, 0
      %v945 = vsel %vm916, %v887, 0
      %v948 = vsel %vm916, %v888, 0
      %v951 = vsel %vm916, %v889, 0
      %v954 = vsel %vm916, %v890, 0
      %v957 = vsel %vm916, %v891, 0
      %v960 = vsel %vm916, %v892, 0
      %v963 = vsel %vm916, %v893, 0
      %v966 = vsel %vm916, %v894, 0
      %v969 = vsel %vm916, %v895, 0
      %v972 = vsel %vm916, %v896, 0
      %v975 = vsel %vm916, %v897, 0
      %v978 = vsel %vm916, %v898, 0
      %v981 = vsel %vm916, %v899, 0
      %v984 = vsel %vm916, %v900, 0
      %v987 = vsel %vm916, %v901, 0
      %v990 = vsel %vm916, %v902, 0
      %v993 = vsel %vm916, %v903, 0
      %v996 = vsel %vm916, %v904, 0
      %v999 = vsel %vm916, %v905, 0
      %v1002 = vsel %vm916, %v906, 0
      %v1005 = vsel %vm916, %v907, 0
      %v1008 = vsel %vm916, %v908, 0
      %v1011 = vsel %vm916, %v909, 0
      %v1014 = vsel %vm506, %v915, 0
      %1016 = vmatprep.subr.mxu0 0.0
      %1017 = vmatpush1.msra.mxu0 0.0
      %1018 = vmatprep.subr.mxu0 0.0
      %1019 = vmatpush1.msra.mxu0 0.0
      %1020 = vmatprep.subr.mxu0 0.0
      %1021 = vmatpush1.msra.mxu0 0.0
      %1022 = vmatprep.subr.mxu0 0.0
      %1023 = vmatpush1.msra.mxu0 0.0
      %1024 = vmatprep.subr.mxu0 0.0
      %1025 = vmatpush1.msra.mxu0 0.0
      %1026 = vmatprep.subr.mxu0 0.0
      %1027 = vmatpush1.msra.mxu0 0.0
      %1028 = vmatprep.subr.mxu0 0.0
      %1029 = vmatpush1.msra.mxu0 0.0
      %1030 = vmatprep.subr.mxu0 0.0
      %1031 = vmatpush1.msra.mxu0 0.0
      %1032 = vmatprep.subr.mxu0 0.0
      %1033 = vmatpush1.msra.mxu0 0.0
      %1034 = vmatprep.subr.mxu0 0.0
      %1035 = vmatpush1.msra.mxu0 0.0
      %1036 = vmatprep.subr.mxu0 0.0
      %1037 = vmatpush1.msra.mxu0 %v1014
      %1038 = vmatprep.subr.mxu0 0.0
      %1039 = vmatpush1.msra.mxu0 %v914
      %1040 = vmatprep.subr.mxu0 0.0
      %1041 = vmatpush1.msra.mxu0 %v913
      %1042 = vmatprep.subr.mxu0 0.0
      %1043 = vmatpush1.msra.mxu0 %v912
      %1044 = vmatprep.subr.mxu0 0.0
      %1045 = vmatpush1.msra.mxu0 %v911
      %1046 = vmatprep.subr.mxu0 0.0
      %1047 = vmatpush1.msra.mxu0 %v910
      %1048 = vmatprep.subr.mxu0 0.0
      %1049 = vmatpush2.msra.mxu0 0.0
      %1050 = vmatprep.subr.mxu0 0.0
      %1051 = vmatpush2.msra.mxu0 0.0
      %1052 = vmatprep.subr.mxu0 0.0
      %1053 = vmatpush2.msra.mxu0 0.0
      %1054 = vmatprep.subr.mxu0 0.0
      %1055 = vmatpush2.msra.mxu0 0.0
      %1056 = vmatprep.subr.mxu0 0.0
      %1057 = vmatpush2.msra.mxu0 0.0
      %1058 = vmatprep.subr.mxu0 0.0
      %1059 = vmatpush2.msra.mxu0 0.0
      %1060 = vmatprep.subr.mxu0 0.0
      %1061 = vmatpush2.msra.mxu0 0.0
      %1062 = vmatprep.subr.mxu0 0.0
      %1063 = vmatpush2.msra.mxu0 0.0
      %1064 = vmatprep.subr.mxu0 0.0
      %1065 = vmatpush2.msra.mxu0 0.0
      %1066 = vmatprep.subr.mxu0 0.0
      %1067 = vmatpush2.msra.mxu0 0.0
      %1068 = vmatprep.subr.mxu0 0.0
      %1069 = vmatpush2.msra.mxu0 0.0
      %1070 = vmatprep.subr.mxu0 0.0
      %1071 = vmatpush2.msra.mxu0 0.0
      %1072 = vmatprep.subr.mxu0 0.0
      %1073 = vmatpush2.msra.mxu0 0.0
      %1074 = vmatprep.subr.mxu0 0.0
      %1075 = vmatpush2.msra.mxu0 0.0
      %1076 = vmatprep.subr.mxu0 0.0
      %1077 = vmatpush2.msra.mxu0 0.0
      %1078 = vmatprep.subr.mxu0 0.0
      %1079 = vmatpush2.msra.mxu0 0.0
      %1080 = vmatprep.mubr.f32.mxu0 0.0
      %1081 = vmatmul.mubr.f32.gmra.mxu0 %v918
      %v1082 = vpop.f32.mrf.mxu0
      %v1083 = vadd.f32 0.0, %v1082
      %v1084 = vpop.f32.mrf.mxu0
      %1085 = vmatprep.mubr.f32.mxu0 0.0
      %1086 = vmatmul.mubr.f32.gmra.mxu0 %v921
      %v1087 = vpop.f32.mrf.mxu0
      %v1088 = vadd.f32 0.0, %v1087
      %v1089 = vpop.f32.mrf.mxu0
      %1090 = vmatprep.mubr.f32.mxu0 0.0
      %1091 = vmatmul.mubr.f32.gmra.mxu0 %v924
      %v1092 = vpop.f32.mrf.mxu0
      %v1093 = vadd.f32 0.0, %v1092
      %v1094 = vpop.f32.mrf.mxu0
      %1095 = vmatprep.mubr.f32.mxu0 0.0
      %1096 = vmatmul.mubr.f32.gmra.mxu0 %v927
      %v1097 = vpop.f32.mrf.mxu0
      %v1098 = vadd.f32 0.0, %v1097
      %v1099 = vpop.f32.mrf.mxu0
      %1100 = vmatprep.mubr.f32.mxu0 0.0
      %1101 = vmatmul.mubr.f32.gmra.mxu0 %v930
      %v1102 = vpop.f32.mrf.mxu0
      %v1103 = vadd.f32 0.0, %v1102
      %v1104 = vpop.f32.mrf.mxu0
      %1105 = vmatprep.mubr.f32.mxu0 0.0
      %1106 = vmatmul.mubr.f32.gmra.mxu0 %v933
      %v1107 = vpop.f32.mrf.mxu0
      %v1108 = vadd.f32 0.0, %v1107
      %v1109 = vpop.f32.mrf.mxu0
      %1110 = vmatprep.mubr.f32.mxu0 0.0
      %1111 = vmatmul.mubr.f32.gmra.mxu0 %v936
      %v1112 = vpop.f32.mrf.mxu0
      %v1113 = vadd.f32 0.0, %v1112
      %v1114 = vpop.f32.mrf.mxu0
      %1115 = vmatprep.mubr.f32.mxu0 0.0
      %1116 = vmatmul.mubr.f32.gmra.mxu0 %v939
      %v1117 = vpop.f32.mrf.mxu0
      %v1118 = vadd.f32 0.0, %v1117
      %v1119 = vpop.f32.mrf.mxu0
      %1120 = vmatprep.mubr.f32.mxu0 0.0
      %1121 = vmatmul.mubr.f32.gmra.mxu0 %v942
      %v1122 = vpop.f32.mrf.mxu0
      %v1123 = vadd.f32 0.0, %v1122
      %v1124 = vpop.f32.mrf.mxu0
      %1125 = vmatprep.mubr.f32.mxu0 0.0
      %1126 = vmatmul.mubr.f32.gmra.mxu0 %v945
      %v1127 = vpop.f32.mrf.mxu0
      %v1128 = vadd.f32 0.0, %v1127
      %v1129 = vpop.f32.mrf.mxu0
      %1130 = vmatprep.mubr.f32.mxu0 0.0
      %1131 = vmatmul.mubr.f32.gmra.mxu0 %v948
      %v1132 = vpop.f32.mrf.mxu0
      %v1133 = vadd.f32 0.0, %v1132
      %v1134 = vpop.f32.mrf.mxu0
      %1135 = vmatprep.mubr.f32.mxu0 0.0
      %1136 = vmatmul.mubr.f32.gmra.mxu0 %v951
      %v1137 = vpop.f32.mrf.mxu0
      %v1138 = vadd.f32 0.0, %v1137
      %v1139 = vpop.f32.mrf.mxu0
      %1140 = vmatprep.mubr.f32.mxu0 0.0
      %1141 = vmatmul.mubr.f32.gmra.mxu0 %v954
      %v1142 = vpop.f32.mrf.mxu0
      %v1143 = vadd.f32 0.0, %v1142
      %v1144 = vpop.f32.mrf.mxu0
      %1145 = vmatprep.mubr.f32.mxu0 0.0
      %1146 = vmatmul.mubr.f32.gmra.mxu0 %v957
      %v1147 = vpop.f32.mrf.mxu0
      %v1148 = vadd.f32 0.0, %v1147
      %v1149 = vpop.f32.mrf.mxu0
      %1150 = vmatprep.mubr.f32.mxu0 0.0
      %1151 = vmatmul.mubr.f32.gmra.mxu0 %v960
      %v1152 = vpop.f32.mrf.mxu0
      %v1153 = vadd.f32 0.0, %v1152
      %v1154 = vpop.f32.mrf.mxu0
      %1155 = vmatprep.mubr.f32.mxu0 0.0
      %1156 = vmatmul.mubr.f32.gmra.mxu0 %v963
      %v1157 = vpop.f32.mrf.mxu0
      %v1158 = vadd.f32 0.0, %v1157
      %v1159 = vpop.f32.mrf.mxu0
      %1160 = vmatprep.mubr.f32.mxu0 0.0
      %1161 = vmatmul.mubr.f32.gmra.mxu0 %v966
      %v1162 = vpop.f32.mrf.mxu0
      %v1163 = vadd.f32 0.0, %v1162
      %v1164 = vpop.f32.mrf.mxu0
      %1165 = vmatprep.mubr.f32.mxu0 0.0
      %1166 = vmatmul.mubr.f32.gmra.mxu0 %v969
      %v1167 = vpop.f32.mrf.mxu0
      %v1168 = vadd.f32 0.0, %v1167
      %v1169 = vpop.f32.mrf.mxu0
      %1170 = vmatprep.mubr.f32.mxu0 0.0
      %1171 = vmatmul.mubr.f32.gmra.mxu0 %v972
      %v1172 = vpop.f32.mrf.mxu0
      %v1173 = vadd.f32 0.0, %v1172
      %v1174 = vpop.f32.mrf.mxu0
      %1175 = vmatprep.mubr.f32.mxu0 0.0
      %1176 = vmatmul.mubr.f32.gmra.mxu0 %v975
      %v1177 = vpop.f32.mrf.mxu0
      %v1178 = vadd.f32 0.0, %v1177
      %v1179 = vpop.f32.mrf.mxu0
      %1180 = vmatprep.mubr.f32.mxu0 0.0
      %1181 = vmatmul.mubr.f32.gmra.mxu0 %v978
      %v1182 = vpop.f32.mrf.mxu0
      %v1183 = vadd.f32 0.0, %v1182
      %v1184 = vpop.f32.mrf.mxu0
      %1185 = vmatprep.mubr.f32.mxu0 0.0
      %1186 = vmatmul.mubr.f32.gmra.mxu0 %v981
      %v1187 = vpop.f32.mrf.mxu0
      %v1188 = vadd.f32 0.0, %v1187
      %v1189 = vpop.f32.mrf.mxu0
      %1190 = vmatprep.mubr.f32.mxu0 0.0
      %1191 = vmatmul.mubr.f32.gmra.mxu0 %v984
      %v1192 = vpop.f32.mrf.mxu0
      %v1193 = vadd.f32 0.0, %v1192
      %v1194 = vpop.f32.mrf.mxu0
      %1195 = vmatprep.mubr.f32.mxu0 0.0
      %1196 = vmatmul.mubr.f32.gmra.mxu0 %v987
      %v1197 = vpop.f32.mrf.mxu0
      %v1198 = vadd.f32 0.0, %v1197
      %v1199 = vpop.f32.mrf.mxu0
      %1200 = vmatprep.mubr.f32.mxu0 0.0
      %1201 = vmatmul.mubr.f32.gmra.mxu0 %v990
      %v1202 = vpop.f32.mrf.mxu0
      %v1203 = vadd.f32 0.0, %v1202
      %v1204 = vpop.f32.mrf.mxu0
      %1205 = vmatprep.mubr.f32.mxu0 0.0
      %1206 = vmatmul.mubr.f32.gmra.mxu0 %v993
      %v1207 = vpop.f32.mrf.mxu0
      %v1208 = vadd.f32 0.0, %v1207
      %v1209 = vpop.f32.mrf.mxu0
      %1210 = vmatprep.mubr.f32.mxu0 0.0
      %1211 = vmatmul.mubr.f32.gmra.mxu0 %v996
      %v1212 = vpop.f32.mrf.mxu0
      %v1213 = vadd.f32 0.0, %v1212
      %v1214 = vpop.f32.mrf.mxu0
      %1215 = vmatprep.mubr.f32.mxu0 0.0
      %1216 = vmatmul.mubr.f32.gmra.mxu0 %v999
      %v1217 = vpop.f32.mrf.mxu0
      %v1218 = vadd.f32 0.0, %v1217
      %v1219 = vpop.f32.mrf.mxu0
      %1220 = vmatprep.mubr.f32.mxu0 0.0
      %1221 = vmatmul.mubr.f32.gmra.mxu0 %v1002
      %v1222 = vpop.f32.mrf.mxu0
      %v1223 = vadd.f32 0.0, %v1222
      %v1224 = vpop.f32.mrf.mxu0
      %1225 = vmatprep.mubr.f32.mxu0 0.0
      %1226 = vmatmul.mubr.f32.gmra.mxu0 %v1005
      %v1227 = vpop.f32.mrf.mxu0
      %v1228 = vadd.f32 0.0, %v1227
      %v1229 = vpop.f32.mrf.mxu0
      %1230 = vmatprep.mubr.f32.mxu0 0.0
      %1231 = vmatmul.mubr.f32.gmra.mxu0 %v1008
      %v1232 = vpop.f32.mrf.mxu0
      %v1233 = vadd.f32 0.0, %v1232
      %v1234 = vpop.f32.mrf.mxu0
      %1235 = vmatprep.mubr.f32.mxu0 0.0
      %1236 = vmatmul.mubr.f32.gmra.mxu0 %v1011
      %v1237 = vpop.f32.mrf.mxu0
      %v1238 = vadd.f32 0.0, %v1237
      %v1239 = vpop.f32.mrf.mxu0
      %1240 = vdwg.mxu0
      %v1241 = vld [vmem:[%s6] sm:$0x1]
      %v1243 = vlaneseq
      %v1244 = vshrl.u32 %v1243, 7
      %v1245 = vsub.s32 0, %v1244
      %v1246 = vrot.slane %v1241, %v1245
      %v1248 = vmul.f32 %v1083, %v1246
      %v1249 = vmul.f32 %v1088, %v1246
      %v1250 = vmul.f32 %v1093, %v1246
      %v1251 = vmul.f32 %v1098, %v1246
      %v1252 = vmul.f32 %v1103, %v1246
      %v1253 = vmul.f32 %v1108, %v1246
      %v1254 = vmul.f32 %v1113, %v1246
      %v1255 = vmul.f32 %v1118, %v1246
      %v1256 = vmul.f32 %v1123, %v1246
      %v1257 = vmul.f32 %v1128, %v1246
      %v1258 = vmul.f32 %v1133, %v1246
      %v1259 = vmul.f32 %v1138, %v1246
      %v1260 = vmul.f32 %v1143, %v1246
      %v1261 = vmul.f32 %v1148, %v1246
      %v1262 = vmul.f32 %v1153, %v1246
      %v1263 = vmul.f32 %v1158, %v1246
      %v1264 = vmul.f32 %v1163, %v1246
      %v1265 = vmul.f32 %v1168, %v1246
      %v1266 = vmul.f32 %v1173, %v1246
      %v1267 = vmul.f32 %v1178, %v1246
      %v1268 = vmul.f32 %v1183, %v1246
      %v1269 = vmul.f32 %v1188, %v1246
      %v1270 = vmul.f32 %v1193, %v1246
      %v1271 = vmul.f32 %v1198, %v1246
      %v1272 = vmul.f32 %v1203, %v1246
      %v1273 = vmul.f32 %v1208, %v1246
      %v1274 = vmul.f32 %v1213, %v1246
      %v1275 = vmul.f32 %v1218, %v1246
      %v1276 = vmul.f32 %v1223, %v1246
      %v1277 = vmul.f32 %v1228, %v1246
      %v1278 = vmul.f32 %v1233, %v1246
      %v1279 = vmul.f32 %v1238, %v1246
      %v1280 = vld [vmem:[%s7] sm:$0x1]
      %v1282 = vlaneseq
      %v1283 = vshrl.u32 %v1282, 7
      %v1284 = vsub.s32 0, %v1283
      %v1285 = vrot.slane %v1280, %v1284
      %v1287 = vadd.f32 %v1248, %v1285
      %v1288 = vadd.f32 %v1249, %v1285
      %v1289 = vadd.f32 %v1250, %v1285
      %v1290 = vadd.f32 %v1251, %v1285
      %v1291 = vadd.f32 %v1252, %v1285
      %v1292 = vadd.f32 %v1253, %v1285
      %v1293 = vadd.f32 %v1254, %v1285
      %v1294 = vadd.f32 %v1255, %v1285
      %v1295 = vadd.f32 %v1256, %v1285
      %v1296 = vadd.f32 %v1257, %v1285
      %v1297 = vadd.f32 %v1258, %v1285
      %v1298 = vadd.f32 %v1259, %v1285
      %v1299 = vadd.f32 %v1260, %v1285
      %v1300 = vadd.f32 %v1261, %v1285
      %v1301 = vadd.f32 %v1262, %v1285
      %v1302 = vadd.f32 %v1263, %v1285
      %v1303 = vadd.f32 %v1264, %v1285
      %v1304 = vadd.f32 %v1265, %v1285
      %v1305 = vadd.f32 %v1266, %v1285
      %v1306 = vadd.f32 %v1267, %v1285
      %v1307 = vadd.f32 %v1268, %v1285
      %v1308 = vadd.f32 %v1269, %v1285
      %v1309 = vadd.f32 %v1270, %v1285
      %v1310 = vadd.f32 %v1271, %v1285
      %v1311 = vadd.f32 %v1272, %v1285
      %v1312 = vadd.f32 %v1273, %v1285
      %v1313 = vadd.f32 %v1274, %v1285
      %v1314 = vadd.f32 %v1275, %v1285
      %v1315 = vadd.f32 %v1276, %v1285
      %v1316 = vadd.f32 %v1277, %v1285
      %v1317 = vadd.f32 %v1278, %v1285
      %v1318 = vadd.f32 %v1279, %v1285
      %v1319 = vmax.f32 %v1287, 0.0
      %v1320 = vmax.f32 %v1288, 0.0
      %v1321 = vmax.f32 %v1289, 0.0
      %v1322 = vmax.f32 %v1290, 0.0
      %v1323 = vmax.f32 %v1291, 0.0
      %v1324 = vmax.f32 %v1292, 0.0
      %v1325 = vmax.f32 %v1293, 0.0
      %v1326 = vmax.f32 %v1294, 0.0
      %v1327 = vmax.f32 %v1295, 0.0
      %v1328 = vmax.f32 %v1296, 0.0
      %v1329 = vmax.f32 %v1297, 0.0
      %v1330 = vmax.f32 %v1298, 0.0
      %v1331 = vmax.f32 %v1299, 0.0
      %v1332 = vmax.f32 %v1300, 0.0
      %v1333 = vmax.f32 %v1301, 0.0
      %v1334 = vmax.f32 %v1302, 0.0
      %v1335 = vmax.f32 %v1303, 0.0
      %v1336 = vmax.f32 %v1304, 0.0
      %v1337 = vmax.f32 %v1305, 0.0
      %v1338 = vmax.f32 %v1306, 0.0
      %v1339 = vmax.f32 %v1307, 0.0
      %v1340 = vmax.f32 %v1308, 0.0
      %v1341 = vmax.f32 %v1309, 0.0
      %v1342 = vmax.f32 %v1310, 0.0
      %v1343 = vmax.f32 %v1311, 0.0
      %v1344 = vmax.f32 %v1312, 0.0
      %v1345 = vmax.f32 %v1313, 0.0
      %v1346 = vmax.f32 %v1314, 0.0
      %v1347 = vmax.f32 %v1315, 0.0
      %v1348 = vmax.f32 %v1316, 0.0
      %v1349 = vmax.f32 %v1317, 0.0
      %v1350 = vmax.f32 %v1318, 0.0
      %vm1351 = vcmask 23552
      %1352 = vst.msk [vmem:[%s370] sm:$0xff] %vm1351, %v1319
      %1353 = vst.msk [vmem:[%s370 + $0x8] sm:$0xff] %vm1351, %v1320
      %1354 = vst.msk [vmem:[%s370 + $0x10] sm:$0xff] %vm1351, %v1321
      %1355 = vst.msk [vmem:[%s370 + $0x18] sm:$0xff] %vm1351, %v1322
      %1356 = vst.msk [vmem:[%s370 + $0x20] sm:$0xff] %vm1351, %v1323
      %1357 = vst.msk [vmem:[%s370 + $0x28] sm:$0xff] %vm1351, %v1324
      %1358 = vst.msk [vmem:[%s370 + $0x30] sm:$0xff] %vm1351, %v1325
      %1359 = vst.msk [vmem:[%s370 + $0x38] sm:$0xff] %vm1351, %v1326
      %1360 = vst.msk [vmem:[%s370 + $0x40] sm:$0xff] %vm1351, %v1327
      %1361 = vst.msk [vmem:[%s370 + $0x48] sm:$0xff] %vm1351, %v1328
      %1362 = vst.msk [vmem:[%s370 + $0x50] sm:$0xff] %vm1351, %v1329
      %1363 = vst.msk [vmem:[%s370 + $0x58] sm:$0xff] %vm1351, %v1330
      %1364 = vst.msk [vmem:[%s370 + $0x60] sm:$0xff] %vm1351, %v1331
      %1365 = vst.msk [vmem:[%s370 + $0x68] sm:$0xff] %vm1351, %v1332
      %1366 = vst.msk [vmem:[%s370 + $0x70] sm:$0xff] %vm1351, %v1333
      %1367 = vst.msk [vmem:[%s370 + $0x78] sm:$0xff] %vm1351, %v1334
      %1368 = vst.msk [vmem:[%s370 + $0x80] sm:$0xff] %vm1351, %v1335
      %1369 = vst.msk [vmem:[%s370 + $0x88] sm:$0xff] %vm1351, %v1336
      %1370 = vst.msk [vmem:[%s370 + $0x90] sm:$0xff] %vm1351, %v1337
      %1371 = vst.msk [vmem:[%s370 + $0x98] sm:$0xff] %vm1351, %v1338
      %1372 = vst.msk [vmem:[%s370 + $0xa0] sm:$0xff] %vm1351, %v1339
      %1373 = vst.msk [vmem:[%s370 + $0xa8] sm:$0xff] %vm1351, %v1340
      %1374 = vst.msk [vmem:[%s370 + $0xb0] sm:$0xff] %vm1351, %v1341
      %1375 = vst.msk [vmem:[%s370 + $0xb8] sm:$0xff] %vm1351, %v1342
      %1376 = vst.msk [vmem:[%s370 + $0xc0] sm:$0xff] %vm1351, %v1343
      %1377 = vst.msk [vmem:[%s370 + $0xc8] sm:$0xff] %vm1351, %v1344
      %1378 = vst.msk [vmem:[%s370 + $0xd0] sm:$0xff] %vm1351, %v1345
      %1379 = vst.msk [vmem:[%s370 + $0xd8] sm:$0xff] %vm1351, %v1346
      %1380 = vst.msk [vmem:[%s370 + $0xe0] sm:$0xff] %vm1351, %v1347
      %1381 = vst.msk [vmem:[%s370 + $0xe8] sm:$0xff] %vm1351, %v1348
      %1382 = vst.msk [vmem:[%s370 + $0xf0] sm:$0xff] %vm1351, %v1349
      %1383 = vst.msk [vmem:[%s370 + $0xf8] sm:$0xff] %vm1351, %v1350
      %s1384 = smul.u32 32, %s21
      %p1385 = scmp.lt.s32.totalorder %s1384, 63
      %s1386 = scalar_select %p1385, %s1384, 63
      %s1387 = smul.addr %s1386, 8
      %s1388 = scalar_lea.vmem %s8, %s1387
      %s1389 = smul.u32 32, %s21
      %p1390 = scmp.lt.s32.totalorder %s1389, 63
      %s1391 = scalar_select %p1390, %s1389, 63
      %s1392 = smul.addr %s1391, 8
      %s1393 = scalar_lea.vmem %s9, %s1392
      // Predicated region
      $region53: #{mag_block_forward.3} parent=51 // pred_check
        %p1394 = pneg %p217
      $region54: #{mag_block_forward.3} parent=51 // pred_check_branch
        %1396 = sbr.rel (%p1394) target = $region56
      $region55: #{mag_block_forward.3} parent=51 // pred_region
        %s1397 = smul.u32 32, %s21
      $region56: #{mag_block_forward.3} parent=51 // pred_fallthru
        _
      // Predicated region
      $region57: #{mag_block_forward.3} parent=51 // pred_check
        %p1398 = pneg %p243
      $region58: #{mag_block_forward.3} parent=51 // pred_check_branch
        %1400 = sbr.rel (%p1398) target = $region60
      $region59: #{mag_block_forward.3} parent=51 // pred_region
        %s1401 = smul.u32 32, %s21
      $region60: #{mag_block_forward.3} parent=51 // pred_fallthru
        _
    $region52: #{mag_block_forward.3} parent=5 // pred_fallthru
      _
    %p1402 = scmp.le.s32.totalorder 2, %s16
    // Predicated region
    $region61: #{mag_block_forward.3} parent=5 // pred_check
      %p1403 = pneg %p1402
    $region62: #{mag_block_forward.3} parent=5 // pred_check_branch
      %1405 = sbr.rel (%p1403) target = $region64
    $region63: #{mag_block_forward.3} parent=5 // pred_region
      %s1406 = ssub.s32 %s16, 2
      // Predicated region
      $region65: #{mag_block_forward.3} parent=63 // pred_check
        %p1407 = pneg %p223
      $region66: #{mag_block_forward.3} parent=63 // pred_check_branch
        %1409 = sbr.rel (%p1407) target = $region68
      $region67: #{mag_block_forward.3} parent=63 // pred_region
        %s1410 = smul.u32 32, %s22
        %p1411 = scmp.lt.s32.totalorder %s1410, 63
        %s1412 = scalar_select %p1411, %s1410, 63
        %s1413 = smul.addr %s1412, 8
        %s1414 = scalar_lea.vmem %s8, %s1413
      $region68: #{mag_block_forward.3} parent=63 // pred_fallthru
        _
      // Predicated region
      $region69: #{mag_block_forward.3} parent=63 // pred_check
        %p1415 = pneg %p249
      $region70: #{mag_block_forward.3} parent=63 // pred_check_branch
        %1417 = sbr.rel (%p1415) target = $region72
      $region71: #{mag_block_forward.3} parent=63 // pred_region
        %s1418 = smul.u32 32, %s22
        %p1419 = scmp.lt.s32.totalorder %s1418, 63
        %s1420 = scalar_select %p1419, %s1418, 63
        %s1421 = smul.addr %s1420, 8
        %s1422 = scalar_lea.vmem %s9, %s1421
      $region72: #{mag_block_forward.3} parent=63 // pred_fallthru
        _
    $region64: #{mag_block_forward.3} parent=5 // pred_fallthru
      _
  $region6: #{mag_block_forward.3} parent=0 // loop_footer
    %s20 = sadd.s32 1, %s16
  $region7: #{mag_block_forward.3} parent=0 // loop_footer_branch
    %15 = sbr.rel target = $region3
  $region8: #{mag_block_forward.3} parent=0 // loop_exit
    _

// kernel: mag_block_forward.4
$region0: #{mag_block_forward.4}
  #allocation0 [shape = 'u32[]', space=smem, size = 0x4, offset = 0x4, fixed_abs, tag = 'smem constant byte address 0x4 - core index']
  #allocation1 [shape = 'u32[144,128]{1,0:T(1,128)}', space=vmem, size = 0x12000, scoped, tag = 'internal scratch']
  %s0 = inlined_call_operand.vmem [shape: f32[512,33], index: 0, kind: input, shape index: {}]
  %s1 = inlined_call_operand.vmem [shape: f32[512,108], index: 1, kind: input, shape index: {}]
  %s2 = inlined_call_operand.vmem [shape: f32[33,24], index: 2, kind: input, shape index: {}]
  %s3 = inlined_call_operand.vmem [shape: f32[108,24], index: 3, kind: input, shape index: {}]
  %s4 = inlined_call_operand.vmem [shape: f32[1,24], index: 4, kind: input, shape index: {}]
  %s5 = inlined_call_operand.vmem [shape: f32[1,24], index: 5, kind: input, shape index: {}]
  %s6 = inlined_call_operand.vmem [shape: f32[1,24], index: 6, kind: input, shape index: {}]
  %s7 = inlined_call_operand.vmem [shape: f32[1,24], index: 7, kind: input, shape index: {}]
  %s8 = inlined_call_operand.vmem [shape: f32[512,24], index: 8, kind: output, shape index: {}]
  %s9 = sld [smem:[#allocation0]]
  $region65: #{mag_block_forward.4} parent=0
    _
  %s11 = ssub.s32 1, %s9
  %s12 = scalar_select 0, %s11, %s9
  loop: start=0, step=1, limit=4
  $region2: #{mag_block_forward.4} parent=0 // loop_pre_header
    _
  $region3: #{mag_block_forward.4} parent=0 // loop_header
    %s14 = sphi 0, %s18
    %p15 = scmp.ge.s32.totalorder %s14, 4
    %s24 = sphi 0, %s26
    %s27 = sphi 0, %s24
    %s28 = sphi 0, %s27
    %s44 = sphi 0, %s28
    %s50 = sphi 0, %s52
    %s53 = sphi 0, %s50
    %s54 = sphi 0, %s53
    %s70 = sphi 0, %s54
    %s74 = sphi 0, %s74
    %s76 = sphi 0, %s74
    %s77 = sphi 0, %s76
    %s91 = sphi 0, %s77
    %s95 = sphi 0, %s95
    %s97 = sphi 0, %s95
    %s98 = sphi 0, %s97
    %s112 = sphi 0, %s98
    %s116 = sphi 0, %s116
    %s118 = sphi 0, %s116
    %s119 = sphi 0, %s118
    %s133 = sphi 0, %s119
    %s137 = sphi 0, %s137
    %s139 = sphi 0, %s137
    %s140 = sphi 0, %s139
    %s154 = sphi 0, %s140
    %s158 = sphi 0, %s158
    %s160 = sphi 0, %s158
    %s161 = sphi 0, %s160
    %s175 = sphi 0, %s161
    %s179 = sphi 0, %s179
    %s181 = sphi 0, %s179
    %s182 = sphi 0, %s181
    %s196 = sphi 0, %s182
    %s202 = sphi 0, %s204
    %s205 = sphi 0, %s202
    %s206 = sphi 0, %s205
    %s222 = sphi 0, %s206
  $region4: #{mag_block_forward.4} parent=0 // loop_header_branch
    %17 = sbr.rel (%p15) target = $region8
  $region5: #{mag_block_forward.4} parent=0 // loop_body
    %s19 = ssub.s32 %s14, 1
    %s20 = ssub.s32 %s14, 2
    %s21 = sadd.s32 %s14, 1
    %s22 = ssub.s32 %s14, %s21
    %p23 = scmp.eq.s32.totalorder %s22, 0
    %s25 = sadd.s32 %s24, 1
    %s26 = scalar_select %p23, %s24, %s25
    %p29 = pneg %p23
    %p30 = scmp.eq.s32.totalorder %s14, 1
    %p31 = por %p29, %p30
    %p32 = scmp.ne.s32.totalorder %s24, %s27
    %p33 = scmp.eq.s32.totalorder %s14, 0
    %p34 = por %p32, %p33
    %p35 = scmp.ne.s32.totalorder %s24, %s27
    %p36 = scmp.eq.s32.totalorder %s19, 1
    %p37 = por %p35, %p36
    %p38 = scmp.ne.s32.totalorder %s27, %s28
    %p39 = scmp.eq.s32.totalorder %s19, 0
    %p40 = por %p38, %p39
    %p41 = scmp.ne.s32.totalorder %s27, %s28
    %p42 = scmp.eq.s32.totalorder %s20, 1
    %p43 = por %p41, %p42
    %p45 = scmp.ne.s32.totalorder %s28, %s44
    %p46 = scmp.eq.s32.totalorder %s20, 0
    %p47 = por %p45, %p46
    %s48 = ssub.s32 %s14, %s21
    %p49 = scmp.eq.s32.totalorder %s48, 0
    %s51 = sadd.s32 %s50, 1
    %s52 = scalar_select %p49, %s50, %s51
    %p55 = pneg %p49
    %p56 = scmp.eq.s32.totalorder %s14, 1
    %p57 = por %p55, %p56
    %p58 = scmp.ne.s32.totalorder %s50, %s53
    %p59 = scmp.eq.s32.totalorder %s14, 0
    %p60 = por %p58, %p59
    %p61 = scmp.ne.s32.totalorder %s50, %s53
    %p62 = scmp.eq.s32.totalorder %s19, 1
    %p63 = por %p61, %p62
    %p64 = scmp.ne.s32.totalorder %s53, %s54
    %p65 = scmp.eq.s32.totalorder %s19, 0
    %p66 = por %p64, %p65
    %p67 = scmp.ne.s32.totalorder %s53, %s54
    %p68 = scmp.eq.s32.totalorder %s20, 1
    %p69 = por %p67, %p68
    %p71 = scmp.ne.s32.totalorder %s54, %s70
    %p72 = scmp.eq.s32.totalorder %s20, 0
    %p73 = por %p71, %p72
    %s75 = sadd.s32 %s74, 1
    %p78 = scmp.eq.s32.totalorder %s14, 1
    %p79 = scmp.ne.s32.totalorder %s74, %s76
    %p80 = scmp.eq.s32.totalorder %s14, 0
    %p81 = por %p79, %p80
    %p82 = scmp.ne.s32.totalorder %s74, %s76
    %p83 = scmp.eq.s32.totalorder %s19, 1
    %p84 = por %p82, %p83
    %p85 = scmp.ne.s32.totalorder %s76, %s77
    %p86 = scmp.eq.s32.totalorder %s19, 0
    %p87 = por %p85, %p86
    %p88 = scmp.ne.s32.totalorder %s76, %s77
    %p89 = scmp.eq.s32.totalorder %s20, 1
    %p90 = por %p88, %p89
    %p92 = scmp.ne.s32.totalorder %s77, %s91
    %p93 = scmp.eq.s32.totalorder %s20, 0
    %p94 = por %p92, %p93
    %s96 = sadd.s32 %s95, 1
    %p99 = scmp.eq.s32.totalorder %s14, 1
    %p100 = scmp.ne.s32.totalorder %s95, %s97
    %p101 = scmp.eq.s32.totalorder %s14, 0
    %p102 = por %p100, %p101
    %p103 = scmp.ne.s32.totalorder %s95, %s97
    %p104 = scmp.eq.s32.totalorder %s19, 1
    %p105 = por %p103, %p104
    %p106 = scmp.ne.s32.totalorder %s97, %s98
    %p107 = scmp.eq.s32.totalorder %s19, 0
    %p108 = por %p106, %p107
    %p109 = scmp.ne.s32.totalorder %s97, %s98
    %p110 = scmp.eq.s32.totalorder %s20, 1
    %p111 = por %p109, %p110
    %p113 = scmp.ne.s32.totalorder %s98, %s112
    %p114 = scmp.eq.s32.totalorder %s20, 0
    %p115 = por %p113, %p114
    %s117 = sadd.s32 %s116, 1
    %p120 = scmp.eq.s32.totalorder %s14, 1
    %p121 = scmp.ne.s32.totalorder %s116, %s118
    %p122 = scmp.eq.s32.totalorder %s14, 0
    %p123 = por %p121, %p122
    %p124 = scmp.ne.s32.totalorder %s116, %s118
    %p125 = scmp.eq.s32.totalorder %s19, 1
    %p126 = por %p124, %p125
    %p127 = scmp.ne.s32.totalorder %s118, %s119
    %p128 = scmp.eq.s32.totalorder %s19, 0
    %p129 = por %p127, %p128
    %p130 = scmp.ne.s32.totalorder %s118, %s119
    %p131 = scmp.eq.s32.totalorder %s20, 1
    %p132 = por %p130, %p131
    %p134 = scmp.ne.s32.totalorder %s119, %s133
    %p135 = scmp.eq.s32.totalorder %s20, 0
    %p136 = por %p134, %p135
    %s138 = sadd.s32 %s137, 1
    %p141 = scmp.eq.s32.totalorder %s14, 1
    %p142 = scmp.ne.s32.totalorder %s137, %s139
    %p143 = scmp.eq.s32.totalorder %s14, 0
    %p144 = por %p142, %p143
    %p145 = scmp.ne.s32.totalorder %s137, %s139
    %p146 = scmp.eq.s32.totalorder %s19, 1
    %p147 = por %p145, %p146
    %p148 = scmp.ne.s32.totalorder %s139, %s140
    %p149 = scmp.eq.s32.totalorder %s19, 0
    %p150 = por %p148, %p149
    %p151 = scmp.ne.s32.totalorder %s139, %s140
    %p152 = scmp.eq.s32.totalorder %s20, 1
    %p153 = por %p151, %p152
    %p155 = scmp.ne.s32.totalorder %s140, %s154
    %p156 = scmp.eq.s32.totalorder %s20, 0
    %p157 = por %p155, %p156
    %s159 = sadd.s32 %s158, 1
    %p162 = scmp.eq.s32.totalorder %s14, 1
    %p163 = scmp.ne.s32.totalorder %s158, %s160
    %p164 = scmp.eq.s32.totalorder %s14, 0
    %p165 = por %p163, %p164
    %p166 = scmp.ne.s32.totalorder %s158, %s160
    %p167 = scmp.eq.s32.totalorder %s19, 1
    %p168 = por %p166, %p167
    %p169 = scmp.ne.s32.totalorder %s160, %s161
    %p170 = scmp.eq.s32.totalorder %s19, 0
    %p171 = por %p169, %p170
    %p172 = scmp.ne.s32.totalorder %s160, %s161
    %p173 = scmp.eq.s32.totalorder %s20, 1
    %p174 = por %p172, %p173
    %p176 = scmp.ne.s32.totalorder %s161, %s175
    %p177 = scmp.eq.s32.totalorder %s20, 0
    %p178 = por %p176, %p177
    %s180 = sadd.s32 %s179, 1
    %p183 = scmp.eq.s32.totalorder %s14, 1
    %p184 = scmp.ne.s32.totalorder %s179, %s181
    %p185 = scmp.eq.s32.totalorder %s14, 0
    %p186 = por %p184, %p185
    %p187 = scmp.ne.s32.totalorder %s179, %s181
    %p188 = scmp.eq.s32.totalorder %s19, 1
    %p189 = por %p187, %p188
    %p190 = scmp.ne.s32.totalorder %s181, %s182
    %p191 = scmp.eq.s32.totalorder %s19, 0
    %p192 = por %p190, %p191
    %p193 = scmp.ne.s32.totalorder %s181, %s182
    %p194 = scmp.eq.s32.totalorder %s20, 1
    %p195 = por %p193, %p194
    %p197 = scmp.ne.s32.totalorder %s182, %s196
    %p198 = scmp.eq.s32.totalorder %s20, 0
    %p199 = por %p197, %p198
    %s200 = ssub.s32 %s14, %s21
    %p201 = scmp.eq.s32.totalorder %s200, 0
    %s203 = sadd.s32 %s202, 1
    %s204 = scalar_select %p201, %s202, %s203
    %p207 = pneg %p201
    %p208 = scmp.eq.s32.totalorder %s14, 1
    %p209 = por %p207, %p208
    %p210 = scmp.ne.s32.totalorder %s202, %s205
    %p211 = scmp.eq.s32.totalorder %s14, 0
    %p212 = por %p210, %p211
    %p213 = scmp.ne.s32.totalorder %s202, %s205
    %p214 = scmp.eq.s32.totalorder %s19, 1
    %p215 = por %p213, %p214
    %p216 = scmp.ne.s32.totalorder %s205, %s206
    %p217 = scmp.eq.s32.totalorder %s19, 0
    %p218 = por %p216, %p217
    %p219 = scmp.ne.s32.totalorder %s205, %s206
    %p220 = scmp.eq.s32.totalorder %s20, 1
    %p221 = por %p219, %p220
    %p223 = scmp.ne.s32.totalorder %s206, %s222
    %p224 = scmp.eq.s32.totalorder %s20, 0
    %p225 = por %p223, %p224
    %p226 = scmp.le.s32.totalorder 1, %s14
    %p227 = scmp.lt.s32.totalorder %s14, 3
    %p228 = pnand %p226, %p227
    %p229 = pneg %p228
    // Predicated region
    $region9: #{mag_block_forward.4} parent=5 // pred_check
      _
    $region10: #{mag_block_forward.4} parent=5 // pred_check_branch
      %231 = sbr.rel (%p228) target = $region12
    $region11: #{mag_block_forward.4} parent=5 // pred_region
      %s232 = ssub.s32 %s14, 1
      // Predicated region
      $region13: #{mag_block_forward.4} parent=11 // pred_check
        %p233 = pneg %p87
      $region14: #{mag_block_forward.4} parent=11 // pred_check_branch
        %235 = sbr.rel (%p233) target = $region16
      $region15: #{mag_block_forward.4} parent=11 // pred_region
        _
      $region16: #{mag_block_forward.4} parent=11 // pred_fallthru
        _
      // Predicated region
      $region17: #{mag_block_forward.4} parent=11 // pred_check
        %p236 = pneg %p108
      $region18: #{mag_block_forward.4} parent=11 // pred_check_branch
        %238 = sbr.rel (%p236) target = $region20
      $region19: #{mag_block_forward.4} parent=11 // pred_region
        _
      $region20: #{mag_block_forward.4} parent=11 // pred_fallthru
        _
      // Predicated region
      $region21: #{mag_block_forward.4} parent=11 // pred_check
        %p239 = pneg %p129
      $region22: #{mag_block_forward.4} parent=11 // pred_check_branch
        %241 = sbr.rel (%p239) target = $region24
      $region23: #{mag_block_forward.4} parent=11 // pred_region
        _
      $region24: #{mag_block_forward.4} parent=11 // pred_fallthru
        _
      // Predicated region
      $region25: #{mag_block_forward.4} parent=11 // pred_check
        %p242 = pneg %p150
      $region26: #{mag_block_forward.4} parent=11 // pred_check_branch
        %244 = sbr.rel (%p242) target = $region28
      $region27: #{mag_block_forward.4} parent=11 // pred_region
        _
      $region28: #{mag_block_forward.4} parent=11 // pred_fallthru
        _
      // Predicated region
      $region29: #{mag_block_forward.4} parent=11 // pred_check
        %p245 = pneg %p171
      $region30: #{mag_block_forward.4} parent=11 // pred_check_branch
        %247 = sbr.rel (%p245) target = $region32
      $region31: #{mag_block_forward.4} parent=11 // pred_region
        _
      $region32: #{mag_block_forward.4} parent=11 // pred_fallthru
        _
      // Predicated region
      $region33: #{mag_block_forward.4} parent=11 // pred_check
        %p248 = pneg %p192
      $region34: #{mag_block_forward.4} parent=11 // pred_check_branch
        %250 = sbr.rel (%p248) target = $region36
      $region35: #{mag_block_forward.4} parent=11 // pred_region
        _
      $region36: #{mag_block_forward.4} parent=11 // pred_fallthru
        _
    $region12: #{mag_block_forward.4} parent=5 // pred_fallthru
      _
    %p251 = scmp.lt.s32.totalorder %s14, 2
    // Predicated region
    $region37: #{mag_block_forward.4} parent=5 // pred_check
      %p252 = pneg %p251
    $region38: #{mag_block_forward.4} parent=5 // pred_check_branch
      %254 = sbr.rel (%p252) target = $region40
    $region39: #{mag_block_forward.4} parent=5 // pred_region
      // Predicated region
      $region41: #{mag_block_forward.4} parent=39 // pred_check
        %p255 = pneg %p34
      $region42: #{mag_block_forward.4} parent=39 // pred_check_branch
        %257 = sbr.rel (%p255) target = $region44
      $region43: #{mag_block_forward.4} parent=39 // pred_region
        %s258 = smul.u32 32, %s14
        %p259 = scmp.lt.s32.totalorder %s258, 63
        %s260 = scalar_select %p259, %s258, 63
        %s261 = smul.addr %s260, 8
        %s262 = scalar_lea.vmem %s0, %s261
        %s263 = smul.u32 32, %s14
      $region44: #{mag_block_forward.4} parent=39 // pred_fallthru
        _
      // Predicated region
      $region45: #{mag_block_forward.4} parent=39 // pred_check
        %p264 = pneg %p60
      $region46: #{mag_block_forward.4} parent=39 // pred_check_branch
        %266 = sbr.rel (%p264) target = $region48
      $region47: #{mag_block_forward.4} parent=39 // pred_region
        %s267 = smul.u32 32, %s14
        %p268 = scmp.lt.s32.totalorder %s267, 63
        %s269 = scalar_select %p268, %s267, 63
        %s270 = smul.addr %s269, 8
        %s271 = scalar_lea.vmem %s1, %s270
        %s272 = smul.u32 32, %s14
      $region48: #{mag_block_forward.4} parent=39 // pred_fallthru
        _
    $region40: #{mag_block_forward.4} parent=5 // pred_fallthru
      _
    %p273 = scmp.le.s32.totalorder 1, %s14
    %p274 = scmp.lt.s32.totalorder %s14, 3
    %p275 = pnand %p273, %p274
    %p276 = pneg %p275
    // Predicated region
    $region49: #{mag_block_forward.4} parent=5 // pred_check
      _
    $region50: #{mag_block_forward.4} parent=5 // pred_check_branch
      %278 = sbr.rel (%p275) target = $region52
    $region51: #{mag_block_forward.4} parent=5 // pred_region
      %s279 = ssub.s32 %s14, 1
      %s280 = smul.u32 32, %s19
      %p281 = scmp.lt.s32.totalorder %s280, 63
      %s282 = scalar_select %p281, %s280, 63
      %s283 = smul.addr %s282, 8
      %s284 = scalar_lea.vmem %s0, %s283
      %p285 = pneg %p40
      %p286 = pneg %p37
      %s287 = smul.u32 32, %s19
      %p288 = scmp.lt.s32.totalorder %s287, 63
      %s289 = scalar_select %p288, %s287, 63
      %s290 = smul.addr %s289, 8
      %s291 = scalar_lea.vmem %s1, %s290
      %p292 = pneg %p66
      %p293 = pneg %p63
      %p294 = pneg %p87
      %p295 = pneg %p84
      %p296 = pneg %p108
      %p297 = pneg %p105
      %p298 = pneg %p129
      %p299 = pneg %p126
      %p300 = pneg %p150
      %p301 = pneg %p147
      %p302 = pneg %p171
      %p303 = pneg %p168
      %p304 = pneg %p192
      %p305 = pneg %p189
      %p306 = pneg %p218
      %p307 = pneg %p215
      %s308 = smul.u32 32, %s19
      %p309 = scmp.lt.s32.totalorder %s308, 63
      %s310 = scalar_select %p309, %s308, 63
      %s311 = smul.addr %s310, 8
      %s312 = scalar_lea.vmem %s8, %s311
      %s313 = smul.u32 32, %s19
      %p314 = scmp.lt.s32.totalorder %s313, 63
      %s315 = scalar_select %p314, %s313, 63
      %s316 = smul.addr %s315, 8
      %s317 = scalar_lea.vmem %s0, %s316
      %s318 = smul.u32 32, %s19
      %s319 = smul.u32 32, %s19
      %p320 = scmp.lt.s32.totalorder %s319, 63
      %s321 = scalar_select %p320, %s319, 63
      %s322 = smul.addr %s321, 8
      %s323 = scalar_lea.vmem %s1, %s322
      %s324 = smul.u32 32, %s19
      %s325 = smul.u32 32, %s19
      %p326 = scmp.lt.s32.totalorder %s325, 63
      %s327 = scalar_select %p326, %s325, 63
      %s328 = smul.addr %s327, 8
      %s329 = scalar_lea.vmem %s8, %s328
      %s330 = smul.u32 32, %s19
      %v331 = vld [vmem:[%s317] sm:$0xff]
      %v332 = vld [vmem:[%s317 + $0x8] sm:$0xff]
      %v333 = vld [vmem:[%s317 + $0x10] sm:$0xff]
      %v334 = vld [vmem:[%s317 + $0x18] sm:$0xff]
      %v335 = vld [vmem:[%s317 + $0x20] sm:$0xff]
      %v336 = vld [vmem:[%s317 + $0x28] sm:$0xff]
      %v337 = vld [vmem:[%s317 + $0x30] sm:$0xff]
      %v338 = vld [vmem:[%s317 + $0x38] sm:$0xff]
      %v339 = vld [vmem:[%s317 + $0x40] sm:$0xff]
      %v340 = vld [vmem:[%s317 + $0x48] sm:$0xff]
      %v341 = vld [vmem:[%s317 + $0x50] sm:$0xff]
      %v342 = vld [vmem:[%s317 + $0x58] sm:$0xff]
      %v343 = vld [vmem:[%s317 + $0x60] sm:$0xff]
      %v344 = vld [vmem:[%s317 + $0x68] sm:$0xff]
      %v345 = vld [vmem:[%s317 + $0x70] sm:$0xff]
      %v346 = vld [vmem:[%s317 + $0x78] sm:$0xff]
      %v347 = vld [vmem:[%s317 + $0x80] sm:$0xff]
      %v348 = vld [vmem:[%s317 + $0x88] sm:$0xff]
      %v349 = vld [vmem:[%s317 + $0x90] sm:$0xff]
      %v350 = vld [vmem:[%s317 + $0x98] sm:$0xff]
      %v351 = vld [vmem:[%s317 + $0xa0] sm:$0xff]
      %v352 = vld [vmem:[%s317 + $0xa8] sm:$0xff]
      %v353 = vld [vmem:[%s317 + $0xb0] sm:$0xff]
      %v354 = vld [vmem:[%s317 + $0xb8] sm:$0xff]
      %v355 = vld [vmem:[%s317 + $0xc0] sm:$0xff]
      %v356 = vld [vmem:[%s317 + $0xc8] sm:$0xff]
      %v357 = vld [vmem:[%s317 + $0xd0] sm:$0xff]
      %v358 = vld [vmem:[%s317 + $0xd8] sm:$0xff]
      %v359 = vld [vmem:[%s317 + $0xe0] sm:$0xff]
      %v360 = vld [vmem:[%s317 + $0xe8] sm:$0xff]
      %v361 = vld [vmem:[%s317 + $0xf0] sm:$0xff]
      %v362 = vld [vmem:[%s317 + $0xf8] sm:$0xff]
      %v363 = vld [vmem:[%s2] sm:$0xff]
      %v364 = vld [vmem:[%s2 + $0x8] sm:$0xff]
      %v365 = vld [vmem:[%s2 + $0x10] sm:$0xff]
      %v366 = vld [vmem:[%s2 + $0x18] sm:$0xff]
      %v367 = vld [vmem:[%s2 + $0x20] sm:$0x1]
      %vm368 = vcmask 269312
      %v370 = vsel %vm368, %v331, 0
      %v373 = vsel %vm368, %v332, 0
      %v376 = vsel %vm368, %v333, 0
      %v379 = vsel %vm368, %v334, 0
      %v382 = vsel %vm368, %v335, 0
      %v385 = vsel %vm368, %v336, 0
      %v388 = vsel %vm368, %v337, 0
      %v391 = vsel %vm368, %v338, 0
      %v394 = vsel %vm368, %v339, 0
      %v397 = vsel %vm368, %v340, 0
      %v400 = vsel %vm368, %v341, 0
      %v403 = vsel %vm368, %v342, 0
      %v406 = vsel %vm368, %v343, 0
      %v409 = vsel %vm368, %v344, 0
      %v412 = vsel %vm368, %v345, 0
      %v415 = vsel %vm368, %v346, 0
      %v418 = vsel %vm368, %v347, 0
      %v421 = vsel %vm368, %v348, 0
      %v424 = vsel %vm368, %v349, 0
      %v427 = vsel %vm368, %v350, 0
      %v430 = vsel %vm368, %v351, 0
      %v433 = vsel %vm368, %v352, 0
      %v436 = vsel %vm368, %v353, 0
      %v439 = vsel %vm368, %v354, 0
      %v442 = vsel %vm368, %v355, 0
      %v445 = vsel %vm368, %v356, 0
      %v448 = vsel %vm368, %v357, 0
      %v451 = vsel %vm368, %v358, 0
      %v454 = vsel %vm368, %v359, 0
      %v457 = vsel %vm368, %v360, 0
      %v460 = vsel %vm368, %v361, 0
      %v463 = vsel %vm368, %v362, 0
      %vm465 = vcmask 1040384
      %v467 = vsel %vm465, %v367, 0
      %469 = vmatprep.subr.mxu0 0.0
      %470 = vmatpush1.msra.mxu0 0.0
      %471 = vmatprep.subr.mxu0 0.0
      %472 = vmatpush1.msra.mxu0 0.0
      %473 = vmatprep.subr.mxu0 0.0
      %474 = vmatpush1.msra.mxu0 0.0
      %475 = vmatprep.subr.mxu0 0.0
      %476 = vmatpush1.msra.mxu0 0.0
      %477 = vmatprep.subr.mxu0 0.0
      %478 = vmatpush1.msra.mxu0 0.0
      %479 = vmatprep.subr.mxu0 0.0
      %480 = vmatpush1.msra.mxu0 0.0
      %481 = vmatprep.subr.mxu0 0.0
      %482 = vmatpush1.msra.mxu0 0.0
      %483 = vmatprep.subr.mxu0 0.0
      %484 = vmatpush1.msra.mxu0 0.0
      %485 = vmatprep.subr.mxu0 0.0
      %486 = vmatpush1.msra.mxu0 0.0
      %487 = vmatprep.subr.mxu0 0.0
      %488 = vmatpush1.msra.mxu0 0.0
      %489 = vmatprep.subr.mxu0 0.0
      %490 = vmatpush1.msra.mxu0 0.0
      %491 = vmatprep.subr.mxu0 0.0
      %492 = vmatpush1.msra.mxu0 %v467
      %493 = vmatprep.subr.mxu0 0.0
      %494 = vmatpush1.msra.mxu0 %v366
      %495 = vmatprep.subr.mxu0 0.0
      %496 = vmatpush1.msra.mxu0 %v365
      %497 = vmatprep.subr.mxu0 0.0
      %498 = vmatpush1.msra.mxu0 %v364
      %499 = vmatprep.subr.mxu0 0.0
      %500 = vmatpush1.msra.mxu0 %v363
      %501 = vmatprep.subr.mxu0 0.0
      %502 = vmatpush2.msra.mxu0 0.0
      %503 = vmatprep.subr.mxu0 0.0
      %504 = vmatpush2.msra.mxu0 0.0
      %505 = vmatprep.subr.mxu0 0.0
      %506 = vmatpush2.msra.mxu0 0.0
      %507 = vmatprep.subr.mxu0 0.0
      %508 = vmatpush2.msra.mxu0 0.0
      %509 = vmatprep.subr.mxu0 0.0
      %510 = vmatpush2.msra.mxu0 0.0
      %511 = vmatprep.subr.mxu0 0.0
      %512 = vmatpush2.msra.mxu0 0.0
      %513 = vmatprep.subr.mxu0 0.0
      %514 = vmatpush2.msra.mxu0 0.0
      %515 = vmatprep.subr.mxu0 0.0
      %516 = vmatpush2.msra.mxu0 0.0
      %517 = vmatprep.subr.mxu0 0.0
      %518 = vmatpush2.msra.mxu0 0.0
      %519 = vmatprep.subr.mxu0 0.0
      %520 = vmatpush2.msra.mxu0 0.0
      %521 = vmatprep.subr.mxu0 0.0
      %522 = vmatpush2.msra.mxu0 0.0
      %523 = vmatprep.subr.mxu0 0.0
      %524 = vmatpush2.msra.mxu0 0.0
      %525 = vmatprep.subr.mxu0 0.0
      %526 = vmatpush2.msra.mxu0 0.0
      %527 = vmatprep.subr.mxu0 0.0
      %528 = vmatpush2.msra.mxu0 0.0
      %529 = vmatprep.subr.mxu0 0.0
      %530 = vmatpush2.msra.mxu0 0.0
      %531 = vmatprep.subr.mxu0 0.0
      %532 = vmatpush2.msra.mxu0 0.0
      %533 = vmatprep.mubr.f32.mxu0 0.0
      %534 = vmatmul.mubr.f32.gmra.mxu0 %v370
      %v535 = vpop.f32.mrf.mxu0
      %v536 = vadd.f32 0.0, %v535
      %v537 = vpop.f32.mrf.mxu0
      %538 = vmatprep.mubr.f32.mxu0 0.0
      %539 = vmatmul.mubr.f32.gmra.mxu0 %v373
      %v540 = vpop.f32.mrf.mxu0
      %v541 = vadd.f32 0.0, %v540
      %v542 = vpop.f32.mrf.mxu0
      %543 = vmatprep.mubr.f32.mxu0 0.0
      %544 = vmatmul.mubr.f32.gmra.mxu0 %v376
      %v545 = vpop.f32.mrf.mxu0
      %v546 = vadd.f32 0.0, %v545
      %v547 = vpop.f32.mrf.mxu0
      %548 = vmatprep.mubr.f32.mxu0 0.0
      %549 = vmatmul.mubr.f32.gmra.mxu0 %v379
      %v550 = vpop.f32.mrf.mxu0
      %v551 = vadd.f32 0.0, %v550
      %v552 = vpop.f32.mrf.mxu0
      %553 = vmatprep.mubr.f32.mxu0 0.0
      %554 = vmatmul.mubr.f32.gmra.mxu0 %v382
      %v555 = vpop.f32.mrf.mxu0
      %v556 = vadd.f32 0.0, %v555
      %v557 = vpop.f32.mrf.mxu0
      %558 = vmatprep.mubr.f32.mxu0 0.0
      %559 = vmatmul.mubr.f32.gmra.mxu0 %v385
      %v560 = vpop.f32.mrf.mxu0
      %v561 = vadd.f32 0.0, %v560
      %v562 = vpop.f32.mrf.mxu0
      %563 = vmatprep.mubr.f32.mxu0 0.0
      %564 = vmatmul.mubr.f32.gmra.mxu0 %v388
      %v565 = vpop.f32.mrf.mxu0
      %v566 = vadd.f32 0.0, %v565
      %v567 = vpop.f32.mrf.mxu0
      %568 = vmatprep.mubr.f32.mxu0 0.0
      %569 = vmatmul.mubr.f32.gmra.mxu0 %v391
      %v570 = vpop.f32.mrf.mxu0
      %v571 = vadd.f32 0.0, %v570
      %v572 = vpop.f32.mrf.mxu0
      %573 = vmatprep.mubr.f32.mxu0 0.0
      %574 = vmatmul.mubr.f32.gmra.mxu0 %v394
      %v575 = vpop.f32.mrf.mxu0
      %v576 = vadd.f32 0.0, %v575
      %v577 = vpop.f32.mrf.mxu0
      %578 = vmatprep.mubr.f32.mxu0 0.0
      %579 = vmatmul.mubr.f32.gmra.mxu0 %v397
      %v580 = vpop.f32.mrf.mxu0
      %v581 = vadd.f32 0.0, %v580
      %v582 = vpop.f32.mrf.mxu0
      %583 = vmatprep.mubr.f32.mxu0 0.0
      %584 = vmatmul.mubr.f32.gmra.mxu0 %v400
      %v585 = vpop.f32.mrf.mxu0
      %v586 = vadd.f32 0.0, %v585
      %v587 = vpop.f32.mrf.mxu0
      %588 = vmatprep.mubr.f32.mxu0 0.0
      %589 = vmatmul.mubr.f32.gmra.mxu0 %v403
      %v590 = vpop.f32.mrf.mxu0
      %v591 = vadd.f32 0.0, %v590
      %v592 = vpop.f32.mrf.mxu0
      %593 = vmatprep.mubr.f32.mxu0 0.0
      %594 = vmatmul.mubr.f32.gmra.mxu0 %v406
      %v595 = vpop.f32.mrf.mxu0
      %v596 = vadd.f32 0.0, %v595
      %v597 = vpop.f32.mrf.mxu0
      %598 = vmatprep.mubr.f32.mxu0 0.0
      %599 = vmatmul.mubr.f32.gmra.mxu0 %v409
      %v600 = vpop.f32.mrf.mxu0
      %v601 = vadd.f32 0.0, %v600
      %v602 = vpop.f32.mrf.mxu0
      %603 = vmatprep.mubr.f32.mxu0 0.0
      %604 = vmatmul.mubr.f32.gmra.mxu0 %v412
      %v605 = vpop.f32.mrf.mxu0
      %v606 = vadd.f32 0.0, %v605
      %v607 = vpop.f32.mrf.mxu0
      %608 = vmatprep.mubr.f32.mxu0 0.0
      %609 = vmatmul.mubr.f32.gmra.mxu0 %v415
      %v610 = vpop.f32.mrf.mxu0
      %v611 = vadd.f32 0.0, %v610
      %v612 = vpop.f32.mrf.mxu0
      %613 = vmatprep.mubr.f32.mxu0 0.0
      %614 = vmatmul.mubr.f32.gmra.mxu0 %v418
      %v615 = vpop.f32.mrf.mxu0
      %v616 = vadd.f32 0.0, %v615
      %v617 = vpop.f32.mrf.mxu0
      %618 = vmatprep.mubr.f32.mxu0 0.0
      %619 = vmatmul.mubr.f32.gmra.mxu0 %v421
      %v620 = vpop.f32.mrf.mxu0
      %v621 = vadd.f32 0.0, %v620
      %v622 = vpop.f32.mrf.mxu0
      %623 = vmatprep.mubr.f32.mxu0 0.0
      %624 = vmatmul.mubr.f32.gmra.mxu0 %v424
      %v625 = vpop.f32.mrf.mxu0
      %v626 = vadd.f32 0.0, %v625
      %v627 = vpop.f32.mrf.mxu0
      %628 = vmatprep.mubr.f32.mxu0 0.0
      %629 = vmatmul.mubr.f32.gmra.mxu0 %v427
      %v630 = vpop.f32.mrf.mxu0
      %v631 = vadd.f32 0.0, %v630
      %v632 = vpop.f32.mrf.mxu0
      %633 = vmatprep.mubr.f32.mxu0 0.0
      %634 = vmatmul.mubr.f32.gmra.mxu0 %v430
      %v635 = vpop.f32.mrf.mxu0
      %v636 = vadd.f32 0.0, %v635
      %v637 = vpop.f32.mrf.mxu0
      %638 = vmatprep.mubr.f32.mxu0 0.0
      %639 = vmatmul.mubr.f32.gmra.mxu0 %v433
      %v640 = vpop.f32.mrf.mxu0
      %v641 = vadd.f32 0.0, %v640
      %v642 = vpop.f32.mrf.mxu0
      %643 = vmatprep.mubr.f32.mxu0 0.0
      %644 = vmatmul.mubr.f32.gmra.mxu0 %v436
      %v645 = vpop.f32.mrf.mxu0
      %v646 = vadd.f32 0.0, %v645
      %v647 = vpop.f32.mrf.mxu0
      %648 = vmatprep.mubr.f32.mxu0 0.0
      %649 = vmatmul.mubr.f32.gmra.mxu0 %v439
      %v650 = vpop.f32.mrf.mxu0
      %v651 = vadd.f32 0.0, %v650
      %v652 = vpop.f32.mrf.mxu0
      %653 = vmatprep.mubr.f32.mxu0 0.0
      %654 = vmatmul.mubr.f32.gmra.mxu0 %v442
      %v655 = vpop.f32.mrf.mxu0
      %v656 = vadd.f32 0.0, %v655
      %v657 = vpop.f32.mrf.mxu0
      %658 = vmatprep.mubr.f32.mxu0 0.0
      %659 = vmatmul.mubr.f32.gmra.mxu0 %v445
      %v660 = vpop.f32.mrf.mxu0
      %v661 = vadd.f32 0.0, %v660
      %v662 = vpop.f32.mrf.mxu0
      %663 = vmatprep.mubr.f32.mxu0 0.0
      %664 = vmatmul.mubr.f32.gmra.mxu0 %v448
      %v665 = vpop.f32.mrf.mxu0
      %v666 = vadd.f32 0.0, %v665
      %v667 = vpop.f32.mrf.mxu0
      %668 = vmatprep.mubr.f32.mxu0 0.0
      %669 = vmatmul.mubr.f32.gmra.mxu0 %v451
      %v670 = vpop.f32.mrf.mxu0
      %v671 = vadd.f32 0.0, %v670
      %v672 = vpop.f32.mrf.mxu0
      %673 = vmatprep.mubr.f32.mxu0 0.0
      %674 = vmatmul.mubr.f32.gmra.mxu0 %v454
      %v675 = vpop.f32.mrf.mxu0
      %v676 = vadd.f32 0.0, %v675
      %v677 = vpop.f32.mrf.mxu0
      %678 = vmatprep.mubr.f32.mxu0 0.0
      %679 = vmatmul.mubr.f32.gmra.mxu0 %v457
      %v680 = vpop.f32.mrf.mxu0
      %v681 = vadd.f32 0.0, %v680
      %v682 = vpop.f32.mrf.mxu0
      %683 = vmatprep.mubr.f32.mxu0 0.0
      %684 = vmatmul.mubr.f32.gmra.mxu0 %v460
      %v685 = vpop.f32.mrf.mxu0
      %v686 = vadd.f32 0.0, %v685
      %v687 = vpop.f32.mrf.mxu0
      %688 = vmatprep.mubr.f32.mxu0 0.0
      %689 = vmatmul.mubr.f32.gmra.mxu0 %v463
      %v690 = vpop.f32.mrf.mxu0
      %v691 = vadd.f32 0.0, %v690
      %v692 = vpop.f32.mrf.mxu0
      %693 = vdwg.mxu0
      %v694 = vld [vmem:[%s4] sm:$0x1]
      %v696 = vlaneseq
      %v697 = vshrl.u32 %v696, 7
      %v698 = vsub.s32 0, %v697
      %v699 = vrot.slane %v694, %v698
      %v701 = vmul.f32 %v536, %v699
      %v702 = vmul.f32 %v541, %v699
      %v703 = vmul.f32 %v546, %v699
      %v704 = vmul.f32 %v551, %v699
      %v705 = vmul.f32 %v556, %v699
      %v706 = vmul.f32 %v561, %v699
      %v707 = vmul.f32 %v566, %v699
      %v708 = vmul.f32 %v571, %v699
      %v709 = vmul.f32 %v576, %v699
      %v710 = vmul.f32 %v581, %v699
      %v711 = vmul.f32 %v586, %v699
      %v712 = vmul.f32 %v591, %v699
      %v713 = vmul.f32 %v596, %v699
      %v714 = vmul.f32 %v601, %v699
      %v715 = vmul.f32 %v606, %v699
      %v716 = vmul.f32 %v611, %v699
      %v717 = vmul.f32 %v616, %v699
      %v718 = vmul.f32 %v621, %v699
      %v719 = vmul.f32 %v626, %v699
      %v720 = vmul.f32 %v631, %v699
      %v721 = vmul.f32 %v636, %v699
      %v722 = vmul.f32 %v641, %v699
      %v723 = vmul.f32 %v646, %v699
      %v724 = vmul.f32 %v651, %v699
      %v725 = vmul.f32 %v656, %v699
      %v726 = vmul.f32 %v661, %v699
      %v727 = vmul.f32 %v666, %v699
      %v728 = vmul.f32 %v671, %v699
      %v729 = vmul.f32 %v676, %v699
      %v730 = vmul.f32 %v681, %v699
      %v731 = vmul.f32 %v686, %v699
      %v732 = vmul.f32 %v691, %v699
      %v733 = vld [vmem:[%s5] sm:$0x1]
      %v735 = vlaneseq
      %v736 = vshrl.u32 %v735, 7
      %v737 = vsub.s32 0, %v736
      %v738 = vrot.slane %v733, %v737
      %v740 = vadd.f32 %v701, %v738
      %v741 = vadd.f32 %v702, %v738
      %v742 = vadd.f32 %v703, %v738
      %v743 = vadd.f32 %v704, %v738
      %v744 = vadd.f32 %v705, %v738
      %v745 = vadd.f32 %v706, %v738
      %v746 = vadd.f32 %v707, %v738
      %v747 = vadd.f32 %v708, %v738
      %v748 = vadd.f32 %v709, %v738
      %v749 = vadd.f32 %v710, %v738
      %v750 = vadd.f32 %v711, %v738
      %v751 = vadd.f32 %v712, %v738
      %v752 = vadd.f32 %v713, %v738
      %v753 = vadd.f32 %v714, %v738
      %v754 = vadd.f32 %v715, %v738
      %v755 = vadd.f32 %v716, %v738
      %v756 = vadd.f32 %v717, %v738
      %v757 = vadd.f32 %v718, %v738
      %v758 = vadd.f32 %v719, %v738
      %v759 = vadd.f32 %v720, %v738
      %v760 = vadd.f32 %v721, %v738
      %v761 = vadd.f32 %v722, %v738
      %v762 = vadd.f32 %v723, %v738
      %v763 = vadd.f32 %v724, %v738
      %v764 = vadd.f32 %v725, %v738
      %v765 = vadd.f32 %v726, %v738
      %v766 = vadd.f32 %v727, %v738
      %v767 = vadd.f32 %v728, %v738
      %v768 = vadd.f32 %v729, %v738
      %v769 = vadd.f32 %v730, %v738
      %v770 = vadd.f32 %v731, %v738
      %v771 = vadd.f32 %v732, %v738
      %v772 = vmax.f32 %v740, 0.0
      %v773 = vmax.f32 %v741, 0.0
      %v774 = vmax.f32 %v742, 0.0
      %v775 = vmax.f32 %v743, 0.0
      %v776 = vmax.f32 %v744, 0.0
      %v777 = vmax.f32 %v745, 0.0
      %v778 = vmax.f32 %v746, 0.0
      %v779 = vmax.f32 %v747, 0.0
      %v780 = vmax.f32 %v748, 0.0
      %v781 = vmax.f32 %v749, 0.0
      %v782 = vmax.f32 %v750, 0.0
      %v783 = vmax.f32 %v751, 0.0
      %v784 = vmax.f32 %v752, 0.0
      %v785 = vmax.f32 %v753, 0.0
      %v786 = vmax.f32 %v754, 0.0
      %v787 = vmax.f32 %v755, 0.0
      %v788 = vmax.f32 %v756, 0.0
      %v789 = vmax.f32 %v757, 0.0
      %v790 = vmax.f32 %v758, 0.0
      %v791 = vmax.f32 %v759, 0.0
      %v792 = vmax.f32 %v760, 0.0
      %v793 = vmax.f32 %v761, 0.0
      %v794 = vmax.f32 %v762, 0.0
      %v795 = vmax.f32 %v763, 0.0
      %v796 = vmax.f32 %v764, 0.0
      %v797 = vmax.f32 %v765, 0.0
      %v798 = vmax.f32 %v766, 0.0
      %v799 = vmax.f32 %v767, 0.0
      %v800 = vmax.f32 %v768, 0.0
      %v801 = vmax.f32 %v769, 0.0
      %v802 = vmax.f32 %v770, 0.0
      %v803 = vmax.f32 %v771, 0.0
      %v804 = vld [vmem:[%s323] sm:$0xff]
      %v805 = vld [vmem:[%s323 + $0x8] sm:$0xff]
      %v806 = vld [vmem:[%s323 + $0x10] sm:$0xff]
      %v807 = vld [vmem:[%s323 + $0x18] sm:$0xff]
      %v808 = vld [vmem:[%s323 + $0x20] sm:$0xff]
      %v809 = vld [vmem:[%s323 + $0x28] sm:$0xff]
      %v810 = vld [vmem:[%s323 + $0x30] sm:$0xff]
      %v811 = vld [vmem:[%s323 + $0x38] sm:$0xff]
      %v812 = vld [vmem:[%s323 + $0x40] sm:$0xff]
      %v813 = vld [vmem:[%s323 + $0x48] sm:$0xff]
      %v814 = vld [vmem:[%s323 + $0x50] sm:$0xff]
      %v815 = vld [vmem:[%s323 + $0x58] sm:$0xff]
      %v816 = vld [vmem:[%s323 + $0x60] sm:$0xff]
      %v817 = vld [vmem:[%s323 + $0x68] sm:$0xff]
      %v818 = vld [vmem:[%s323 + $0x70] sm:$0xff]
      %v819 = vld [vmem:[%s323 + $0x78] sm:$0xff]
      %v820 = vld [vmem:[%s323 + $0x80] sm:$0xff]
      %v821 = vld [vmem:[%s323 + $0x88] sm:$0xff]
      %v822 = vld [vmem:[%s323 + $0x90] sm:$0xff]
      %v823 = vld [vmem:[%s323 + $0x98] sm:$0xff]
      %v824 = vld [vmem:[%s323 + $0xa0] sm:$0xff]
      %v825 = vld [vmem:[%s323 + $0xa8] sm:$0xff]
      %v826 = vld [vmem:[%s323 + $0xb0] sm:$0xff]
      %v827 = vld [vmem:[%s323 + $0xb8] sm:$0xff]
      %v828 = vld [vmem:[%s323 + $0xc0] sm:$0xff]
      %v829 = vld [vmem:[%s323 + $0xc8] sm:$0xff]
      %v830 = vld [vmem:[%s323 + $0xd0] sm:$0xff]
      %v831 = vld [vmem:[%s323 + $0xd8] sm:$0xff]
      %v832 = vld [vmem:[%s323 + $0xe0] sm:$0xff]
      %v833 = vld [vmem:[%s323 + $0xe8] sm:$0xff]
      %v834 = vld [vmem:[%s323 + $0xf0] sm:$0xff]
      %v835 = vld [vmem:[%s323 + $0xf8] sm:$0xff]
      %v836 = vld [vmem:[%s3] sm:$0xff]
      %v837 = vld [vmem:[%s3 + $0x8] sm:$0xff]
      %v838 = vld [vmem:[%s3 + $0x10] sm:$0xff]
      %v839 = vld [vmem:[%s3 + $0x18] sm:$0xff]
      %v840 = vld [vmem:[%s3 + $0x20] sm:$0xff]
      %v841 = vld [vmem:[%s3 + $0x28] sm:$0xff]
      %v842 = vld [vmem:[%s3 + $0x30] sm:$0xff]
      %v843 = vld [vmem:[%s3 + $0x38] sm:$0xff]
      %v844 = vld [vmem:[%s3 + $0x40] sm:$0xff]
      %v845 = vld [vmem:[%s3 + $0x48] sm:$0xff]
      %v846 = vld [vmem:[%s3 + $0x50] sm:$0xff]
      %v847 = vld [vmem:[%s3 + $0x58] sm:$0xff]
      %v848 = vld [vmem:[%s3 + $0x60] sm:$0xff]
      %v849 = vld [vmem:[%s3 + $0x68] sm:$0xf]
      %vm850 = vcmask 883712
      %v852 = vsel %vm850, %v804, 0
      %v855 = vsel %vm850, %v805, 0
      %v858 = vsel %vm850, %v806, 0
      %v861 = vsel %vm850, %v807, 0
      %v864 = vsel %vm850, %v808, 0
      %v867 = vsel %vm850, %v809, 0
      %v870 = vsel %vm850, %v810, 0
      %v873 = vsel %vm850, %v811, 0
      %v876 = vsel %vm850, %v812, 0
      %v879 = vsel %vm850, %v813, 0
      %v882 = vsel %vm850, %v814, 0
      %v885 = vsel %vm850, %v815, 0
      %v888 = vsel %vm850, %v816, 0
      %v891 = vsel %vm850, %v817, 0
      %v894 = vsel %vm850, %v818, 0
      %v897 = vsel %vm850, %v819, 0
      %v900 = vsel %vm850, %v820, 0
      %v903 = vsel %vm850, %v821, 0
      %v906 = vsel %vm850, %v822, 0
      %v909 = vsel %vm850, %v823, 0
      %v912 = vsel %vm850, %v824, 0
      %v915 = vsel %vm850, %v825, 0
      %v918 = vsel %vm850, %v826, 0
      %v921 = vsel %vm850, %v827, 0
      %v924 = vsel %vm850, %v828, 0
      %v927 = vsel %vm850, %v829, 0
      %v930 = vsel %vm850, %v830, 0
      %v933 = vsel %vm850, %v831, 0
      %v936 = vsel %vm850, %v832, 0
      %v939 = vsel %vm850, %v833, 0
      %v942 = vsel %vm850, %v834, 0
      %v945 = vsel %vm850, %v835, 0
      %vm947 = vcmask 1043456
      %v949 = vsel %vm947, %v849, 0
      %951 = vmatprep.subr.mxu0 0.0
      %952 = vmatpush1.msra.mxu0 0.0
      %953 = vmatprep.subr.mxu0 0.0
      %954 = vmatpush1.msra.mxu0 0.0
      %955 = vmatprep.subr.mxu0 0.0
      %956 = vmatpush1.msra.mxu0 %v949
      %957 = vmatprep.subr.mxu0 0.0
      %958 = vmatpush1.msra.mxu0 %v848
      %959 = vmatprep.subr.mxu0 0.0
      %960 = vmatpush1.msra.mxu0 %v847
      %961 = vmatprep.subr.mxu0 0.0
      %962 = vmatpush1.msra.mxu0 %v846
      %963 = vmatprep.subr.mxu0 0.0
      %964 = vmatpush1.msra.mxu0 %v845
      %965 = vmatprep.subr.mxu0 0.0
      %966 = vmatpush1.msra.mxu0 %v844
      %967 = vmatprep.subr.mxu0 0.0
      %968 = vmatpush1.msra.mxu0 %v843
      %969 = vmatprep.subr.mxu0 0.0
      %970 = vmatpush1.msra.mxu0 %v842
      %971 = vmatprep.subr.mxu0 0.0
      %972 = vmatpush1.msra.mxu0 %v841
      %973 = vmatprep.subr.mxu0 0.0
      %974 = vmatpush1.msra.mxu0 %v840
      %975 = vmatprep.subr.mxu0 0.0
      %976 = vmatpush1.msra.mxu0 %v839
      %977 = vmatprep.subr.mxu0 0.0
      %978 = vmatpush1.msra.mxu0 %v838
      %979 = vmatprep.subr.mxu0 0.0
      %980 = vmatpush1.msra.mxu0 %v837
      %981 = vmatprep.subr.mxu0 0.0
      %982 = vmatpush1.msra.mxu0 %v836
      %983 = vmatprep.subr.mxu0 0.0
      %984 = vmatpush2.msra.mxu0 0.0
      %985 = vmatprep.subr.mxu0 0.0
      %986 = vmatpush2.msra.mxu0 0.0
      %987 = vmatprep.subr.mxu0 0.0
      %988 = vmatpush2.msra.mxu0 0.0
      %989 = vmatprep.subr.mxu0 0.0
      %990 = vmatpush2.msra.mxu0 0.0
      %991 = vmatprep.subr.mxu0 0.0
      %992 = vmatpush2.msra.mxu0 0.0
      %993 = vmatprep.subr.mxu0 0.0
      %994 = vmatpush2.msra.mxu0 0.0
      %995 = vmatprep.subr.mxu0 0.0
      %996 = vmatpush2.msra.mxu0 0.0
      %997 = vmatprep.subr.mxu0 0.0
      %998 = vmatpush2.msra.mxu0 0.0
      %999 = vmatprep.subr.mxu0 0.0
      %1000 = vmatpush2.msra.mxu0 0.0
      %1001 = vmatprep.subr.mxu0 0.0
      %1002 = vmatpush2.msra.mxu0 0.0
      %1003 = vmatprep.subr.mxu0 0.0
      %1004 = vmatpush2.msra.mxu0 0.0
      %1005 = vmatprep.subr.mxu0 0.0
      %1006 = vmatpush2.msra.mxu0 0.0
      %1007 = vmatprep.subr.mxu0 0.0
      %1008 = vmatpush2.msra.mxu0 0.0
      %1009 = vmatprep.subr.mxu0 0.0
      %1010 = vmatpush2.msra.mxu0 0.0
      %1011 = vmatprep.subr.mxu0 0.0
      %1012 = vmatpush2.msra.mxu0 0.0
      %1013 = vmatprep.subr.mxu0 0.0
      %1014 = vmatpush2.msra.mxu0 0.0
      %1015 = vmatprep.mubr.f32.mxu0 0.0
      %1016 = vmatmul.mubr.f32.gmra.mxu0 %v852
      %v1017 = vpop.f32.mrf.mxu0
      %v1018 = vadd.f32 %v772, %v1017
      %v1019 = vpop.f32.mrf.mxu0
      %1020 = vmatprep.mubr.f32.mxu0 0.0
      %1021 = vmatmul.mubr.f32.gmra.mxu0 %v855
      %v1022 = vpop.f32.mrf.mxu0
      %v1023 = vadd.f32 %v773, %v1022
      %v1024 = vpop.f32.mrf.mxu0
      %1025 = vmatprep.mubr.f32.mxu0 0.0
      %1026 = vmatmul.mubr.f32.gmra.mxu0 %v858
      %v1027 = vpop.f32.mrf.mxu0
      %v1028 = vadd.f32 %v774, %v1027
      %v1029 = vpop.f32.mrf.mxu0
      %1030 = vmatprep.mubr.f32.mxu0 0.0
      %1031 = vmatmul.mubr.f32.gmra.mxu0 %v861
      %v1032 = vpop.f32.mrf.mxu0
      %v1033 = vadd.f32 %v775, %v1032
      %v1034 = vpop.f32.mrf.mxu0
      %1035 = vmatprep.mubr.f32.mxu0 0.0
      %1036 = vmatmul.mubr.f32.gmra.mxu0 %v864
      %v1037 = vpop.f32.mrf.mxu0
      %v1038 = vadd.f32 %v776, %v1037
      %v1039 = vpop.f32.mrf.mxu0
      %1040 = vmatprep.mubr.f32.mxu0 0.0
      %1041 = vmatmul.mubr.f32.gmra.mxu0 %v867
      %v1042 = vpop.f32.mrf.mxu0
      %v1043 = vadd.f32 %v777, %v1042
      %v1044 = vpop.f32.mrf.mxu0
      %1045 = vmatprep.mubr.f32.mxu0 0.0
      %1046 = vmatmul.mubr.f32.gmra.mxu0 %v870
      %v1047 = vpop.f32.mrf.mxu0
      %v1048 = vadd.f32 %v778, %v1047
      %v1049 = vpop.f32.mrf.mxu0
      %1050 = vmatprep.mubr.f32.mxu0 0.0
      %1051 = vmatmul.mubr.f32.gmra.mxu0 %v873
      %v1052 = vpop.f32.mrf.mxu0
      %v1053 = vadd.f32 %v779, %v1052
      %v1054 = vpop.f32.mrf.mxu0
      %1055 = vmatprep.mubr.f32.mxu0 0.0
      %1056 = vmatmul.mubr.f32.gmra.mxu0 %v876
      %v1057 = vpop.f32.mrf.mxu0
      %v1058 = vadd.f32 %v780, %v1057
      %v1059 = vpop.f32.mrf.mxu0
      %1060 = vmatprep.mubr.f32.mxu0 0.0
      %1061 = vmatmul.mubr.f32.gmra.mxu0 %v879
      %v1062 = vpop.f32.mrf.mxu0
      %v1063 = vadd.f32 %v781, %v1062
      %v1064 = vpop.f32.mrf.mxu0
      %1065 = vmatprep.mubr.f32.mxu0 0.0
      %1066 = vmatmul.mubr.f32.gmra.mxu0 %v882
      %v1067 = vpop.f32.mrf.mxu0
      %v1068 = vadd.f32 %v782, %v1067
      %v1069 = vpop.f32.mrf.mxu0
      %1070 = vmatprep.mubr.f32.mxu0 0.0
      %1071 = vmatmul.mubr.f32.gmra.mxu0 %v885
      %v1072 = vpop.f32.mrf.mxu0
      %v1073 = vadd.f32 %v783, %v1072
      %v1074 = vpop.f32.mrf.mxu0
      %1075 = vmatprep.mubr.f32.mxu0 0.0
      %1076 = vmatmul.mubr.f32.gmra.mxu0 %v888
      %v1077 = vpop.f32.mrf.mxu0
      %v1078 = vadd.f32 %v784, %v1077
      %v1079 = vpop.f32.mrf.mxu0
      %1080 = vmatprep.mubr.f32.mxu0 0.0
      %1081 = vmatmul.mubr.f32.gmra.mxu0 %v891
      %v1082 = vpop.f32.mrf.mxu0
      %v1083 = vadd.f32 %v785, %v1082
      %v1084 = vpop.f32.mrf.mxu0
      %1085 = vmatprep.mubr.f32.mxu0 0.0
      %1086 = vmatmul.mubr.f32.gmra.mxu0 %v894
      %v1087 = vpop.f32.mrf.mxu0
      %v1088 = vadd.f32 %v786, %v1087
      %v1089 = vpop.f32.mrf.mxu0
      %1090 = vmatprep.mubr.f32.mxu0 0.0
      %1091 = vmatmul.mubr.f32.gmra.mxu0 %v897
      %v1092 = vpop.f32.mrf.mxu0
      %v1093 = vadd.f32 %v787, %v1092
      %v1094 = vpop.f32.mrf.mxu0
      %1095 = vmatprep.mubr.f32.mxu0 0.0
      %1096 = vmatmul.mubr.f32.gmra.mxu0 %v900
      %v1097 = vpop.f32.mrf.mxu0
      %v1098 = vadd.f32 %v788, %v1097
      %v1099 = vpop.f32.mrf.mxu0
      %1100 = vmatprep.mubr.f32.mxu0 0.0
      %1101 = vmatmul.mubr.f32.gmra.mxu0 %v903
      %v1102 = vpop.f32.mrf.mxu0
      %v1103 = vadd.f32 %v789, %v1102
      %v1104 = vpop.f32.mrf.mxu0
      %1105 = vmatprep.mubr.f32.mxu0 0.0
      %1106 = vmatmul.mubr.f32.gmra.mxu0 %v906
      %v1107 = vpop.f32.mrf.mxu0
      %v1108 = vadd.f32 %v790, %v1107
      %v1109 = vpop.f32.mrf.mxu0
      %1110 = vmatprep.mubr.f32.mxu0 0.0
      %1111 = vmatmul.mubr.f32.gmra.mxu0 %v909
      %v1112 = vpop.f32.mrf.mxu0
      %v1113 = vadd.f32 %v791, %v1112
      %v1114 = vpop.f32.mrf.mxu0
      %1115 = vmatprep.mubr.f32.mxu0 0.0
      %1116 = vmatmul.mubr.f32.gmra.mxu0 %v912
      %v1117 = vpop.f32.mrf.mxu0
      %v1118 = vadd.f32 %v792, %v1117
      %v1119 = vpop.f32.mrf.mxu0
      %1120 = vmatprep.mubr.f32.mxu0 0.0
      %1121 = vmatmul.mubr.f32.gmra.mxu0 %v915
      %v1122 = vpop.f32.mrf.mxu0
      %v1123 = vadd.f32 %v793, %v1122
      %v1124 = vpop.f32.mrf.mxu0
      %1125 = vmatprep.mubr.f32.mxu0 0.0
      %1126 = vmatmul.mubr.f32.gmra.mxu0 %v918
      %v1127 = vpop.f32.mrf.mxu0
      %v1128 = vadd.f32 %v794, %v1127
      %v1129 = vpop.f32.mrf.mxu0
      %1130 = vmatprep.mubr.f32.mxu0 0.0
      %1131 = vmatmul.mubr.f32.gmra.mxu0 %v921
      %v1132 = vpop.f32.mrf.mxu0
      %v1133 = vadd.f32 %v795, %v1132
      %v1134 = vpop.f32.mrf.mxu0
      %1135 = vmatprep.mubr.f32.mxu0 0.0
      %1136 = vmatmul.mubr.f32.gmra.mxu0 %v924
      %v1137 = vpop.f32.mrf.mxu0
      %v1138 = vadd.f32 %v796, %v1137
      %v1139 = vpop.f32.mrf.mxu0
      %1140 = vmatprep.mubr.f32.mxu0 0.0
      %1141 = vmatmul.mubr.f32.gmra.mxu0 %v927
      %v1142 = vpop.f32.mrf.mxu0
      %v1143 = vadd.f32 %v797, %v1142
      %v1144 = vpop.f32.mrf.mxu0
      %1145 = vmatprep.mubr.f32.mxu0 0.0
      %1146 = vmatmul.mubr.f32.gmra.mxu0 %v930
      %v1147 = vpop.f32.mrf.mxu0
      %v1148 = vadd.f32 %v798, %v1147
      %v1149 = vpop.f32.mrf.mxu0
      %1150 = vmatprep.mubr.f32.mxu0 0.0
      %1151 = vmatmul.mubr.f32.gmra.mxu0 %v933
      %v1152 = vpop.f32.mrf.mxu0
      %v1153 = vadd.f32 %v799, %v1152
      %v1154 = vpop.f32.mrf.mxu0
      %1155 = vmatprep.mubr.f32.mxu0 0.0
      %1156 = vmatmul.mubr.f32.gmra.mxu0 %v936
      %v1157 = vpop.f32.mrf.mxu0
      %v1158 = vadd.f32 %v800, %v1157
      %v1159 = vpop.f32.mrf.mxu0
      %1160 = vmatprep.mubr.f32.mxu0 0.0
      %1161 = vmatmul.mubr.f32.gmra.mxu0 %v939
      %v1162 = vpop.f32.mrf.mxu0
      %v1163 = vadd.f32 %v801, %v1162
      %v1164 = vpop.f32.mrf.mxu0
      %1165 = vmatprep.mubr.f32.mxu0 0.0
      %1166 = vmatmul.mubr.f32.gmra.mxu0 %v942
      %v1167 = vpop.f32.mrf.mxu0
      %v1168 = vadd.f32 %v802, %v1167
      %v1169 = vpop.f32.mrf.mxu0
      %1170 = vmatprep.mubr.f32.mxu0 0.0
      %1171 = vmatmul.mubr.f32.gmra.mxu0 %v945
      %v1172 = vpop.f32.mrf.mxu0
      %v1173 = vadd.f32 %v803, %v1172
      %v1174 = vpop.f32.mrf.mxu0
      %1175 = vdwg.mxu0
      %v1176 = vld [vmem:[%s6] sm:$0x1]
      %v1178 = vlaneseq
      %v1179 = vshrl.u32 %v1178, 7
      %v1180 = vsub.s32 0, %v1179
      %v1181 = vrot.slane %v1176, %v1180
      %v1183 = vmul.f32 %v1018, %v1181
      %v1184 = vmul.f32 %v1023, %v1181
      %v1185 = vmul.f32 %v1028, %v1181
      %v1186 = vmul.f32 %v1033, %v1181
      %v1187 = vmul.f32 %v1038, %v1181
      %v1188 = vmul.f32 %v1043, %v1181
      %v1189 = vmul.f32 %v1048, %v1181
      %v1190 = vmul.f32 %v1053, %v1181
      %v1191 = vmul.f32 %v1058, %v1181
      %v1192 = vmul.f32 %v1063, %v1181
      %v1193 = vmul.f32 %v1068, %v1181
      %v1194 = vmul.f32 %v1073, %v1181
      %v1195 = vmul.f32 %v1078, %v1181
      %v1196 = vmul.f32 %v1083, %v1181
      %v1197 = vmul.f32 %v1088, %v1181
      %v1198 = vmul.f32 %v1093, %v1181
      %v1199 = vmul.f32 %v1098, %v1181
      %v1200 = vmul.f32 %v1103, %v1181
      %v1201 = vmul.f32 %v1108, %v1181
      %v1202 = vmul.f32 %v1113, %v1181
      %v1203 = vmul.f32 %v1118, %v1181
      %v1204 = vmul.f32 %v1123, %v1181
      %v1205 = vmul.f32 %v1128, %v1181
      %v1206 = vmul.f32 %v1133, %v1181
      %v1207 = vmul.f32 %v1138, %v1181
      %v1208 = vmul.f32 %v1143, %v1181
      %v1209 = vmul.f32 %v1148, %v1181
      %v1210 = vmul.f32 %v1153, %v1181
      %v1211 = vmul.f32 %v1158, %v1181
      %v1212 = vmul.f32 %v1163, %v1181
      %v1213 = vmul.f32 %v1168, %v1181
      %v1214 = vmul.f32 %v1173, %v1181
      %v1215 = vld [vmem:[%s7] sm:$0x1]
      %v1217 = vlaneseq
      %v1218 = vshrl.u32 %v1217, 7
      %v1219 = vsub.s32 0, %v1218
      %v1220 = vrot.slane %v1215, %v1219
      %v1222 = vadd.f32 %v1183, %v1220
      %v1223 = vadd.f32 %v1184, %v1220
      %v1224 = vadd.f32 %v1185, %v1220
      %v1225 = vadd.f32 %v1186, %v1220
      %v1226 = vadd.f32 %v1187, %v1220
      %v1227 = vadd.f32 %v1188, %v1220
      %v1228 = vadd.f32 %v1189, %v1220
      %v1229 = vadd.f32 %v1190, %v1220
      %v1230 = vadd.f32 %v1191, %v1220
      %v1231 = vadd.f32 %v1192, %v1220
      %v1232 = vadd.f32 %v1193, %v1220
      %v1233 = vadd.f32 %v1194, %v1220
      %v1234 = vadd.f32 %v1195, %v1220
      %v1235 = vadd.f32 %v1196, %v1220
      %v1236 = vadd.f32 %v1197, %v1220
      %v1237 = vadd.f32 %v1198, %v1220
      %v1238 = vadd.f32 %v1199, %v1220
      %v1239 = vadd.f32 %v1200, %v1220
      %v1240 = vadd.f32 %v1201, %v1220
      %v1241 = vadd.f32 %v1202, %v1220
      %v1242 = vadd.f32 %v1203, %v1220
      %v1243 = vadd.f32 %v1204, %v1220
      %v1244 = vadd.f32 %v1205, %v1220
      %v1245 = vadd.f32 %v1206, %v1220
      %v1246 = vadd.f32 %v1207, %v1220
      %v1247 = vadd.f32 %v1208, %v1220
      %v1248 = vadd.f32 %v1209, %v1220
      %v1249 = vadd.f32 %v1210, %v1220
      %v1250 = vadd.f32 %v1211, %v1220
      %v1251 = vadd.f32 %v1212, %v1220
      %v1252 = vadd.f32 %v1213, %v1220
      %v1253 = vadd.f32 %v1214, %v1220
      %v1254 = vmax.f32 %v1222, 0.0
      %v1255 = vmax.f32 %v1223, 0.0
      %v1256 = vmax.f32 %v1224, 0.0
      %v1257 = vmax.f32 %v1225, 0.0
      %v1258 = vmax.f32 %v1226, 0.0
      %v1259 = vmax.f32 %v1227, 0.0
      %v1260 = vmax.f32 %v1228, 0.0
      %v1261 = vmax.f32 %v1229, 0.0
      %v1262 = vmax.f32 %v1230, 0.0
      %v1263 = vmax.f32 %v1231, 0.0
      %v1264 = vmax.f32 %v1232, 0.0
      %v1265 = vmax.f32 %v1233, 0.0
      %v1266 = vmax.f32 %v1234, 0.0
      %v1267 = vmax.f32 %v1235, 0.0
      %v1268 = vmax.f32 %v1236, 0.0
      %v1269 = vmax.f32 %v1237, 0.0
      %v1270 = vmax.f32 %v1238, 0.0
      %v1271 = vmax.f32 %v1239, 0.0
      %v1272 = vmax.f32 %v1240, 0.0
      %v1273 = vmax.f32 %v1241, 0.0
      %v1274 = vmax.f32 %v1242, 0.0
      %v1275 = vmax.f32 %v1243, 0.0
      %v1276 = vmax.f32 %v1244, 0.0
      %v1277 = vmax.f32 %v1245, 0.0
      %v1278 = vmax.f32 %v1246, 0.0
      %v1279 = vmax.f32 %v1247, 0.0
      %v1280 = vmax.f32 %v1248, 0.0
      %v1281 = vmax.f32 %v1249, 0.0
      %v1282 = vmax.f32 %v1250, 0.0
      %v1283 = vmax.f32 %v1251, 0.0
      %v1284 = vmax.f32 %v1252, 0.0
      %v1285 = vmax.f32 %v1253, 0.0
      %vm1286 = vcmask 195584
      %1287 = vst.msk [vmem:[%s329] sm:$0xff] %vm1286, %v1254
      %1288 = vst.msk [vmem:[%s329 + $0x8] sm:$0xff] %vm1286, %v1255
      %1289 = vst.msk [vmem:[%s329 + $0x10] sm:$0xff] %vm1286, %v1256
      %1290 = vst.msk [vmem:[%s329 + $0x18] sm:$0xff] %vm1286, %v1257
      %1291 = vst.msk [vmem:[%s329 + $0x20] sm:$0xff] %vm1286, %v1258
      %1292 = vst.msk [vmem:[%s329 + $0x28] sm:$0xff] %vm1286, %v1259
      %1293 = vst.msk [vmem:[%s329 + $0x30] sm:$0xff] %vm1286, %v1260
      %1294 = vst.msk [vmem:[%s329 + $0x38] sm:$0xff] %vm1286, %v1261
      %1295 = vst.msk [vmem:[%s329 + $0x40] sm:$0xff] %vm1286, %v1262
      %1296 = vst.msk [vmem:[%s329 + $0x48] sm:$0xff] %vm1286, %v1263
      %1297 = vst.msk [vmem:[%s329 + $0x50] sm:$0xff] %vm1286, %v1264
      %1298 = vst.msk [vmem:[%s329 + $0x58] sm:$0xff] %vm1286, %v1265
      %1299 = vst.msk [vmem:[%s329 + $0x60] sm:$0xff] %vm1286, %v1266
      %1300 = vst.msk [vmem:[%s329 + $0x68] sm:$0xff] %vm1286, %v1267
      %1301 = vst.msk [vmem:[%s329 + $0x70] sm:$0xff] %vm1286, %v1268
      %1302 = vst.msk [vmem:[%s329 + $0x78] sm:$0xff] %vm1286, %v1269
      %1303 = vst.msk [vmem:[%s329 + $0x80] sm:$0xff] %vm1286, %v1270
      %1304 = vst.msk [vmem:[%s329 + $0x88] sm:$0xff] %vm1286, %v1271
      %1305 = vst.msk [vmem:[%s329 + $0x90] sm:$0xff] %vm1286, %v1272
      %1306 = vst.msk [vmem:[%s329 + $0x98] sm:$0xff] %vm1286, %v1273
      %1307 = vst.msk [vmem:[%s329 + $0xa0] sm:$0xff] %vm1286, %v1274
      %1308 = vst.msk [vmem:[%s329 + $0xa8] sm:$0xff] %vm1286, %v1275
      %1309 = vst.msk [vmem:[%s329 + $0xb0] sm:$0xff] %vm1286, %v1276
      %1310 = vst.msk [vmem:[%s329 + $0xb8] sm:$0xff] %vm1286, %v1277
      %1311 = vst.msk [vmem:[%s329 + $0xc0] sm:$0xff] %vm1286, %v1278
      %1312 = vst.msk [vmem:[%s329 + $0xc8] sm:$0xff] %vm1286, %v1279
      %1313 = vst.msk [vmem:[%s329 + $0xd0] sm:$0xff] %vm1286, %v1280
      %1314 = vst.msk [vmem:[%s329 + $0xd8] sm:$0xff] %vm1286, %v1281
      %1315 = vst.msk [vmem:[%s329 + $0xe0] sm:$0xff] %vm1286, %v1282
      %1316 = vst.msk [vmem:[%s329 + $0xe8] sm:$0xff] %vm1286, %v1283
      %1317 = vst.msk [vmem:[%s329 + $0xf0] sm:$0xff] %vm1286, %v1284
      %1318 = vst.msk [vmem:[%s329 + $0xf8] sm:$0xff] %vm1286, %v1285
      %s1319 = smul.u32 32, %s19
      %p1320 = scmp.lt.s32.totalorder %s1319, 63
      %s1321 = scalar_select %p1320, %s1319, 63
      %s1322 = smul.addr %s1321, 8
      %s1323 = scalar_lea.vmem %s8, %s1322
      // Predicated region
      $region53: #{mag_block_forward.4} parent=51 // pred_check
        %p1324 = pneg %p215
      $region54: #{mag_block_forward.4} parent=51 // pred_check_branch
        %1326 = sbr.rel (%p1324) target = $region56
      $region55: #{mag_block_forward.4} parent=51 // pred_region
        %s1327 = smul.u32 32, %s19
      $region56: #{mag_block_forward.4} parent=51 // pred_fallthru
        _
    $region52: #{mag_block_forward.4} parent=5 // pred_fallthru
      _
    %p1328 = scmp.le.s32.totalorder 2, %s14
    // Predicated region
    $region57: #{mag_block_forward.4} parent=5 // pred_check
      %p1329 = pneg %p1328
    $region58: #{mag_block_forward.4} parent=5 // pred_check_branch
      %1331 = sbr.rel (%p1329) target = $region60
    $region59: #{mag_block_forward.4} parent=5 // pred_region
      %s1332 = ssub.s32 %s14, 2
      // Predicated region
      $region61: #{mag_block_forward.4} parent=59 // pred_check
        %p1333 = pneg %p221
      $region62: #{mag_block_forward.4} parent=59 // pred_check_branch
        %1335 = sbr.rel (%p1333) target = $region64
      $region63: #{mag_block_forward.4} parent=59 // pred_region
        %s1336 = smul.u32 32, %s20
        %p1337 = scmp.lt.s32.totalorder %s1336, 63
        %s1338 = scalar_select %p1337, %s1336, 63
        %s1339 = smul.addr %s1338, 8
        %s1340 = scalar_lea.vmem %s8, %s1339
      $region64: #{mag_block_forward.4} parent=59 // pred_fallthru
        _
    $region60: #{mag_block_forward.4} parent=5 // pred_fallthru
      _
  $region6: #{mag_block_forward.4} parent=0 // loop_footer
    %s18 = sadd.s32 1, %s14
  $region7: #{mag_block_forward.4} parent=0 // loop_footer_branch
    %13 = sbr.rel target = $region3
  $region8: #{mag_block_forward.4} parent=0 // loop_exit
    _

// kernel: mag_block_forward.5
$region0: #{mag_block_forward.5}
  #allocation0 [shape = 'u32[]', space=smem, size = 0x4, offset = 0x4, fixed_abs, tag = 'smem constant byte address 0x4 - core index']
  #allocation1 [shape = 'u32[144,128]{1,0:T(1,128)}', space=vmem, size = 0x12000, scoped, tag = 'internal scratch']
  #allocation2 [shape = 'f32[1,1]{1,0:T(1,128)S(1)}', space=vmem, size = 0x200, scoped, tag = 'scoped memory for mag_block_forward.5']
  %s0 = inlined_call_operand.vmem [shape: f32[512,16], index: 0, kind: input, shape index: {}]
  %s1 = inlined_call_operand.vmem [shape: f32[512,24], index: 1, kind: input, shape index: {}]
  %s2 = inlined_call_operand.<no memory space> [shape: f32[1,1], index: 2, kind: input, shape index: {}]
  %s3 = inlined_call_operand.vmem [shape: f32[6,512,8], index: 3, kind: output, shape index: {}]
  %s4 = sld [smem:[#allocation0]]
  $region79: #{mag_block_forward.5} parent=0
    _
  %s6 = ssub.s32 1, %s4
  %s7 = scalar_select 0, %s6, %s4
  %v8 = vstv %s2
  %9 = vst [vmem:[#allocation2] sm:$0x1] %v8
  $region1: #{mag_block_forward.5} parent=0
    #allocation3 [shape = 'u8[1572864]{0}', space=vmem, size = 0x180000, scoped, tag = 'output window, operand 0']
    loop: start=0, step=1, limit=4
    $region2: #{mag_block_forward.5} parent=1 // loop_pre_header
      _
    $region3: #{mag_block_forward.5} parent=1 // loop_header
      %s11 = sphi 0, %s15
      %p12 = scmp.ge.s32.totalorder %s11, 4
      %s21 = sphi 0, %s23
      %s24 = sphi 0, %s21
      %s25 = sphi 0, %s24
      %s41 = sphi 0, %s25
      %s47 = sphi 0, %s49
      %s50 = sphi 0, %s47
      %s51 = sphi 0, %s50
      %s67 = sphi 0, %s51
      %s71 = sphi 0, %s71
      %s73 = sphi 0, %s71
      %s74 = sphi 0, %s73
      %s88 = sphi 0, %s74
      %s94 = sphi 0, %s96
      %s97 = sphi 0, %s94
      %s98 = sphi 0, %s97
      %s114 = sphi 0, %s98
    $region4: #{mag_block_forward.5} parent=1 // loop_header_branch
      %14 = sbr.rel (%p12) target = $region8
    $region5: #{mag_block_forward.5} parent=1 // loop_body
      %s16 = ssub.s32 %s11, 1
      %s17 = ssub.s32 %s11, 2
      %s18 = sadd.s32 %s11, 1
      %s19 = ssub.s32 %s11, %s18
      %p20 = scmp.eq.s32.totalorder %s19, 0
      %s22 = sadd.s32 %s21, 1
      %s23 = scalar_select %p20, %s21, %s22
      %p26 = pneg %p20
      %p27 = scmp.eq.s32.totalorder %s11, 1
      %p28 = por %p26, %p27
      %p29 = scmp.ne.s32.totalorder %s21, %s24
      %p30 = scmp.eq.s32.totalorder %s11, 0
      %p31 = por %p29, %p30
      %p32 = scmp.ne.s32.totalorder %s21, %s24
      %p33 = scmp.eq.s32.totalorder %s16, 1
      %p34 = por %p32, %p33
      %p35 = scmp.ne.s32.totalorder %s24, %s25
      %p36 = scmp.eq.s32.totalorder %s16, 0
      %p37 = por %p35, %p36
      %p38 = scmp.ne.s32.totalorder %s24, %s25
      %p39 = scmp.eq.s32.totalorder %s17, 1
      %p40 = por %p38, %p39
      %p42 = scmp.ne.s32.totalorder %s25, %s41
      %p43 = scmp.eq.s32.totalorder %s17, 0
      %p44 = por %p42, %p43
      %s45 = ssub.s32 %s11, %s18
      %p46 = scmp.eq.s32.totalorder %s45, 0
      %s48 = sadd.s32 %s47, 1
      %s49 = scalar_select %p46, %s47, %s48
      %p52 = pneg %p46
      %p53 = scmp.eq.s32.totalorder %s11, 1
      %p54 = por %p52, %p53
      %p55 = scmp.ne.s32.totalorder %s47, %s50
      %p56 = scmp.eq.s32.totalorder %s11, 0
      %p57 = por %p55, %p56
      %p58 = scmp.ne.s32.totalorder %s47, %s50
      %p59 = scmp.eq.s32.totalorder %s16, 1
      %p60 = por %p58, %p59
      %p61 = scmp.ne.s32.totalorder %s50, %s51
      %p62 = scmp.eq.s32.totalorder %s16, 0
      %p63 = por %p61, %p62
      %p64 = scmp.ne.s32.totalorder %s50, %s51
      %p65 = scmp.eq.s32.totalorder %s17, 1
      %p66 = por %p64, %p65
      %p68 = scmp.ne.s32.totalorder %s51, %s67
      %p69 = scmp.eq.s32.totalorder %s17, 0
      %p70 = por %p68, %p69
      %s72 = sadd.s32 %s71, 1
      %p75 = scmp.eq.s32.totalorder %s11, 1
      %p76 = scmp.ne.s32.totalorder %s71, %s73
      %p77 = scmp.eq.s32.totalorder %s11, 0
      %p78 = por %p76, %p77
      %p79 = scmp.ne.s32.totalorder %s71, %s73
      %p80 = scmp.eq.s32.totalorder %s16, 1
      %p81 = por %p79, %p80
      %p82 = scmp.ne.s32.totalorder %s73, %s74
      %p83 = scmp.eq.s32.totalorder %s16, 0
      %p84 = por %p82, %p83
      %p85 = scmp.ne.s32.totalorder %s73, %s74
      %p86 = scmp.eq.s32.totalorder %s17, 1
      %p87 = por %p85, %p86
      %p89 = scmp.ne.s32.totalorder %s74, %s88
      %p90 = scmp.eq.s32.totalorder %s17, 0
      %p91 = por %p89, %p90
      %s92 = ssub.s32 %s11, %s18
      %p93 = scmp.eq.s32.totalorder %s92, 0
      %s95 = sadd.s32 %s94, 1
      %s96 = scalar_select %p93, %s94, %s95
      %p99 = pneg %p93
      %p100 = scmp.eq.s32.totalorder %s11, 1
      %p101 = por %p99, %p100
      %p102 = scmp.ne.s32.totalorder %s94, %s97
      %p103 = scmp.eq.s32.totalorder %s11, 0
      %p104 = por %p102, %p103
      %p105 = scmp.ne.s32.totalorder %s94, %s97
      %p106 = scmp.eq.s32.totalorder %s16, 1
      %p107 = por %p105, %p106
      %p108 = scmp.ne.s32.totalorder %s97, %s98
      %p109 = scmp.eq.s32.totalorder %s16, 0
      %p110 = por %p108, %p109
      %p111 = scmp.ne.s32.totalorder %s97, %s98
      %p112 = scmp.eq.s32.totalorder %s17, 1
      %p113 = por %p111, %p112
      %p115 = scmp.ne.s32.totalorder %s98, %s114
      %p116 = scmp.eq.s32.totalorder %s17, 0
      %p117 = por %p115, %p116
      %p118 = scmp.le.s32.totalorder 1, %s11
      %p119 = scmp.lt.s32.totalorder %s11, 3
      %p120 = pnand %p118, %p119
      %p121 = pneg %p120
      // Predicated region
      $region9: #{mag_block_forward.5} parent=5 // pred_check
        _
      $region10: #{mag_block_forward.5} parent=5 // pred_check_branch
        %123 = sbr.rel (%p120) target = $region12
      $region11: #{mag_block_forward.5} parent=5 // pred_region
        %s124 = ssub.s32 %s11, 1
        // Predicated region
        $region13: #{mag_block_forward.5} parent=11 // pred_check
          %p125 = pneg %p84
        $region14: #{mag_block_forward.5} parent=11 // pred_check_branch
          %127 = sbr.rel (%p125) target = $region16
        $region15: #{mag_block_forward.5} parent=11 // pred_region
          _
        $region16: #{mag_block_forward.5} parent=11 // pred_fallthru
          _
      $region12: #{mag_block_forward.5} parent=5 // pred_fallthru
        _
      %p128 = scmp.lt.s32.totalorder %s11, 2
      // Predicated region
      $region17: #{mag_block_forward.5} parent=5 // pred_check
        %p129 = pneg %p128
      $region18: #{mag_block_forward.5} parent=5 // pred_check_branch
        %131 = sbr.rel (%p129) target = $region20
      $region19: #{mag_block_forward.5} parent=5 // pred_region
        // Predicated region
        $region21: #{mag_block_forward.5} parent=19 // pred_check
          %p132 = pneg %p31
        $region22: #{mag_block_forward.5} parent=19 // pred_check_branch
          %134 = sbr.rel (%p132) target = $region24
        $region23: #{mag_block_forward.5} parent=19 // pred_region
          %s135 = smul.u32 32, %s11
          %p136 = scmp.lt.s32.totalorder %s135, 63
          %s137 = scalar_select %p136, %s135, 63
          %s138 = smul.addr %s137, 8
          %s139 = scalar_lea.vmem %s0, %s138
          %s140 = smul.u32 32, %s11
        $region24: #{mag_block_forward.5} parent=19 // pred_fallthru
          _
        // Predicated region
        $region25: #{mag_block_forward.5} parent=19 // pred_check
          %p141 = pneg %p57
        $region26: #{mag_block_forward.5} parent=19 // pred_check_branch
          %143 = sbr.rel (%p141) target = $region28
        $region27: #{mag_block_forward.5} parent=19 // pred_region
          %s144 = smul.u32 32, %s11
          %p145 = scmp.lt.s32.totalorder %s144, 63
          %s146 = scalar_select %p145, %s144, 63
          %s147 = smul.addr %s146, 8
          %s148 = scalar_lea.vmem %s1, %s147
          %s149 = smul.u32 32, %s11
        $region28: #{mag_block_forward.5} parent=19 // pred_fallthru
          _
      $region20: #{mag_block_forward.5} parent=5 // pred_fallthru
        _
      %p150 = scmp.le.s32.totalorder 1, %s11
      %p151 = scmp.lt.s32.totalorder %s11, 3
      %p152 = pnand %p150, %p151
      %p153 = pneg %p152
      // Predicated region
      $region29: #{mag_block_forward.5} parent=5 // pred_check
        _
      $region30: #{mag_block_forward.5} parent=5 // pred_check_branch
        %155 = sbr.rel (%p152) target = $region32
      $region31: #{mag_block_forward.5} parent=5 // pred_region
        %s156 = ssub.s32 %s11, 1
        %s157 = smul.u32 32, %s16
        %p158 = scmp.lt.s32.totalorder %s157, 63
        %s159 = scalar_select %p158, %s157, 63
        %s160 = smul.addr %s159, 8
        %s161 = scalar_lea.vmem %s0, %s160
        %p162 = pneg %p37
        %p163 = pneg %p34
        %s164 = smul.u32 32, %s16
        %p165 = scmp.lt.s32.totalorder %s164, 63
        %s166 = scalar_select %p165, %s164, 63
        %s167 = smul.addr %s166, 8
        %s168 = scalar_lea.vmem %s1, %s167
        %p169 = pneg %p63
        %p170 = pneg %p60
        %p171 = pneg %p84
        %p172 = pneg %p81
        %p173 = pneg %p110
        %p174 = pneg %p107
        %s175 = sand.u32 %s97, 1
        %s176 = sand.u32 %s97, 1
        %s177 = smul.addr %s176, 1536
        %s178 = scalar_lea.vmem [#allocation3], %s177
        %s179 = smul.u32 32, %s16
        %p180 = scmp.lt.s32.totalorder %s179, 63
        %s181 = scalar_select %p180, %s179, 63
        %s182 = smul.addr %s181, 8
        %s183 = scalar_lea.vmem %s0, %s182
        %s184 = smul.u32 32, %s16
        %s185 = smul.u32 32, %s16
        %p186 = scmp.lt.s32.totalorder %s185, 63
        %s187 = scalar_select %p186, %s185, 63
        %s188 = smul.addr %s187, 8
        %s189 = scalar_lea.vmem %s1, %s188
        %s190 = smul.u32 32, %s16
        %s191 = smul.u32 32, %s16
        %v192 = vld [vmem:[#allocation2] sm:$0x1]
        %s193 = vtos %v192
        %v194 = vld [vmem:[%s183] sm:$0xff]
        %v195 = vld [vmem:[%s183 + $0x8] sm:$0xff]
        %v196 = vld [vmem:[%s183 + $0x10] sm:$0xff]
        %v197 = vld [vmem:[%s183 + $0x18] sm:$0xff]
        %v198 = vld [vmem:[%s183 + $0x20] sm:$0xff]
        %v199 = vld [vmem:[%s183 + $0x28] sm:$0xff]
        %v200 = vld [vmem:[%s183 + $0x30] sm:$0xff]
        %v201 = vld [vmem:[%s183 + $0x38] sm:$0xff]
        %v202 = vld [vmem:[%s183 + $0x40] sm:$0xff]
        %v203 = vld [vmem:[%s183 + $0x48] sm:$0xff]
        %v204 = vld [vmem:[%s183 + $0x50] sm:$0xff]
        %v205 = vld [vmem:[%s183 + $0x58] sm:$0xff]
        %v206 = vld [vmem:[%s183 + $0x60] sm:$0xff]
        %v207 = vld [vmem:[%s183 + $0x68] sm:$0xff]
        %v208 = vld [vmem:[%s183 + $0x70] sm:$0xff]
        %v209 = vld [vmem:[%s183 + $0x78] sm:$0xff]
        %v210 = vld [vmem:[%s183 + $0x80] sm:$0xff]
        %v211 = vld [vmem:[%s183 + $0x88] sm:$0xff]
        %v212 = vld [vmem:[%s183 + $0x90] sm:$0xff]
        %v213 = vld [vmem:[%s183 + $0x98] sm:$0xff]
        %v214 = vld [vmem:[%s183 + $0xa0] sm:$0xff]
        %v215 = vld [vmem:[%s183 + $0xa8] sm:$0xff]
        %v216 = vld [vmem:[%s183 + $0xb0] sm:$0xff]
        %v217 = vld [vmem:[%s183 + $0xb8] sm:$0xff]
        %v218 = vld [vmem:[%s183 + $0xc0] sm:$0xff]
        %v219 = vld [vmem:[%s183 + $0xc8] sm:$0xff]
        %v220 = vld [vmem:[%s183 + $0xd0] sm:$0xff]
        %v221 = vld [vmem:[%s183 + $0xd8] sm:$0xff]
        %v222 = vld [vmem:[%s183 + $0xe0] sm:$0xff]
        %v223 = vld [vmem:[%s183 + $0xe8] sm:$0xff]
        %v224 = vld [vmem:[%s183 + $0xf0] sm:$0xff]
        %v225 = vld [vmem:[%s183 + $0xf8] sm:$0xff]
        %v226 = vld [vmem:[%s189] sm:$0xff]
        %v227 = vld [vmem:[%s189 + $0x8] sm:$0xff]
        %v228 = vld [vmem:[%s189 + $0x10] sm:$0xff]
        %v229 = vld [vmem:[%s189 + $0x18] sm:$0xff]
        %v230 = vld [vmem:[%s189 + $0x20] sm:$0xff]
        %v231 = vld [vmem:[%s189 + $0x28] sm:$0xff]
        %v232 = vld [vmem:[%s189 + $0x30] sm:$0xff]
        %v233 = vld [vmem:[%s189 + $0x38] sm:$0xff]
        %v234 = vld [vmem:[%s189 + $0x40] sm:$0xff]
        %v235 = vld [vmem:[%s189 + $0x48] sm:$0xff]
        %v236 = vld [vmem:[%s189 + $0x50] sm:$0xff]
        %v237 = vld [vmem:[%s189 + $0x58] sm:$0xff]
        %v238 = vld [vmem:[%s189 + $0x60] sm:$0xff]
        %v239 = vld [vmem:[%s189 + $0x68] sm:$0xff]
        %v240 = vld [vmem:[%s189 + $0x70] sm:$0xff]
        %v241 = vld [vmem:[%s189 + $0x78] sm:$0xff]
        %v242 = vld [vmem:[%s189 + $0x80] sm:$0xff]
        %v243 = vld [vmem:[%s189 + $0x88] sm:$0xff]
        %v244 = vld [vmem:[%s189 + $0x90] sm:$0xff]
        %v245 = vld [vmem:[%s189 + $0x98] sm:$0xff]
        %v246 = vld [vmem:[%s189 + $0xa0] sm:$0xff]
        %v247 = vld [vmem:[%s189 + $0xa8] sm:$0xff]
        %v248 = vld [vmem:[%s189 + $0xb0] sm:$0xff]
        %v249 = vld [vmem:[%s189 + $0xb8] sm:$0xff]
        %v250 = vld [vmem:[%s189 + $0xc0] sm:$0xff]
        %v251 = vld [vmem:[%s189 + $0xc8] sm:$0xff]
        %v252 = vld [vmem:[%s189 + $0xd0] sm:$0xff]
        %v253 = vld [vmem:[%s189 + $0xd8] sm:$0xff]
        %v254 = vld [vmem:[%s189 + $0xe0] sm:$0xff]
        %v255 = vld [vmem:[%s189 + $0xe8] sm:$0xff]
        %v256 = vld [vmem:[%s189 + $0xf0] sm:$0xff]
        %v257 = vld [vmem:[%s189 + $0xf8] sm:$0xff]
        %v258 = vstv %s193
        %v259 = vmul.f32 %v226, %v258
        %v260 = vmul.f32 %v227, %v258
        %v261 = vmul.f32 %v228, %v258
        %v262 = vmul.f32 %v229, %v258
        %v263 = vmul.f32 %v230, %v258
        %v264 = vmul.f32 %v231, %v258
        %v265 = vmul.f32 %v232, %v258
        %v266 = vmul.f32 %v233, %v258
        %v267 = vmul.f32 %v234, %v258
        %v268 = vmul.f32 %v235, %v258
        %v269 = vmul.f32 %v236, %v258
        %v270 = vmul.f32 %v237, %v258
        %v271 = vmul.f32 %v238, %v258
        %v272 = vmul.f32 %v239, %v258
        %v273 = vmul.f32 %v240, %v258
        %v274 = vmul.f32 %v241, %v258
        %v275 = vmul.f32 %v242, %v258
        %v276 = vmul.f32 %v243, %v258
        %v277 = vmul.f32 %v244, %v258
        %v278 = vmul.f32 %v245, %v258
        %v279 = vmul.f32 %v246, %v258
        %v280 = vmul.f32 %v247, %v258
        %v281 = vmul.f32 %v248, %v258
        %v282 = vmul.f32 %v249, %v258
        %v283 = vmul.f32 %v250, %v258
        %v284 = vmul.f32 %v251, %v258
        %v285 = vmul.f32 %v252, %v258
        %v286 = vmul.f32 %v253, %v258
        %v287 = vmul.f32 %v254, %v258
        %v288 = vmul.f32 %v255, %v258
        %v289 = vmul.f32 %v256, %v258
        %v290 = vmul.f32 %v257, %v258
        %v291 = vmul.f32 %v194, %v258
        %v292 = vmul.f32 %v195, %v258
        %v293 = vmul.f32 %v196, %v258
        %v294 = vmul.f32 %v197, %v258
        %v295 = vmul.f32 %v198, %v258
        %v296 = vmul.f32 %v199, %v258
        %v297 = vmul.f32 %v200, %v258
        %v298 = vmul.f32 %v201, %v258
        %v299 = vmul.f32 %v202, %v258
        %v300 = vmul.f32 %v203, %v258
        %v301 = vmul.f32 %v204, %v258
        %v302 = vmul.f32 %v205, %v258
        %v303 = vmul.f32 %v206, %v258
        %v304 = vmul.f32 %v207, %v258
        %v305 = vmul.f32 %v208, %v258
        %v306 = vmul.f32 %v209, %v258
        %v307 = vmul.f32 %v210, %v258
        %v308 = vmul.f32 %v211, %v258
        %v309 = vmul.f32 %v212, %v258
        %v310 = vmul.f32 %v213, %v258
        %v311 = vmul.f32 %v214, %v258
        %v312 = vmul.f32 %v215, %v258
        %v313 = vmul.f32 %v216, %v258
        %v314 = vmul.f32 %v217, %v258
        %v315 = vmul.f32 %v218, %v258
        %v316 = vmul.f32 %v219, %v258
        %v317 = vmul.f32 %v220, %v258
        %v318 = vmul.f32 %v221, %v258
        %v319 = vmul.f32 %v222, %v258
        %v320 = vmul.f32 %v223, %v258
        %v321 = vmul.f32 %v224, %v258
        %v322 = vmul.f32 %v225, %v258
        %vm323 = vcmask 64512
        %324 = vst.msk [vmem:[%s178] sm:$0xff] %vm323, %v291
        %325 = vst.msk [vmem:[%s178 + $0x8] sm:$0xff] %vm323, %v292
        %326 = vst.msk [vmem:[%s178 + $0x10] sm:$0xff] %vm323, %v293
        %327 = vst.msk [vmem:[%s178 + $0x18] sm:$0xff] %vm323, %v294
        %328 = vst.msk [vmem:[%s178 + $0x20] sm:$0xff] %vm323, %v295
        %329 = vst.msk [vmem:[%s178 + $0x28] sm:$0xff] %vm323, %v296
        %330 = vst.msk [vmem:[%s178 + $0x30] sm:$0xff] %vm323, %v297
        %331 = vst.msk [vmem:[%s178 + $0x38] sm:$0xff] %vm323, %v298
        %332 = vst.msk [vmem:[%s178 + $0x40] sm:$0xff] %vm323, %v299
        %333 = vst.msk [vmem:[%s178 + $0x48] sm:$0xff] %vm323, %v300
        %334 = vst.msk [vmem:[%s178 + $0x50] sm:$0xff] %vm323, %v301
        %335 = vst.msk [vmem:[%s178 + $0x58] sm:$0xff] %vm323, %v302
        %336 = vst.msk [vmem:[%s178 + $0x60] sm:$0xff] %vm323, %v303
        %337 = vst.msk [vmem:[%s178 + $0x68] sm:$0xff] %vm323, %v304
        %338 = vst.msk [vmem:[%s178 + $0x70] sm:$0xff] %vm323, %v305
        %339 = vst.msk [vmem:[%s178 + $0x78] sm:$0xff] %vm323, %v306
        %340 = vst.msk [vmem:[%s178 + $0x80] sm:$0xff] %vm323, %v307
        %341 = vst.msk [vmem:[%s178 + $0x88] sm:$0xff] %vm323, %v308
        %342 = vst.msk [vmem:[%s178 + $0x90] sm:$0xff] %vm323, %v309
        %343 = vst.msk [vmem:[%s178 + $0x98] sm:$0xff] %vm323, %v310
        %344 = vst.msk [vmem:[%s178 + $0xa0] sm:$0xff] %vm323, %v311
        %345 = vst.msk [vmem:[%s178 + $0xa8] sm:$0xff] %vm323, %v312
        %346 = vst.msk [vmem:[%s178 + $0xb0] sm:$0xff] %vm323, %v313
        %347 = vst.msk [vmem:[%s178 + $0xb8] sm:$0xff] %vm323, %v314
        %348 = vst.msk [vmem:[%s178 + $0xc0] sm:$0xff] %vm323, %v315
        %349 = vst.msk [vmem:[%s178 + $0xc8] sm:$0xff] %vm323, %v316
        %350 = vst.msk [vmem:[%s178 + $0xd0] sm:$0xff] %vm323, %v317
        %351 = vst.msk [vmem:[%s178 + $0xd8] sm:$0xff] %vm323, %v318
        %352 = vst.msk [vmem:[%s178 + $0xe0] sm:$0xff] %vm323, %v319
        %353 = vst.msk [vmem:[%s178 + $0xe8] sm:$0xff] %vm323, %v320
        %354 = vst.msk [vmem:[%s178 + $0xf0] sm:$0xff] %vm323, %v321
        %355 = vst.msk [vmem:[%s178 + $0xf8] sm:$0xff] %vm323, %v322
        %388 = vrot.lane.b32.xlu0 %v291, 120
        %v389 = vpop.permute.xlu0 %388
        %390 = vrot.lane.b32.xlu0 %v292, 120
        %v391 = vpop.permute.xlu0 %390
        %392 = vrot.lane.b32.xlu0 %v293, 120
        %v393 = vpop.permute.xlu0 %392
        %394 = vrot.lane.b32.xlu0 %v294, 120
        %v395 = vpop.permute.xlu0 %394
        %396 = vrot.lane.b32.xlu0 %v295, 120
        %v397 = vpop.permute.xlu0 %396
        %398 = vrot.lane.b32.xlu0 %v296, 120
        %v399 = vpop.permute.xlu0 %398
        %400 = vrot.lane.b32.xlu0 %v297, 120
        %v401 = vpop.permute.xlu0 %400
        %402 = vrot.lane.b32.xlu0 %v298, 120
        %v403 = vpop.permute.xlu0 %402
        %404 = vrot.lane.b32.xlu0 %v299, 120
        %v405 = vpop.permute.xlu0 %404
        %406 = vrot.lane.b32.xlu0 %v300, 120
        %v407 = vpop.permute.xlu0 %406
        %408 = vrot.lane.b32.xlu0 %v301, 120
        %v409 = vpop.permute.xlu0 %408
        %410 = vrot.lane.b32.xlu0 %v302, 120
        %v411 = vpop.permute.xlu0 %410
        %412 = vrot.lane.b32.xlu0 %v303, 120
        %v413 = vpop.permute.xlu0 %412
        %414 = vrot.lane.b32.xlu0 %v304, 120
        %v415 = vpop.permute.xlu0 %414
        %416 = vrot.lane.b32.xlu0 %v305, 120
        %v417 = vpop.permute.xlu0 %416
        %418 = vrot.lane.b32.xlu0 %v306, 120
        %v419 = vpop.permute.xlu0 %418
        %420 = vrot.lane.b32.xlu0 %v307, 120
        %v421 = vpop.permute.xlu0 %420
        %422 = vrot.lane.b32.xlu0 %v308, 120
        %v423 = vpop.permute.xlu0 %422
        %424 = vrot.lane.b32.xlu0 %v309, 120
        %v425 = vpop.permute.xlu0 %424
        %426 = vrot.lane.b32.xlu0 %v310, 120
        %v427 = vpop.permute.xlu0 %426
        %428 = vrot.lane.b32.xlu0 %v311, 120
        %v429 = vpop.permute.xlu0 %428
        %430 = vrot.lane.b32.xlu0 %v312, 120
        %v431 = vpop.permute.xlu0 %430
        %432 = vrot.lane.b32.xlu0 %v313, 120
        %v433 = vpop.permute.xlu0 %432
        %434 = vrot.lane.b32.xlu0 %v314, 120
        %v435 = vpop.permute.xlu0 %434
        %436 = vrot.lane.b32.xlu0 %v315, 120
        %v437 = vpop.permute.xlu0 %436
        %438 = vrot.lane.b32.xlu0 %v316, 120
        %v439 = vpop.permute.xlu0 %438
        %440 = vrot.lane.b32.xlu0 %v317, 120
        %v441 = vpop.permute.xlu0 %440
        %442 = vrot.lane.b32.xlu0 %v318, 120
        %v443 = vpop.permute.xlu0 %442
        %444 = vrot.lane.b32.xlu0 %v319, 120
        %v445 = vpop.permute.xlu0 %444
        %446 = vrot.lane.b32.xlu0 %v320, 120
        %v447 = vpop.permute.xlu0 %446
        %448 = vrot.lane.b32.xlu0 %v321, 120
        %v449 = vpop.permute.xlu0 %448
        %450 = vrot.lane.b32.xlu0 %v322, 120
        %v451 = vpop.permute.xlu0 %450
        %s484 = scalar_lea.vmem %s178, 256 [#allocation3]
        %485 = vst.msk [vmem:[%s484] sm:$0xff] %vm323, %v389
        %486 = vst.msk [vmem:[%s484 + $0x8] sm:$0xff] %vm323, %v391
        %487 = vst.msk [vmem:[%s484 + $0x10] sm:$0xff] %vm323, %v393
        %488 = vst.msk [vmem:[%s484 + $0x18] sm:$0xff] %vm323, %v395
        %489 = vst.msk [vmem:[%s484 + $0x20] sm:$0xff] %vm323, %v397
        %490 = vst.msk [vmem:[%s484 + $0x28] sm:$0xff] %vm323, %v399
        %491 = vst.msk [vmem:[%s484 + $0x30] sm:$0xff] %vm323, %v401
        %492 = vst.msk [vmem:[%s484 + $0x38] sm:$0xff] %vm323, %v403
        %493 = vst.msk [vmem:[%s484 + $0x40] sm:$0xff] %vm323, %v405
        %494 = vst.msk [vmem:[%s484 + $0x48] sm:$0xff] %vm323, %v407
        %495 = vst.msk [vmem:[%s484 + $0x50] sm:$0xff] %vm323, %v409
        %496 = vst.msk [vmem:[%s484 + $0x58] sm:$0xff] %vm323, %v411
        %497 = vst.msk [vmem:[%s484 + $0x60] sm:$0xff] %vm323, %v413
        %498 = vst.msk [vmem:[%s484 + $0x68] sm:$0xff] %vm323, %v415
        %499 = vst.msk [vmem:[%s484 + $0x70] sm:$0xff] %vm323, %v417
        %500 = vst.msk [vmem:[%s484 + $0x78] sm:$0xff] %vm323, %v419
        %501 = vst.msk [vmem:[%s484 + $0x80] sm:$0xff] %vm323, %v421
        %502 = vst.msk [vmem:[%s484 + $0x88] sm:$0xff] %vm323, %v423
        %503 = vst.msk [vmem:[%s484 + $0x90] sm:$0xff] %vm323, %v425
        %504 = vst.msk [vmem:[%s484 + $0x98] sm:$0xff] %vm323, %v427
        %505 = vst.msk [vmem:[%s484 + $0xa0] sm:$0xff] %vm323, %v429
        %506 = vst.msk [vmem:[%s484 + $0xa8] sm:$0xff] %vm323, %v431
        %507 = vst.msk [vmem:[%s484 + $0xb0] sm:$0xff] %vm323, %v433
        %508 = vst.msk [vmem:[%s484 + $0xb8] sm:$0xff] %vm323, %v435
        %509 = vst.msk [vmem:[%s484 + $0xc0] sm:$0xff] %vm323, %v437
        %510 = vst.msk [vmem:[%s484 + $0xc8] sm:$0xff] %vm323, %v439
        %511 = vst.msk [vmem:[%s484 + $0xd0] sm:$0xff] %vm323, %v441
        %512 = vst.msk [vmem:[%s484 + $0xd8] sm:$0xff] %vm323, %v443
        %513 = vst.msk [vmem:[%s484 + $0xe0] sm:$0xff] %vm323, %v445
        %514 = vst.msk [vmem:[%s484 + $0xe8] sm:$0xff] %vm323, %v447
        %515 = vst.msk [vmem:[%s484 + $0xf0] sm:$0xff] %vm323, %v449
        %516 = vst.msk [vmem:[%s484 + $0xf8] sm:$0xff] %vm323, %v451
        %s517 = scalar_lea.vmem %s178, 512 [#allocation3]
        %518 = vst.msk [vmem:[%s517] sm:$0xff] %vm323, %v259
        %519 = vst.msk [vmem:[%s517 + $0x8] sm:$0xff] %vm323, %v260
        %520 = vst.msk [vmem:[%s517 + $0x10] sm:$0xff] %vm323, %v261
        %521 = vst.msk [vmem:[%s517 + $0x18] sm:$0xff] %vm323, %v262
        %522 = vst.msk [vmem:[%s517 + $0x20] sm:$0xff] %vm323, %v263
        %523 = vst.msk [vmem:[%s517 + $0x28] sm:$0xff] %vm323, %v264
        %524 = vst.msk [vmem:[%s517 + $0x30] sm:$0xff] %vm323, %v265
        %525 = vst.msk [vmem:[%s517 + $0x38] sm:$0xff] %vm323, %v266
        %526 = vst.msk [vmem:[%s517 + $0x40] sm:$0xff] %vm323, %v267
        %527 = vst.msk [vmem:[%s517 + $0x48] sm:$0xff] %vm323, %v268
        %528 = vst.msk [vmem:[%s517 + $0x50] sm:$0xff] %vm323, %v269
        %529 = vst.msk [vmem:[%s517 + $0x58] sm:$0xff] %vm323, %v270
        %530 = vst.msk [vmem:[%s517 + $0x60] sm:$0xff] %vm323, %v271
        %531 = vst.msk [vmem:[%s517 + $0x68] sm:$0xff] %vm323, %v272
        %532 = vst.msk [vmem:[%s517 + $0x70] sm:$0xff] %vm323, %v273
        %533 = vst.msk [vmem:[%s517 + $0x78] sm:$0xff] %vm323, %v274
        %534 = vst.msk [vmem:[%s517 + $0x80] sm:$0xff] %vm323, %v275
        %535 = vst.msk [vmem:[%s517 + $0x88] sm:$0xff] %vm323, %v276
        %536 = vst.msk [vmem:[%s517 + $0x90] sm:$0xff] %vm323, %v277
        %537 = vst.msk [vmem:[%s517 + $0x98] sm:$0xff] %vm323, %v278
        %538 = vst.msk [vmem:[%s517 + $0xa0] sm:$0xff] %vm323, %v279
        %539 = vst.msk [vmem:[%s517 + $0xa8] sm:$0xff] %vm323, %v280
        %540 = vst.msk [vmem:[%s517 + $0xb0] sm:$0xff] %vm323, %v281
        %541 = vst.msk [vmem:[%s517 + $0xb8] sm:$0xff] %vm323, %v282
        %542 = vst.msk [vmem:[%s517 + $0xc0] sm:$0xff] %vm323, %v283
        %543 = vst.msk [vmem:[%s517 + $0xc8] sm:$0xff] %vm323, %v284
        %544 = vst.msk [vmem:[%s517 + $0xd0] sm:$0xff] %vm323, %v285
        %545 = vst.msk [vmem:[%s517 + $0xd8] sm:$0xff] %vm323, %v286
        %546 = vst.msk [vmem:[%s517 + $0xe0] sm:$0xff] %vm323, %v287
        %547 = vst.msk [vmem:[%s517 + $0xe8] sm:$0xff] %vm323, %v288
        %548 = vst.msk [vmem:[%s517 + $0xf0] sm:$0xff] %vm323, %v289
        %549 = vst.msk [vmem:[%s517 + $0xf8] sm:$0xff] %vm323, %v290
        %582 = vrot.lane.b32.xlu0 %v259, 120
        %v583 = vpop.permute.xlu0 %582
        %584 = vrot.lane.b32.xlu0 %v260, 120
        %v585 = vpop.permute.xlu0 %584
        %586 = vrot.lane.b32.xlu0 %v261, 120
        %v587 = vpop.permute.xlu0 %586
        %588 = vrot.lane.b32.xlu0 %v262, 120
        %v589 = vpop.permute.xlu0 %588
        %590 = vrot.lane.b32.xlu0 %v263, 120
        %v591 = vpop.permute.xlu0 %590
        %592 = vrot.lane.b32.xlu0 %v264, 120
        %v593 = vpop.permute.xlu0 %592
        %594 = vrot.lane.b32.xlu0 %v265, 120
        %v595 = vpop.permute.xlu0 %594
        %596 = vrot.lane.b32.xlu0 %v266, 120
        %v597 = vpop.permute.xlu0 %596
        %598 = vrot.lane.b32.xlu0 %v267, 120
        %v599 = vpop.permute.xlu0 %598
        %600 = vrot.lane.b32.xlu0 %v268, 120
        %v601 = vpop.permute.xlu0 %600
        %602 = vrot.lane.b32.xlu0 %v269, 120
        %v603 = vpop.permute.xlu0 %602
        %604 = vrot.lane.b32.xlu0 %v270, 120
        %v605 = vpop.permute.xlu0 %604
        %606 = vrot.lane.b32.xlu0 %v271, 120
        %v607 = vpop.permute.xlu0 %606
        %608 = vrot.lane.b32.xlu0 %v272, 120
        %v609 = vpop.permute.xlu0 %608
        %610 = vrot.lane.b32.xlu0 %v273, 120
        %v611 = vpop.permute.xlu0 %610
        %612 = vrot.lane.b32.xlu0 %v274, 120
        %v613 = vpop.permute.xlu0 %612
        %614 = vrot.lane.b32.xlu0 %v275, 120
        %v615 = vpop.permute.xlu0 %614
        %616 = vrot.lane.b32.xlu0 %v276, 120
        %v617 = vpop.permute.xlu0 %616
        %618 = vrot.lane.b32.xlu0 %v277, 120
        %v619 = vpop.permute.xlu0 %618
        %620 = vrot.lane.b32.xlu0 %v278, 120
        %v621 = vpop.permute.xlu0 %620
        %622 = vrot.lane.b32.xlu0 %v279, 120
        %v623 = vpop.permute.xlu0 %622
        %624 = vrot.lane.b32.xlu0 %v280, 120
        %v625 = vpop.permute.xlu0 %624
        %626 = vrot.lane.b32.xlu0 %v281, 120
        %v627 = vpop.permute.xlu0 %626
        %628 = vrot.lane.b32.xlu0 %v282, 120
        %v629 = vpop.permute.xlu0 %628
        %630 = vrot.lane.b32.xlu0 %v283, 120
        %v631 = vpop.permute.xlu0 %630
        %632 = vrot.lane.b32.xlu0 %v284, 120
        %v633 = vpop.permute.xlu0 %632
        %634 = vrot.lane.b32.xlu0 %v285, 120
        %v635 = vpop.permute.xlu0 %634
        %636 = vrot.lane.b32.xlu0 %v286, 120
        %v637 = vpop.permute.xlu0 %636
        %638 = vrot.lane.b32.xlu0 %v287, 120
        %v639 = vpop.permute.xlu0 %638
        %640 = vrot.lane.b32.xlu0 %v288, 120
        %v641 = vpop.permute.xlu0 %640
        %642 = vrot.lane.b32.xlu0 %v289, 120
        %v643 = vpop.permute.xlu0 %642
        %644 = vrot.lane.b32.xlu0 %v290, 120
        %v645 = vpop.permute.xlu0 %644
        %s678 = scalar_lea.vmem %s178, 768 [#allocation3]
        %679 = vst.msk [vmem:[%s678] sm:$0xff] %vm323, %v583
        %680 = vst.msk [vmem:[%s678 + $0x8] sm:$0xff] %vm323, %v585
        %681 = vst.msk [vmem:[%s678 + $0x10] sm:$0xff] %vm323, %v587
        %682 = vst.msk [vmem:[%s678 + $0x18] sm:$0xff] %vm323, %v589
        %683 = vst.msk [vmem:[%s678 + $0x20] sm:$0xff] %vm323, %v591
        %684 = vst.msk [vmem:[%s678 + $0x28] sm:$0xff] %vm323, %v593
        %685 = vst.msk [vmem:[%s678 + $0x30] sm:$0xff] %vm323, %v595
        %686 = vst.msk [vmem:[%s678 + $0x38] sm:$0xff] %vm323, %v597
        %687 = vst.msk [vmem:[%s678 + $0x40] sm:$0xff] %vm323, %v599
        %688 = vst.msk [vmem:[%s678 + $0x48] sm:$0xff] %vm323, %v601
        %689 = vst.msk [vmem:[%s678 + $0x50] sm:$0xff] %vm323, %v603
        %690 = vst.msk [vmem:[%s678 + $0x58] sm:$0xff] %vm323, %v605
        %691 = vst.msk [vmem:[%s678 + $0x60] sm:$0xff] %vm323, %v607
        %692 = vst.msk [vmem:[%s678 + $0x68] sm:$0xff] %vm323, %v609
        %693 = vst.msk [vmem:[%s678 + $0x70] sm:$0xff] %vm323, %v611
        %694 = vst.msk [vmem:[%s678 + $0x78] sm:$0xff] %vm323, %v613
        %695 = vst.msk [vmem:[%s678 + $0x80] sm:$0xff] %vm323, %v615
        %696 = vst.msk [vmem:[%s678 + $0x88] sm:$0xff] %vm323, %v617
        %697 = vst.msk [vmem:[%s678 + $0x90] sm:$0xff] %vm323, %v619
        %698 = vst.msk [vmem:[%s678 + $0x98] sm:$0xff] %vm323, %v621
        %699 = vst.msk [vmem:[%s678 + $0xa0] sm:$0xff] %vm323, %v623
        %700 = vst.msk [vmem:[%s678 + $0xa8] sm:$0xff] %vm323, %v625
        %701 = vst.msk [vmem:[%s678 + $0xb0] sm:$0xff] %vm323, %v627
        %702 = vst.msk [vmem:[%s678 + $0xb8] sm:$0xff] %vm323, %v629
        %703 = vst.msk [vmem:[%s678 + $0xc0] sm:$0xff] %vm323, %v631
        %704 = vst.msk [vmem:[%s678 + $0xc8] sm:$0xff] %vm323, %v633
        %705 = vst.msk [vmem:[%s678 + $0xd0] sm:$0xff] %vm323, %v635
        %706 = vst.msk [vmem:[%s678 + $0xd8] sm:$0xff] %vm323, %v637
        %707 = vst.msk [vmem:[%s678 + $0xe0] sm:$0xff] %vm323, %v639
        %708 = vst.msk [vmem:[%s678 + $0xe8] sm:$0xff] %vm323, %v641
        %709 = vst.msk [vmem:[%s678 + $0xf0] sm:$0xff] %vm323, %v643
        %710 = vst.msk [vmem:[%s678 + $0xf8] sm:$0xff] %vm323, %v645
        %s711 = scalar_lea.vmem %s178, 1024 [#allocation3]
        %712 = vst.msk [vmem:[%s711] sm:$0xff] %vm323, %v259
        %713 = vst.msk [vmem:[%s711 + $0x8] sm:$0xff] %vm323, %v260
        %714 = vst.msk [vmem:[%s711 + $0x10] sm:$0xff] %vm323, %v261
        %715 = vst.msk [vmem:[%s711 + $0x18] sm:$0xff] %vm323, %v262
        %716 = vst.msk [vmem:[%s711 + $0x20] sm:$0xff] %vm323, %v263
        %717 = vst.msk [vmem:[%s711 + $0x28] sm:$0xff] %vm323, %v264
        %718 = vst.msk [vmem:[%s711 + $0x30] sm:$0xff] %vm323, %v265
        %719 = vst.msk [vmem:[%s711 + $0x38] sm:$0xff] %vm323, %v266
        %720 = vst.msk [vmem:[%s711 + $0x40] sm:$0xff] %vm323, %v267
        %721 = vst.msk [vmem:[%s711 + $0x48] sm:$0xff] %vm323, %v268
        %722 = vst.msk [vmem:[%s711 + $0x50] sm:$0xff] %vm323, %v269
        %723 = vst.msk [vmem:[%s711 + $0x58] sm:$0xff] %vm323, %v270
        %724 = vst.msk [vmem:[%s711 + $0x60] sm:$0xff] %vm323, %v271
        %725 = vst.msk [vmem:[%s711 + $0x68] sm:$0xff] %vm323, %v272
        %726 = vst.msk [vmem:[%s711 + $0x70] sm:$0xff] %vm323, %v273
        %727 = vst.msk [vmem:[%s711 + $0x78] sm:$0xff] %vm323, %v274
        %728 = vst.msk [vmem:[%s711 + $0x80] sm:$0xff] %vm323, %v275
        %729 = vst.msk [vmem:[%s711 + $0x88] sm:$0xff] %vm323, %v276
        %730 = vst.msk [vmem:[%s711 + $0x90] sm:$0xff] %vm323, %v277
        %731 = vst.msk [vmem:[%s711 + $0x98] sm:$0xff] %vm323, %v278
        %732 = vst.msk [vmem:[%s711 + $0xa0] sm:$0xff] %vm323, %v279
        %733 = vst.msk [vmem:[%s711 + $0xa8] sm:$0xff] %vm323, %v280
        %734 = vst.msk [vmem:[%s711 + $0xb0] sm:$0xff] %vm323, %v281
        %735 = vst.msk [vmem:[%s711 + $0xb8] sm:$0xff] %vm323, %v282
        %736 = vst.msk [vmem:[%s711 + $0xc0] sm:$0xff] %vm323, %v283
        %737 = vst.msk [vmem:[%s711 + $0xc8] sm:$0xff] %vm323, %v284
        %738 = vst.msk [vmem:[%s711 + $0xd0] sm:$0xff] %vm323, %v285
        %739 = vst.msk [vmem:[%s711 + $0xd8] sm:$0xff] %vm323, %v286
        %740 = vst.msk [vmem:[%s711 + $0xe0] sm:$0xff] %vm323, %v287
        %741 = vst.msk [vmem:[%s711 + $0xe8] sm:$0xff] %vm323, %v288
        %742 = vst.msk [vmem:[%s711 + $0xf0] sm:$0xff] %vm323, %v289
        %743 = vst.msk [vmem:[%s711 + $0xf8] sm:$0xff] %vm323, %v290
        %744 = vrot.lane.b32.xlu0 %v259, 112
        %v745 = vpop.permute.xlu0 %744
        %746 = vrot.lane.b32.xlu0 %v260, 112
        %v747 = vpop.permute.xlu0 %746
        %748 = vrot.lane.b32.xlu0 %v261, 112
        %v749 = vpop.permute.xlu0 %748
        %750 = vrot.lane.b32.xlu0 %v262, 112
        %v751 = vpop.permute.xlu0 %750
        %752 = vrot.lane.b32.xlu0 %v263, 112
        %v753 = vpop.permute.xlu0 %752
        %754 = vrot.lane.b32.xlu0 %v264, 112
        %v755 = vpop.permute.xlu0 %754
        %756 = vrot.lane.b32.xlu0 %v265, 112
        %v757 = vpop.permute.xlu0 %756
        %758 = vrot.lane.b32.xlu0 %v266, 112
        %v759 = vpop.permute.xlu0 %758
        %760 = vrot.lane.b32.xlu0 %v267, 112
        %v761 = vpop.permute.xlu0 %760
        %762 = vrot.lane.b32.xlu0 %v268, 112
        %v763 = vpop.permute.xlu0 %762
        %764 = vrot.lane.b32.xlu0 %v269, 112
        %v765 = vpop.permute.xlu0 %764
        %766 = vrot.lane.b32.xlu0 %v270, 112
        %v767 = vpop.permute.xlu0 %766
        %768 = vrot.lane.b32.xlu0 %v271, 112
        %v769 = vpop.permute.xlu0 %768
        %770 = vrot.lane.b32.xlu0 %v272, 112
        %v771 = vpop.permute.xlu0 %770
        %772 = vrot.lane.b32.xlu0 %v273, 112
        %v773 = vpop.permute.xlu0 %772
        %774 = vrot.lane.b32.xlu0 %v274, 112
        %v775 = vpop.permute.xlu0 %774
        %776 = vrot.lane.b32.xlu0 %v275, 112
        %v777 = vpop.permute.xlu0 %776
        %778 = vrot.lane.b32.xlu0 %v276, 112
        %v779 = vpop.permute.xlu0 %778
        %780 = vrot.lane.b32.xlu0 %v277, 112
        %v781 = vpop.permute.xlu0 %780
        %782 = vrot.lane.b32.xlu0 %v278, 112
        %v783 = vpop.permute.xlu0 %782
        %784 = vrot.lane.b32.xlu0 %v279, 112
        %v785 = vpop.permute.xlu0 %784
        %786 = vrot.lane.b32.xlu0 %v280, 112
        %v787 = vpop.permute.xlu0 %786
        %788 = vrot.lane.b32.xlu0 %v281, 112
        %v789 = vpop.permute.xlu0 %788
        %790 = vrot.lane.b32.xlu0 %v282, 112
        %v791 = vpop.permute.xlu0 %790
        %792 = vrot.lane.b32.xlu0 %v283, 112
        %v793 = vpop.permute.xlu0 %792
        %794 = vrot.lane.b32.xlu0 %v284, 112
        %v795 = vpop.permute.xlu0 %794
        %796 = vrot.lane.b32.xlu0 %v285, 112
        %v797 = vpop.permute.xlu0 %796
        %798 = vrot.lane.b32.xlu0 %v286, 112
        %v799 = vpop.permute.xlu0 %798
        %800 = vrot.lane.b32.xlu0 %v287, 112
        %v801 = vpop.permute.xlu0 %800
        %802 = vrot.lane.b32.xlu0 %v288, 112
        %v803 = vpop.permute.xlu0 %802
        %804 = vrot.lane.b32.xlu0 %v289, 112
        %v805 = vpop.permute.xlu0 %804
        %806 = vrot.lane.b32.xlu0 %v290, 112
        %v807 = vpop.permute.xlu0 %806
        %s840 = scalar_lea.vmem %s178, 1280 [#allocation3]
        %841 = vst.msk [vmem:[%s840] sm:$0xff] %vm323, %v745
        %842 = vst.msk [vmem:[%s840 + $0x8] sm:$0xff] %vm323, %v747
        %843 = vst.msk [vmem:[%s840 + $0x10] sm:$0xff] %vm323, %v749
        %844 = vst.msk [vmem:[%s840 + $0x18] sm:$0xff] %vm323, %v751
        %845 = vst.msk [vmem:[%s840 + $0x20] sm:$0xff] %vm323, %v753
        %846 = vst.msk [vmem:[%s840 + $0x28] sm:$0xff] %vm323, %v755
        %847 = vst.msk [vmem:[%s840 + $0x30] sm:$0xff] %vm323, %v757
        %848 = vst.msk [vmem:[%s840 + $0x38] sm:$0xff] %vm323, %v759
        %849 = vst.msk [vmem:[%s840 + $0x40] sm:$0xff] %vm323, %v761
        %850 = vst.msk [vmem:[%s840 + $0x48] sm:$0xff] %vm323, %v763
        %851 = vst.msk [vmem:[%s840 + $0x50] sm:$0xff] %vm323, %v765
        %852 = vst.msk [vmem:[%s840 + $0x58] sm:$0xff] %vm323, %v767
        %853 = vst.msk [vmem:[%s840 + $0x60] sm:$0xff] %vm323, %v769
        %854 = vst.msk [vmem:[%s840 + $0x68] sm:$0xff] %vm323, %v771
        %855 = vst.msk [vmem:[%s840 + $0x70] sm:$0xff] %vm323, %v773
        %856 = vst.msk [vmem:[%s840 + $0x78] sm:$0xff] %vm323, %v775
        %857 = vst.msk [vmem:[%s840 + $0x80] sm:$0xff] %vm323, %v777
        %858 = vst.msk [vmem:[%s840 + $0x88] sm:$0xff] %vm323, %v779
        %859 = vst.msk [vmem:[%s840 + $0x90] sm:$0xff] %vm323, %v781
        %860 = vst.msk [vmem:[%s840 + $0x98] sm:$0xff] %vm323, %v783
        %861 = vst.msk [vmem:[%s840 + $0xa0] sm:$0xff] %vm323, %v785
        %862 = vst.msk [vmem:[%s840 + $0xa8] sm:$0xff] %vm323, %v787
        %863 = vst.msk [vmem:[%s840 + $0xb0] sm:$0xff] %vm323, %v789
        %864 = vst.msk [vmem:[%s840 + $0xb8] sm:$0xff] %vm323, %v791
        %865 = vst.msk [vmem:[%s840 + $0xc0] sm:$0xff] %vm323, %v793
        %866 = vst.msk [vmem:[%s840 + $0xc8] sm:$0xff] %vm323, %v795
        %867 = vst.msk [vmem:[%s840 + $0xd0] sm:$0xff] %vm323, %v797
        %868 = vst.msk [vmem:[%s840 + $0xd8] sm:$0xff] %vm323, %v799
        %869 = vst.msk [vmem:[%s840 + $0xe0] sm:$0xff] %vm323, %v801
        %870 = vst.msk [vmem:[%s840 + $0xe8] sm:$0xff] %vm323, %v803
        %871 = vst.msk [vmem:[%s840 + $0xf0] sm:$0xff] %vm323, %v805
        %872 = vst.msk [vmem:[%s840 + $0xf8] sm:$0xff] %vm323, %v807
        %s873 = sand.u32 %s97, 1
        %s874 = sand.u32 %s97, 1
        %s875 = smul.addr %s874, 1536
        %s876 = scalar_lea.vmem [#allocation3], %s875
        // Predicated region
        $region33: #{mag_block_forward.5} parent=31 // pred_check
          %p877 = pneg %p107
        $region34: #{mag_block_forward.5} parent=31 // pred_check_branch
          %879 = sbr.rel (%p877) target = $region36
        $region35: #{mag_block_forward.5} parent=31 // pred_region
          %s880 = smul.u32 32, %s16
          %s881 = smul.addr %s880, 8
          %s882 = scalar_lea.vmem %s3, %s881
          // Predicated region
          $region37: #{mag_block_forward.5} parent=35 // pred_check
            _
          $region38: #{mag_block_forward.5} parent=35 // pred_check_branch
            %884 = sbr.rel (0) target = $region40
          $region39: #{mag_block_forward.5} parent=35 // pred_region
            // Predicated region
            $region41: #{mag_block_forward.5} parent=39 // pred_check
              _
            $region42: #{mag_block_forward.5} parent=39 // pred_check_branch
              %886 = sbr.rel (0) target = $region44
            $region43: #{mag_block_forward.5} parent=39 // pred_region
              // Predicated region
              $region56: #{mag_block_forward.5} parent=43 // pred_check
                _
              $region57: #{mag_block_forward.5} parent=43 // pred_check_branch
                %1284 = sbr.rel (0) target = $region59
              $region58: #{mag_block_forward.5} parent=43 // pred_region
                loop: start=0, step=1, limit=1
                $region60: #{mag_block_forward.5} parent=58 // loop_pre_header
                  _
                $region61: #{mag_block_forward.5} parent=58 // loop_header
                  %s1286 = sphi 0, %s1290
                  %p1287 = scmp.ge.s32.totalorder %s1286, 1
                  %s1291 = sphi %s876, %s876
                  %s1292 = sphi %s882, %s882
                $region62: #{mag_block_forward.5} parent=58 // loop_header_branch
                  %1289 = sbr.rel (%p1287) target = $region66
                $region63: #{mag_block_forward.5} parent=58 // loop_body
                  %v1293 = vld [vmem:[%s1291] sm:$0xff]
                  %1294 = vst [vmem:[%s1292] sm:$0xff] %v1293
                  %v1295 = vld [vmem:[%s1291 + $0x8] sm:$0xff]
                  %1296 = vst [vmem:[%s1292 + $0x8] sm:$0xff] %v1295
                  %v1297 = vld [vmem:[%s1291 + $0x10] sm:$0xff]
                  %1298 = vst [vmem:[%s1292 + $0x10] sm:$0xff] %v1297
                  %v1299 = vld [vmem:[%s1291 + $0x18] sm:$0xff]
                  %1300 = vst [vmem:[%s1292 + $0x18] sm:$0xff] %v1299
                  %v1301 = vld [vmem:[%s1291 + $0x20] sm:$0xff]
                  %1302 = vst [vmem:[%s1292 + $0x20] sm:$0xff] %v1301
                  %v1303 = vld [vmem:[%s1291 + $0x28] sm:$0xff]
                  %1304 = vst [vmem:[%s1292 + $0x28] sm:$0xff] %v1303
                  %v1305 = vld [vmem:[%s1291 + $0x30] sm:$0xff]
                  %1306 = vst [vmem:[%s1292 + $0x30] sm:$0xff] %v1305
                  %v1307 = vld [vmem:[%s1291 + $0x38] sm:$0xff]
                  %1308 = vst [vmem:[%s1292 + $0x38] sm:$0xff] %v1307
                  %v1309 = vld [vmem:[%s1291 + $0x40] sm:$0xff]
                  %1310 = vst [vmem:[%s1292 + $0x40] sm:$0xff] %v1309
                  %v1311 = vld [vmem:[%s1291 + $0x48] sm:$0xff]
                  %1312 = vst [vmem:[%s1292 + $0x48] sm:$0xff] %v1311
                  %v1313 = vld [vmem:[%s1291 + $0x50] sm:$0xff]
                  %1314 = vst [vmem:[%s1292 + $0x50] sm:$0xff] %v1313
                  %v1315 = vld [vmem:[%s1291 + $0x58] sm:$0xff]
                  %1316 = vst [vmem:[%s1292 + $0x58] sm:$0xff] %v1315
                  %v1317 = vld [vmem:[%s1291 + $0x60] sm:$0xff]
                  %1318 = vst [vmem:[%s1292 + $0x60] sm:$0xff] %v1317
                  %v1319 = vld [vmem:[%s1291 + $0x68] sm:$0xff]
                  %1320 = vst [vmem:[%s1292 + $0x68] sm:$0xff] %v1319
                  %v1321 = vld [vmem:[%s1291 + $0x70] sm:$0xff]
                  %1322 = vst [vmem:[%s1292 + $0x70] sm:$0xff] %v1321
                  %v1323 = vld [vmem:[%s1291 + $0x78] sm:$0xff]
                  %1324 = vst [vmem:[%s1292 + $0x78] sm:$0xff] %v1323
                  %v1325 = vld [vmem:[%s1291 + $0x80] sm:$0xff]
                  %1326 = vst [vmem:[%s1292 + $0x80] sm:$0xff] %v1325
                  %v1327 = vld [vmem:[%s1291 + $0x88] sm:$0xff]
                  %1328 = vst [vmem:[%s1292 + $0x88] sm:$0xff] %v1327
                  %v1329 = vld [vmem:[%s1291 + $0x90] sm:$0xff]
                  %1330 = vst [vmem:[%s1292 + $0x90] sm:$0xff] %v1329
                  %v1331 = vld [vmem:[%s1291 + $0x98] sm:$0xff]
                  %1332 = vst [vmem:[%s1292 + $0x98] sm:$0xff] %v1331
                  %v1333 = vld [vmem:[%s1291 + $0xa0] sm:$0xff]
                  %1334 = vst [vmem:[%s1292 + $0xa0] sm:$0xff] %v1333
                  %v1335 = vld [vmem:[%s1291 + $0xa8] sm:$0xff]
                  %1336 = vst [vmem:[%s1292 + $0xa8] sm:$0xff] %v1335
                  %v1337 = vld [vmem:[%s1291 + $0xb0] sm:$0xff]
                  %1338 = vst [vmem:[%s1292 + $0xb0] sm:$0xff] %v1337
                  %v1339 = vld [vmem:[%s1291 + $0xb8] sm:$0xff]
                  %1340 = vst [vmem:[%s1292 + $0xb8] sm:$0xff] %v1339
                  %v1341 = vld [vmem:[%s1291 + $0xc0] sm:$0xff]
                  %1342 = vst [vmem:[%s1292 + $0xc0] sm:$0xff] %v1341
                  %v1343 = vld [vmem:[%s1291 + $0xc8] sm:$0xff]
                  %1344 = vst [vmem:[%s1292 + $0xc8] sm:$0xff] %v1343
                  %v1345 = vld [vmem:[%s1291 + $0xd0] sm:$0xff]
                  %1346 = vst [vmem:[%s1292 + $0xd0] sm:$0xff] %v1345
                  %v1347 = vld [vmem:[%s1291 + $0xd8] sm:$0xff]
                  %1348 = vst [vmem:[%s1292 + $0xd8] sm:$0xff] %v1347
                  %v1349 = vld [vmem:[%s1291 + $0xe0] sm:$0xff]
                  %1350 = vst [vmem:[%s1292 + $0xe0] sm:$0xff] %v1349
                  %v1351 = vld [vmem:[%s1291 + $0xe8] sm:$0xff]
                  %1352 = vst [vmem:[%s1292 + $0xe8] sm:$0xff] %v1351
                  %v1353 = vld [vmem:[%s1291 + $0xf0] sm:$0xff]
                  %1354 = vst [vmem:[%s1292 + $0xf0] sm:$0xff] %v1353
                  %v1355 = vld [vmem:[%s1291 + $0xf8] sm:$0xff]
                  %1356 = vst [vmem:[%s1292 + $0xf8] sm:$0xff] %v1355
                  %v1357 = vld [vmem:[%s1291 + $0x100] sm:$0xff]
                  %1358 = vst [vmem:[%s1292 + $0x200] sm:$0xff] %v1357
                  %v1359 = vld [vmem:[%s1291 + $0x108] sm:$0xff]
                  %1360 = vst [vmem:[%s1292 + $0x208] sm:$0xff] %v1359
                  %v1361 = vld [vmem:[%s1291 + $0x110] sm:$0xff]
                  %1362 = vst [vmem:[%s1292 + $0x210] sm:$0xff] %v1361
                  %v1363 = vld [vmem:[%s1291 + $0x118] sm:$0xff]
                  %1364 = vst [vmem:[%s1292 + $0x218] sm:$0xff] %v1363
                  %v1365 = vld [vmem:[%s1291 + $0x120] sm:$0xff]
                  %1366 = vst [vmem:[%s1292 + $0x220] sm:$0xff] %v1365
                  %v1367 = vld [vmem:[%s1291 + $0x128] sm:$0xff]
                  %1368 = vst [vmem:[%s1292 + $0x228] sm:$0xff] %v1367
                  %v1369 = vld [vmem:[%s1291 + $0x130] sm:$0xff]
                  %1370 = vst [vmem:[%s1292 + $0x230] sm:$0xff] %v1369
                  %v1371 = vld [vmem:[%s1291 + $0x138] sm:$0xff]
                  %1372 = vst [vmem:[%s1292 + $0x238] sm:$0xff] %v1371
                  %v1373 = vld [vmem:[%s1291 + $0x140] sm:$0xff]
                  %1374 = vst [vmem:[%s1292 + $0x240] sm:$0xff] %v1373
                  %v1375 = vld [vmem:[%s1291 + $0x148] sm:$0xff]
                  %1376 = vst [vmem:[%s1292 + $0x248] sm:$0xff] %v1375
                  %v1377 = vld [vmem:[%s1291 + $0x150] sm:$0xff]
                  %1378 = vst [vmem:[%s1292 + $0x250] sm:$0xff] %v1377
                  %v1379 = vld [vmem:[%s1291 + $0x158] sm:$0xff]
                  %1380 = vst [vmem:[%s1292 + $0x258] sm:$0xff] %v1379
                  %v1381 = vld [vmem:[%s1291 + $0x160] sm:$0xff]
                  %1382 = vst [vmem:[%s1292 + $0x260] sm:$0xff] %v1381
                  %v1383 = vld [vmem:[%s1291 + $0x168] sm:$0xff]
                  %1384 = vst [vmem:[%s1292 + $0x268] sm:$0xff] %v1383
                  %v1385 = vld [vmem:[%s1291 + $0x170] sm:$0xff]
                  %1386 = vst [vmem:[%s1292 + $0x270] sm:$0xff] %v1385
                  %v1387 = vld [vmem:[%s1291 + $0x178] sm:$0xff]
                  %1388 = vst [vmem:[%s1292 + $0x278] sm:$0xff] %v1387
                  %v1389 = vld [vmem:[%s1291 + $0x180] sm:$0xff]
                  %1390 = vst [vmem:[%s1292 + $0x280] sm:$0xff] %v1389
                  %v1391 = vld [vmem:[%s1291 + $0x188] sm:$0xff]
                  %1392 = vst [vmem:[%s1292 + $0x288] sm:$0xff] %v1391
                  %v1393 = vld [vmem:[%s1291 + $0x190] sm:$0xff]
                  %1394 = vst [vmem:[%s1292 + $0x290] sm:$0xff] %v1393
                  %v1395 = vld [vmem:[%s1291 + $0x198] sm:$0xff]
                  %1396 = vst [vmem:[%s1292 + $0x298] sm:$0xff] %v1395
                  %v1397 = vld [vmem:[%s1291 + $0x1a0] sm:$0xff]
                  %1398 = vst [vmem:[%s1292 + $0x2a0] sm:$0xff] %v1397
                  %v1399 = vld [vmem:[%s1291 + $0x1a8] sm:$0xff]
                  %1400 = vst [vmem:[%s1292 + $0x2a8] sm:$0xff] %v1399
                  %v1401 = vld [vmem:[%s1291 + $0x1b0] sm:$0xff]
                  %1402 = vst [vmem:[%s1292 + $0x2b0] sm:$0xff] %v1401
                  %v1403 = vld [vmem:[%s1291 + $0x1b8] sm:$0xff]
                  %1404 = vst [vmem:[%s1292 + $0x2b8] sm:$0xff] %v1403
                  %v1405 = vld [vmem:[%s1291 + $0x1c0] sm:$0xff]
                  %1406 = vst [vmem:[%s1292 + $0x2c0] sm:$0xff] %v1405
                  %v1407 = vld [vmem:[%s1291 + $0x1c8] sm:$0xff]
                  %1408 = vst [vmem:[%s1292 + $0x2c8] sm:$0xff] %v1407
                  %v1409 = vld [vmem:[%s1291 + $0x1d0] sm:$0xff]
                  %1410 = vst [vmem:[%s1292 + $0x2d0] sm:$0xff] %v1409
                  %v1411 = vld [vmem:[%s1291 + $0x1d8] sm:$0xff]
                  %1412 = vst [vmem:[%s1292 + $0x2d8] sm:$0xff] %v1411
                  %v1413 = vld [vmem:[%s1291 + $0x1e0] sm:$0xff]
                  %1414 = vst [vmem:[%s1292 + $0x2e0] sm:$0xff] %v1413
                  %v1415 = vld [vmem:[%s1291 + $0x1e8] sm:$0xff]
                  %1416 = vst [vmem:[%s1292 + $0x2e8] sm:$0xff] %v1415
                  %v1417 = vld [vmem:[%s1291 + $0x1f0] sm:$0xff]
                  %1418 = vst [vmem:[%s1292 + $0x2f0] sm:$0xff] %v1417
                  %v1419 = vld [vmem:[%s1291 + $0x1f8] sm:$0xff]
                  %1420 = vst [vmem:[%s1292 + $0x2f8] sm:$0xff] %v1419
                  %v1421 = vld [vmem:[%s1291 + $0x200] sm:$0xff]
                  %1422 = vst [vmem:[%s1292 + $0x400] sm:$0xff] %v1421
                  %v1423 = vld [vmem:[%s1291 + $0x208] sm:$0xff]
                  %1424 = vst [vmem:[%s1292 + $0x408] sm:$0xff] %v1423
                  %v1425 = vld [vmem:[%s1291 + $0x210] sm:$0xff]
                  %1426 = vst [vmem:[%s1292 + $0x410] sm:$0xff] %v1425
                  %v1427 = vld [vmem:[%s1291 + $0x218] sm:$0xff]
                  %1428 = vst [vmem:[%s1292 + $0x418] sm:$0xff] %v1427
                  %v1429 = vld [vmem:[%s1291 + $0x220] sm:$0xff]
                  %1430 = vst [vmem:[%s1292 + $0x420] sm:$0xff] %v1429
                  %v1431 = vld [vmem:[%s1291 + $0x228] sm:$0xff]
                  %1432 = vst [vmem:[%s1292 + $0x428] sm:$0xff] %v1431
                  %v1433 = vld [vmem:[%s1291 + $0x230] sm:$0xff]
                  %1434 = vst [vmem:[%s1292 + $0x430] sm:$0xff] %v1433
                  %v1435 = vld [vmem:[%s1291 + $0x238] sm:$0xff]
                  %1436 = vst [vmem:[%s1292 + $0x438] sm:$0xff] %v1435
                  %v1437 = vld [vmem:[%s1291 + $0x240] sm:$0xff]
                  %1438 = vst [vmem:[%s1292 + $0x440] sm:$0xff] %v1437
                  %v1439 = vld [vmem:[%s1291 + $0x248] sm:$0xff]
                  %1440 = vst [vmem:[%s1292 + $0x448] sm:$0xff] %v1439
                  %v1441 = vld [vmem:[%s1291 + $0x250] sm:$0xff]
                  %1442 = vst [vmem:[%s1292 + $0x450] sm:$0xff] %v1441
                  %v1443 = vld [vmem:[%s1291 + $0x258] sm:$0xff]
                  %1444 = vst [vmem:[%s1292 + $0x458] sm:$0xff] %v1443
                  %v1445 = vld [vmem:[%s1291 + $0x260] sm:$0xff]
                  %1446 = vst [vmem:[%s1292 + $0x460] sm:$0xff] %v1445
                  %v1447 = vld [vmem:[%s1291 + $0x268] sm:$0xff]
                  %1448 = vst [vmem:[%s1292 + $0x468] sm:$0xff] %v1447
                  %v1449 = vld [vmem:[%s1291 + $0x270] sm:$0xff]
                  %1450 = vst [vmem:[%s1292 + $0x470] sm:$0xff] %v1449
                  %v1451 = vld [vmem:[%s1291 + $0x278] sm:$0xff]
                  %1452 = vst [vmem:[%s1292 + $0x478] sm:$0xff] %v1451
                  %v1453 = vld [vmem:[%s1291 + $0x280] sm:$0xff]
                  %1454 = vst [vmem:[%s1292 + $0x480] sm:$0xff] %v1453
                  %v1455 = vld [vmem:[%s1291 + $0x288] sm:$0xff]
                  %1456 = vst [vmem:[%s1292 + $0x488] sm:$0xff] %v1455
                  %v1457 = vld [vmem:[%s1291 + $0x290] sm:$0xff]
                  %1458 = vst [vmem:[%s1292 + $0x490] sm:$0xff] %v1457
                  %v1459 = vld [vmem:[%s1291 + $0x298] sm:$0xff]
                  %1460 = vst [vmem:[%s1292 + $0x498] sm:$0xff] %v1459
                  %v1461 = vld [vmem:[%s1291 + $0x2a0] sm:$0xff]
                  %1462 = vst [vmem:[%s1292 + $0x4a0] sm:$0xff] %v1461
                  %v1463 = vld [vmem:[%s1291 + $0x2a8] sm:$0xff]
                  %1464 = vst [vmem:[%s1292 + $0x4a8] sm:$0xff] %v1463
                  %v1465 = vld [vmem:[%s1291 + $0x2b0] sm:$0xff]
                  %1466 = vst [vmem:[%s1292 + $0x4b0] sm:$0xff] %v1465
                  %v1467 = vld [vmem:[%s1291 + $0x2b8] sm:$0xff]
                  %1468 = vst [vmem:[%s1292 + $0x4b8] sm:$0xff] %v1467
                  %v1469 = vld [vmem:[%s1291 + $0x2c0] sm:$0xff]
                  %1470 = vst [vmem:[%s1292 + $0x4c0] sm:$0xff] %v1469
                  %v1471 = vld [vmem:[%s1291 + $0x2c8] sm:$0xff]
                  %1472 = vst [vmem:[%s1292 + $0x4c8] sm:$0xff] %v1471
                  %v1473 = vld [vmem:[%s1291 + $0x2d0] sm:$0xff]
                  %1474 = vst [vmem:[%s1292 + $0x4d0] sm:$0xff] %v1473
                  %v1475 = vld [vmem:[%s1291 + $0x2d8] sm:$0xff]
                  %1476 = vst [vmem:[%s1292 + $0x4d8] sm:$0xff] %v1475
                  %v1477 = vld [vmem:[%s1291 + $0x2e0] sm:$0xff]
                  %1478 = vst [vmem:[%s1292 + $0x4e0] sm:$0xff] %v1477
                  %v1479 = vld [vmem:[%s1291 + $0x2e8] sm:$0xff]
                  %1480 = vst [vmem:[%s1292 + $0x4e8] sm:$0xff] %v1479
                  %v1481 = vld [vmem:[%s1291 + $0x2f0] sm:$0xff]
                  %1482 = vst [vmem:[%s1292 + $0x4f0] sm:$0xff] %v1481
                  %v1483 = vld [vmem:[%s1291 + $0x2f8] sm:$0xff]
                  %1484 = vst [vmem:[%s1292 + $0x4f8] sm:$0xff] %v1483
                  %v1485 = vld [vmem:[%s1291 + $0x300] sm:$0xff]
                  %1486 = vst [vmem:[%s1292 + $0x600] sm:$0xff] %v1485
                  %v1487 = vld [vmem:[%s1291 + $0x308] sm:$0xff]
                  %1488 = vst [vmem:[%s1292 + $0x608] sm:$0xff] %v1487
                  %v1489 = vld [vmem:[%s1291 + $0x310] sm:$0xff]
                  %1490 = vst [vmem:[%s1292 + $0x610] sm:$0xff] %v1489
                  %v1491 = vld [vmem:[%s1291 + $0x318] sm:$0xff]
                  %1492 = vst [vmem:[%s1292 + $0x618] sm:$0xff] %v1491
                  %v1493 = vld [vmem:[%s1291 + $0x320] sm:$0xff]
                  %1494 = vst [vmem:[%s1292 + $0x620] sm:$0xff] %v1493
                  %v1495 = vld [vmem:[%s1291 + $0x328] sm:$0xff]
                  %1496 = vst [vmem:[%s1292 + $0x628] sm:$0xff] %v1495
                  %v1497 = vld [vmem:[%s1291 + $0x330] sm:$0xff]
                  %1498 = vst [vmem:[%s1292 + $0x630] sm:$0xff] %v1497
                  %v1499 = vld [vmem:[%s1291 + $0x338] sm:$0xff]
                  %1500 = vst [vmem:[%s1292 + $0x638] sm:$0xff] %v1499
                  %v1501 = vld [vmem:[%s1291 + $0x340] sm:$0xff]
                  %1502 = vst [vmem:[%s1292 + $0x640] sm:$0xff] %v1501
                  %v1503 = vld [vmem:[%s1291 + $0x348] sm:$0xff]
                  %1504 = vst [vmem:[%s1292 + $0x648] sm:$0xff] %v1503
                  %v1505 = vld [vmem:[%s1291 + $0x350] sm:$0xff]
                  %1506 = vst [vmem:[%s1292 + $0x650] sm:$0xff] %v1505
                  %v1507 = vld [vmem:[%s1291 + $0x358] sm:$0xff]
                  %1508 = vst [vmem:[%s1292 + $0x658] sm:$0xff] %v1507
                  %v1509 = vld [vmem:[%s1291 + $0x360] sm:$0xff]
                  %1510 = vst [vmem:[%s1292 + $0x660] sm:$0xff] %v1509
                  %v1511 = vld [vmem:[%s1291 + $0x368] sm:$0xff]
                  %1512 = vst [vmem:[%s1292 + $0x668] sm:$0xff] %v1511
                  %v1513 = vld [vmem:[%s1291 + $0x370] sm:$0xff]
                  %1514 = vst [vmem:[%s1292 + $0x670] sm:$0xff] %v1513
                  %v1515 = vld [vmem:[%s1291 + $0x378] sm:$0xff]
                  %1516 = vst [vmem:[%s1292 + $0x678] sm:$0xff] %v1515
                  %v1517 = vld [vmem:[%s1291 + $0x380] sm:$0xff]
                  %1518 = vst [vmem:[%s1292 + $0x680] sm:$0xff] %v1517
                  %v1519 = vld [vmem:[%s1291 + $0x388] sm:$0xff]
                  %1520 = vst [vmem:[%s1292 + $0x688] sm:$0xff] %v1519
                  %v1521 = vld [vmem:[%s1291 + $0x390] sm:$0xff]
                  %1522 = vst [vmem:[%s1292 + $0x690] sm:$0xff] %v1521
                  %v1523 = vld [vmem:[%s1291 + $0x398] sm:$0xff]
                  %1524 = vst [vmem:[%s1292 + $0x698] sm:$0xff] %v1523
                  %v1525 = vld [vmem:[%s1291 + $0x3a0] sm:$0xff]
                  %1526 = vst [vmem:[%s1292 + $0x6a0] sm:$0xff] %v1525
                  %v1527 = vld [vmem:[%s1291 + $0x3a8] sm:$0xff]
                  %1528 = vst [vmem:[%s1292 + $0x6a8] sm:$0xff] %v1527
                  %v1529 = vld [vmem:[%s1291 + $0x3b0] sm:$0xff]
                  %1530 = vst [vmem:[%s1292 + $0x6b0] sm:$0xff] %v1529
                  %v1531 = vld [vmem:[%s1291 + $0x3b8] sm:$0xff]
                  %1532 = vst [vmem:[%s1292 + $0x6b8] sm:$0xff] %v1531
                  %v1533 = vld [vmem:[%s1291 + $0x3c0] sm:$0xff]
                  %1534 = vst [vmem:[%s1292 + $0x6c0] sm:$0xff] %v1533
                  %v1535 = vld [vmem:[%s1291 + $0x3c8] sm:$0xff]
                  %1536 = vst [vmem:[%s1292 + $0x6c8] sm:$0xff] %v1535
                  %v1537 = vld [vmem:[%s1291 + $0x3d0] sm:$0xff]
                  %1538 = vst [vmem:[%s1292 + $0x6d0] sm:$0xff] %v1537
                  %v1539 = vld [vmem:[%s1291 + $0x3d8] sm:$0xff]
                  %1540 = vst [vmem:[%s1292 + $0x6d8] sm:$0xff] %v1539
                  %v1541 = vld [vmem:[%s1291 + $0x3e0] sm:$0xff]
                  %1542 = vst [vmem:[%s1292 + $0x6e0] sm:$0xff] %v1541
                  %v1543 = vld [vmem:[%s1291 + $0x3e8] sm:$0xff]
                  %1544 = vst [vmem:[%s1292 + $0x6e8] sm:$0xff] %v1543
                  %v1545 = vld [vmem:[%s1291 + $0x3f0] sm:$0xff]
                  %1546 = vst [vmem:[%s1292 + $0x6f0] sm:$0xff] %v1545
                  %v1547 = vld [vmem:[%s1291 + $0x3f8] sm:$0xff]
                  %1548 = vst [vmem:[%s1292 + $0x6f8] sm:$0xff] %v1547
                  %v1549 = vld [vmem:[%s1291 + $0x400] sm:$0xff]
                  %1550 = vst [vmem:[%s1292 + $0x800] sm:$0xff] %v1549
                  %v1551 = vld [vmem:[%s1291 + $0x408] sm:$0xff]
                  %1552 = vst [vmem:[%s1292 + $0x808] sm:$0xff] %v1551
                  %v1553 = vld [vmem:[%s1291 + $0x410] sm:$0xff]
                  %1554 = vst [vmem:[%s1292 + $0x810] sm:$0xff] %v1553
                  %v1555 = vld [vmem:[%s1291 + $0x418] sm:$0xff]
                  %1556 = vst [vmem:[%s1292 + $0x818] sm:$0xff] %v1555
                  %v1557 = vld [vmem:[%s1291 + $0x420] sm:$0xff]
                  %1558 = vst [vmem:[%s1292 + $0x820] sm:$0xff] %v1557
                  %v1559 = vld [vmem:[%s1291 + $0x428] sm:$0xff]
                  %1560 = vst [vmem:[%s1292 + $0x828] sm:$0xff] %v1559
                  %v1561 = vld [vmem:[%s1291 + $0x430] sm:$0xff]
                  %1562 = vst [vmem:[%s1292 + $0x830] sm:$0xff] %v1561
                  %v1563 = vld [vmem:[%s1291 + $0x438] sm:$0xff]
                  %1564 = vst [vmem:[%s1292 + $0x838] sm:$0xff] %v1563
                  %v1565 = vld [vmem:[%s1291 + $0x440] sm:$0xff]
                  %1566 = vst [vmem:[%s1292 + $0x840] sm:$0xff] %v1565
                  %v1567 = vld [vmem:[%s1291 + $0x448] sm:$0xff]
                  %1568 = vst [vmem:[%s1292 + $0x848] sm:$0xff] %v1567
                  %v1569 = vld [vmem:[%s1291 + $0x450] sm:$0xff]
                  %1570 = vst [vmem:[%s1292 + $0x850] sm:$0xff] %v1569
                  %v1571 = vld [vmem:[%s1291 + $0x458] sm:$0xff]
                  %1572 = vst [vmem:[%s1292 + $0x858] sm:$0xff] %v1571
                  %v1573 = vld [vmem:[%s1291 + $0x460] sm:$0xff]
                  %1574 = vst [vmem:[%s1292 + $0x860] sm:$0xff] %v1573
                  %v1575 = vld [vmem:[%s1291 + $0x468] sm:$0xff]
                  %1576 = vst [vmem:[%s1292 + $0x868] sm:$0xff] %v1575
                  %v1577 = vld [vmem:[%s1291 + $0x470] sm:$0xff]
                  %1578 = vst [vmem:[%s1292 + $0x870] sm:$0xff] %v1577
                  %v1579 = vld [vmem:[%s1291 + $0x478] sm:$0xff]
                  %1580 = vst [vmem:[%s1292 + $0x878] sm:$0xff] %v1579
                  %v1581 = vld [vmem:[%s1291 + $0x480] sm:$0xff]
                  %1582 = vst [vmem:[%s1292 + $0x880] sm:$0xff] %v1581
                  %v1583 = vld [vmem:[%s1291 + $0x488] sm:$0xff]
                  %1584 = vst [vmem:[%s1292 + $0x888] sm:$0xff] %v1583
                  %v1585 = vld [vmem:[%s1291 + $0x490] sm:$0xff]
                  %1586 = vst [vmem:[%s1292 + $0x890] sm:$0xff] %v1585
                  %v1587 = vld [vmem:[%s1291 + $0x498] sm:$0xff]
                  %1588 = vst [vmem:[%s1292 + $0x898] sm:$0xff] %v1587
                  %v1589 = vld [vmem:[%s1291 + $0x4a0] sm:$0xff]
                  %1590 = vst [vmem:[%s1292 + $0x8a0] sm:$0xff] %v1589
                  %v1591 = vld [vmem:[%s1291 + $0x4a8] sm:$0xff]
                  %1592 = vst [vmem:[%s1292 + $0x8a8] sm:$0xff] %v1591
                  %v1593 = vld [vmem:[%s1291 + $0x4b0] sm:$0xff]
                  %1594 = vst [vmem:[%s1292 + $0x8b0] sm:$0xff] %v1593
                  %v1595 = vld [vmem:[%s1291 + $0x4b8] sm:$0xff]
                  %1596 = vst [vmem:[%s1292 + $0x8b8] sm:$0xff] %v1595
                  %v1597 = vld [vmem:[%s1291 + $0x4c0] sm:$0xff]
                  %1598 = vst [vmem:[%s1292 + $0x8c0] sm:$0xff] %v1597
                  %v1599 = vld [vmem:[%s1291 + $0x4c8] sm:$0xff]
                  %1600 = vst [vmem:[%s1292 + $0x8c8] sm:$0xff] %v1599
                  %v1601 = vld [vmem:[%s1291 + $0x4d0] sm:$0xff]
                  %1602 = vst [vmem:[%s1292 + $0x8d0] sm:$0xff] %v1601
                  %v1603 = vld [vmem:[%s1291 + $0x4d8] sm:$0xff]
                  %1604 = vst [vmem:[%s1292 + $0x8d8] sm:$0xff] %v1603
                  %v1605 = vld [vmem:[%s1291 + $0x4e0] sm:$0xff]
                  %1606 = vst [vmem:[%s1292 + $0x8e0] sm:$0xff] %v1605
                  %v1607 = vld [vmem:[%s1291 + $0x4e8] sm:$0xff]
                  %1608 = vst [vmem:[%s1292 + $0x8e8] sm:$0xff] %v1607
                  %v1609 = vld [vmem:[%s1291 + $0x4f0] sm:$0xff]
                  %1610 = vst [vmem:[%s1292 + $0x8f0] sm:$0xff] %v1609
                  %v1611 = vld [vmem:[%s1291 + $0x4f8] sm:$0xff]
                  %1612 = vst [vmem:[%s1292 + $0x8f8] sm:$0xff] %v1611
                  %v1613 = vld [vmem:[%s1291 + $0x500] sm:$0xff]
                  %1614 = vst [vmem:[%s1292 + $0xa00] sm:$0xff] %v1613
                  %v1615 = vld [vmem:[%s1291 + $0x508] sm:$0xff]
                  %1616 = vst [vmem:[%s1292 + $0xa08] sm:$0xff] %v1615
                  %v1617 = vld [vmem:[%s1291 + $0x510] sm:$0xff]
                  %1618 = vst [vmem:[%s1292 + $0xa10] sm:$0xff] %v1617
                  %v1619 = vld [vmem:[%s1291 + $0x518] sm:$0xff]
                  %1620 = vst [vmem:[%s1292 + $0xa18] sm:$0xff] %v1619
                  %v1621 = vld [vmem:[%s1291 + $0x520] sm:$0xff]
                  %1622 = vst [vmem:[%s1292 + $0xa20] sm:$0xff] %v1621
                  %v1623 = vld [vmem:[%s1291 + $0x528] sm:$0xff]
                  %1624 = vst [vmem:[%s1292 + $0xa28] sm:$0xff] %v1623
                  %v1625 = vld [vmem:[%s1291 + $0x530] sm:$0xff]
                  %1626 = vst [vmem:[%s1292 + $0xa30] sm:$0xff] %v1625
                  %v1627 = vld [vmem:[%s1291 + $0x538] sm:$0xff]
                  %1628 = vst [vmem:[%s1292 + $0xa38] sm:$0xff] %v1627
                  %v1629 = vld [vmem:[%s1291 + $0x540] sm:$0xff]
                  %1630 = vst [vmem:[%s1292 + $0xa40] sm:$0xff] %v1629
                  %v1631 = vld [vmem:[%s1291 + $0x548] sm:$0xff]
                  %1632 = vst [vmem:[%s1292 + $0xa48] sm:$0xff] %v1631
                  %v1633 = vld [vmem:[%s1291 + $0x550] sm:$0xff]
                  %1634 = vst [vmem:[%s1292 + $0xa50] sm:$0xff] %v1633
                  %v1635 = vld [vmem:[%s1291 + $0x558] sm:$0xff]
                  %1636 = vst [vmem:[%s1292 + $0xa58] sm:$0xff] %v1635
                  %v1637 = vld [vmem:[%s1291 + $0x560] sm:$0xff]
                  %1638 = vst [vmem:[%s1292 + $0xa60] sm:$0xff] %v1637
                  %v1639 = vld [vmem:[%s1291 + $0x568] sm:$0xff]
                  %1640 = vst [vmem:[%s1292 + $0xa68] sm:$0xff] %v1639
                  %v1641 = vld [vmem:[%s1291 + $0x570] sm:$0xff]
                  %1642 = vst [vmem:[%s1292 + $0xa70] sm:$0xff] %v1641
                  %v1643 = vld [vmem:[%s1291 + $0x578] sm:$0xff]
                  %1644 = vst [vmem:[%s1292 + $0xa78] sm:$0xff] %v1643
                  %v1645 = vld [vmem:[%s1291 + $0x580] sm:$0xff]
                  %1646 = vst [vmem:[%s1292 + $0xa80] sm:$0xff] %v1645
                  %v1647 = vld [vmem:[%s1291 + $0x588] sm:$0xff]
                  %1648 = vst [vmem:[%s1292 + $0xa88] sm:$0xff] %v1647
                  %v1649 = vld [vmem:[%s1291 + $0x590] sm:$0xff]
                  %1650 = vst [vmem:[%s1292 + $0xa90] sm:$0xff] %v1649
                  %v1651 = vld [vmem:[%s1291 + $0x598] sm:$0xff]
                  %1652 = vst [vmem:[%s1292 + $0xa98] sm:$0xff] %v1651
                  %v1653 = vld [vmem:[%s1291 + $0x5a0] sm:$0xff]
                  %1654 = vst [vmem:[%s1292 + $0xaa0] sm:$0xff] %v1653
                  %v1655 = vld [vmem:[%s1291 + $0x5a8] sm:$0xff]
                  %1656 = vst [vmem:[%s1292 + $0xaa8] sm:$0xff] %v1655
                  %v1657 = vld [vmem:[%s1291 + $0x5b0] sm:$0xff]
                  %1658 = vst [vmem:[%s1292 + $0xab0] sm:$0xff] %v1657
                  %v1659 = vld [vmem:[%s1291 + $0x5b8] sm:$0xff]
                  %1660 = vst [vmem:[%s1292 + $0xab8] sm:$0xff] %v1659
                  %v1661 = vld [vmem:[%s1291 + $0x5c0] sm:$0xff]
                  %1662 = vst [vmem:[%s1292 + $0xac0] sm:$0xff] %v1661
                  %v1663 = vld [vmem:[%s1291 + $0x5c8] sm:$0xff]
                  %1664 = vst [vmem:[%s1292 + $0xac8] sm:$0xff] %v1663
                  %v1665 = vld [vmem:[%s1291 + $0x5d0] sm:$0xff]
                  %1666 = vst [vmem:[%s1292 + $0xad0] sm:$0xff] %v1665
                  %v1667 = vld [vmem:[%s1291 + $0x5d8] sm:$0xff]
                  %1668 = vst [vmem:[%s1292 + $0xad8] sm:$0xff] %v1667
                  %v1669 = vld [vmem:[%s1291 + $0x5e0] sm:$0xff]
                  %1670 = vst [vmem:[%s1292 + $0xae0] sm:$0xff] %v1669
                  %v1671 = vld [vmem:[%s1291 + $0x5e8] sm:$0xff]
                  %1672 = vst [vmem:[%s1292 + $0xae8] sm:$0xff] %v1671
                  %v1673 = vld [vmem:[%s1291 + $0x5f0] sm:$0xff]
                  %1674 = vst [vmem:[%s1292 + $0xaf0] sm:$0xff] %v1673
                  %v1675 = vld [vmem:[%s1291 + $0x5f8] sm:$0xff]
                  %1676 = vst [vmem:[%s1292 + $0xaf8] sm:$0xff] %v1675
                $region64: #{mag_block_forward.5} parent=58 // loop_footer
                  %s1290 = sadd.s32 1, %s1286
                $region65: #{mag_block_forward.5} parent=58 // loop_footer_branch
                  %1285 = sbr.rel target = $region61
                $region66: #{mag_block_forward.5} parent=58 // loop_exit
                  _
              $region59: #{mag_block_forward.5} parent=43 // pred_fallthru
                _
              // Predicated region
              $region67: #{mag_block_forward.5} parent=43 // pred_check
                _
              $region68: #{mag_block_forward.5} parent=43 // pred_check_branch
                %1678 = sbr.rel target = $region70
              $region69: #{mag_block_forward.5} parent=43 // pred_region
                _
              $region70: #{mag_block_forward.5} parent=43 // pred_fallthru
                _
            $region44: #{mag_block_forward.5} parent=39 // pred_fallthru
              _
            // Predicated region
            $region45: #{mag_block_forward.5} parent=39 // pred_check
              _
            $region46: #{mag_block_forward.5} parent=39 // pred_check_branch
              %888 = sbr.rel target = $region48
            $region47: #{mag_block_forward.5} parent=39 // pred_region
              %s890 = ssub.s32 256, 1
              loop: start=0, step=1, limit=1
              $region49: #{mag_block_forward.5} parent=47 // loop_pre_header
                _
              $region50: #{mag_block_forward.5} parent=47 // loop_header
                %s892 = sphi 0, %s896
                %p893 = scmp.ge.s32.totalorder %s892, 1
                %s897 = sphi %s876, %s876
                %s898 = sphi %s882, %s882
              $region51: #{mag_block_forward.5} parent=47 // loop_header_branch
                %895 = sbr.rel (%p893) target = $region55
              $region52: #{mag_block_forward.5} parent=47 // loop_body
                %v899 = vld [vmem:[%s897] sm:%s890]
                %900 = vst [vmem:[%s898] sm:%s890] %v899
                %v901 = vld [vmem:[%s897 + $0x8] sm:%s890]
                %902 = vst [vmem:[%s898 + $0x8] sm:%s890] %v901
                %v903 = vld [vmem:[%s897 + $0x10] sm:%s890]
                %904 = vst [vmem:[%s898 + $0x10] sm:%s890] %v903
                %v905 = vld [vmem:[%s897 + $0x18] sm:%s890]
                %906 = vst [vmem:[%s898 + $0x18] sm:%s890] %v905
                %v907 = vld [vmem:[%s897 + $0x20] sm:%s890]
                %908 = vst [vmem:[%s898 + $0x20] sm:%s890] %v907
                %v909 = vld [vmem:[%s897 + $0x28] sm:%s890]
                %910 = vst [vmem:[%s898 + $0x28] sm:%s890] %v909
                %v911 = vld [vmem:[%s897 + $0x30] sm:%s890]
                %912 = vst [vmem:[%s898 + $0x30] sm:%s890] %v911
                %v913 = vld [vmem:[%s897 + $0x38] sm:%s890]
                %914 = vst [vmem:[%s898 + $0x38] sm:%s890] %v913
                %v915 = vld [vmem:[%s897 + $0x40] sm:%s890]
                %916 = vst [vmem:[%s898 + $0x40] sm:%s890] %v915
                %v917 = vld [vmem:[%s897 + $0x48] sm:%s890]
                %918 = vst [vmem:[%s898 + $0x48] sm:%s890] %v917
                %v919 = vld [vmem:[%s897 + $0x50] sm:%s890]
                %920 = vst [vmem:[%s898 + $0x50] sm:%s890] %v919
                %v921 = vld [vmem:[%s897 + $0x58] sm:%s890]
                %922 = vst [vmem:[%s898 + $0x58] sm:%s890] %v921
                %v923 = vld [vmem:[%s897 + $0x60] sm:%s890]
                %924 = vst [vmem:[%s898 + $0x60] sm:%s890] %v923
                %v925 = vld [vmem:[%s897 + $0x68] sm:%s890]
                %926 = vst [vmem:[%s898 + $0x68] sm:%s890] %v925
                %v927 = vld [vmem:[%s897 + $0x70] sm:%s890]
                %928 = vst [vmem:[%s898 + $0x70] sm:%s890] %v927
                %v929 = vld [vmem:[%s897 + $0x78] sm:%s890]
                %930 = vst [vmem:[%s898 + $0x78] sm:%s890] %v929
                %v931 = vld [vmem:[%s897 + $0x80] sm:%s890]
                %932 = vst [vmem:[%s898 + $0x80] sm:%s890] %v931
                %v933 = vld [vmem:[%s897 + $0x88] sm:%s890]
                %934 = vst [vmem:[%s898 + $0x88] sm:%s890] %v933
                %v935 = vld [vmem:[%s897 + $0x90] sm:%s890]
                %936 = vst [vmem:[%s898 + $0x90] sm:%s890] %v935
                %v937 = vld [vmem:[%s897 + $0x98] sm:%s890]
                %938 = vst [vmem:[%s898 + $0x98] sm:%s890] %v937
                %v939 = vld [vmem:[%s897 + $0xa0] sm:%s890]
                %940 = vst [vmem:[%s898 + $0xa0] sm:%s890] %v939
                %v941 = vld [vmem:[%s897 + $0xa8] sm:%s890]
                %942 = vst [vmem:[%s898 + $0xa8] sm:%s890] %v941
                %v943 = vld [vmem:[%s897 + $0xb0] sm:%s890]
                %944 = vst [vmem:[%s898 + $0xb0] sm:%s890] %v943
                %v945 = vld [vmem:[%s897 + $0xb8] sm:%s890]
                %946 = vst [vmem:[%s898 + $0xb8] sm:%s890] %v945
                %v947 = vld [vmem:[%s897 + $0xc0] sm:%s890]
                %948 = vst [vmem:[%s898 + $0xc0] sm:%s890] %v947
                %v949 = vld [vmem:[%s897 + $0xc8] sm:%s890]
                %950 = vst [vmem:[%s898 + $0xc8] sm:%s890] %v949
                %v951 = vld [vmem:[%s897 + $0xd0] sm:%s890]
                %952 = vst [vmem:[%s898 + $0xd0] sm:%s890] %v951
                %v953 = vld [vmem:[%s897 + $0xd8] sm:%s890]
                %954 = vst [vmem:[%s898 + $0xd8] sm:%s890] %v953
                %v955 = vld [vmem:[%s897 + $0xe0] sm:%s890]
                %956 = vst [vmem:[%s898 + $0xe0] sm:%s890] %v955
                %v957 = vld [vmem:[%s897 + $0xe8] sm:%s890]
                %958 = vst [vmem:[%s898 + $0xe8] sm:%s890] %v957
                %v959 = vld [vmem:[%s897 + $0xf0] sm:%s890]
                %960 = vst [vmem:[%s898 + $0xf0] sm:%s890] %v959
                %v961 = vld [vmem:[%s897 + $0xf8] sm:%s890]
                %962 = vst [vmem:[%s898 + $0xf8] sm:%s890] %v961
                %v963 = vld [vmem:[%s897 + $0x100] sm:%s890]
                %964 = vst [vmem:[%s898 + $0x200] sm:%s890] %v963
                %v965 = vld [vmem:[%s897 + $0x108] sm:%s890]
                %966 = vst [vmem:[%s898 + $0x208] sm:%s890] %v965
                %v967 = vld [vmem:[%s897 + $0x110] sm:%s890]
                %968 = vst [vmem:[%s898 + $0x210] sm:%s890] %v967
                %v969 = vld [vmem:[%s897 + $0x118] sm:%s890]
                %970 = vst [vmem:[%s898 + $0x218] sm:%s890] %v969
                %v971 = vld [vmem:[%s897 + $0x120] sm:%s890]
                %972 = vst [vmem:[%s898 + $0x220] sm:%s890] %v971
                %v973 = vld [vmem:[%s897 + $0x128] sm:%s890]
                %974 = vst [vmem:[%s898 + $0x228] sm:%s890] %v973
                %v975 = vld [vmem:[%s897 + $0x130] sm:%s890]
                %976 = vst [vmem:[%s898 + $0x230] sm:%s890] %v975
                %v977 = vld [vmem:[%s897 + $0x138] sm:%s890]
                %978 = vst [vmem:[%s898 + $0x238] sm:%s890] %v977
                %v979 = vld [vmem:[%s897 + $0x140] sm:%s890]
                %980 = vst [vmem:[%s898 + $0x240] sm:%s890] %v979
                %v981 = vld [vmem:[%s897 + $0x148] sm:%s890]
                %982 = vst [vmem:[%s898 + $0x248] sm:%s890] %v981
                %v983 = vld [vmem:[%s897 + $0x150] sm:%s890]
                %984 = vst [vmem:[%s898 + $0x250] sm:%s890] %v983
                %v985 = vld [vmem:[%s897 + $0x158] sm:%s890]
                %986 = vst [vmem:[%s898 + $0x258] sm:%s890] %v985
                %v987 = vld [vmem:[%s897 + $0x160] sm:%s890]
                %988 = vst [vmem:[%s898 + $0x260] sm:%s890] %v987
                %v989 = vld [vmem:[%s897 + $0x168] sm:%s890]
                %990 = vst [vmem:[%s898 + $0x268] sm:%s890] %v989
                %v991 = vld [vmem:[%s897 + $0x170] sm:%s890]
                %992 = vst [vmem:[%s898 + $0x270] sm:%s890] %v991
                %v993 = vld [vmem:[%s897 + $0x178] sm:%s890]
                %994 = vst [vmem:[%s898 + $0x278] sm:%s890] %v993
                %v995 = vld [vmem:[%s897 + $0x180] sm:%s890]
                %996 = vst [vmem:[%s898 + $0x280] sm:%s890] %v995
                %v997 = vld [vmem:[%s897 + $0x188] sm:%s890]
                %998 = vst [vmem:[%s898 + $0x288] sm:%s890] %v997
                %v999 = vld [vmem:[%s897 + $0x190] sm:%s890]
                %1000 = vst [vmem:[%s898 + $0x290] sm:%s890] %v999
                %v1001 = vld [vmem:[%s897 + $0x198] sm:%s890]
                %1002 = vst [vmem:[%s898 + $0x298] sm:%s890] %v1001
                %v1003 = vld [vmem:[%s897 + $0x1a0] sm:%s890]
                %1004 = vst [vmem:[%s898 + $0x2a0] sm:%s890] %v1003
                %v1005 = vld [vmem:[%s897 + $0x1a8] sm:%s890]
                %1006 = vst [vmem:[%s898 + $0x2a8] sm:%s890] %v1005
                %v1007 = vld [vmem:[%s897 + $0x1b0] sm:%s890]
                %1008 = vst [vmem:[%s898 + $0x2b0] sm:%s890] %v1007
                %v1009 = vld [vmem:[%s897 + $0x1b8] sm:%s890]
                %1010 = vst [vmem:[%s898 + $0x2b8] sm:%s890] %v1009
                %v1011 = vld [vmem:[%s897 + $0x1c0] sm:%s890]
                %1012 = vst [vmem:[%s898 + $0x2c0] sm:%s890] %v1011
                %v1013 = vld [vmem:[%s897 + $0x1c8] sm:%s890]
                %1014 = vst [vmem:[%s898 + $0x2c8] sm:%s890] %v1013
                %v1015 = vld [vmem:[%s897 + $0x1d0] sm:%s890]
                %1016 = vst [vmem:[%s898 + $0x2d0] sm:%s890] %v1015
                %v1017 = vld [vmem:[%s897 + $0x1d8] sm:%s890]
                %1018 = vst [vmem:[%s898 + $0x2d8] sm:%s890] %v1017
                %v1019 = vld [vmem:[%s897 + $0x1e0] sm:%s890]
                %1020 = vst [vmem:[%s898 + $0x2e0] sm:%s890] %v1019
                %v1021 = vld [vmem:[%s897 + $0x1e8] sm:%s890]
                %1022 = vst [vmem:[%s898 + $0x2e8] sm:%s890] %v1021
                %v1023 = vld [vmem:[%s897 + $0x1f0] sm:%s890]
                %1024 = vst [vmem:[%s898 + $0x2f0] sm:%s890] %v1023
                %v1025 = vld [vmem:[%s897 + $0x1f8] sm:%s890]
                %1026 = vst [vmem:[%s898 + $0x2f8] sm:%s890] %v1025
                %v1027 = vld [vmem:[%s897 + $0x200] sm:%s890]
                %1028 = vst [vmem:[%s898 + $0x400] sm:%s890] %v1027
                %v1029 = vld [vmem:[%s897 + $0x208] sm:%s890]
                %1030 = vst [vmem:[%s898 + $0x408] sm:%s890] %v1029
                %v1031 = vld [vmem:[%s897 + $0x210] sm:%s890]
                %1032 = vst [vmem:[%s898 + $0x410] sm:%s890] %v1031
                %v1033 = vld [vmem:[%s897 + $0x218] sm:%s890]
                %1034 = vst [vmem:[%s898 + $0x418] sm:%s890] %v1033
                %v1035 = vld [vmem:[%s897 + $0x220] sm:%s890]
                %1036 = vst [vmem:[%s898 + $0x420] sm:%s890] %v1035
                %v1037 = vld [vmem:[%s897 + $0x228] sm:%s890]
                %1038 = vst [vmem:[%s898 + $0x428] sm:%s890] %v1037
                %v1039 = vld [vmem:[%s897 + $0x230] sm:%s890]
                %1040 = vst [vmem:[%s898 + $0x430] sm:%s890] %v1039
                %v1041 = vld [vmem:[%s897 + $0x238] sm:%s890]
                %1042 = vst [vmem:[%s898 + $0x438] sm:%s890] %v1041
                %v1043 = vld [vmem:[%s897 + $0x240] sm:%s890]
                %1044 = vst [vmem:[%s898 + $0x440] sm:%s890] %v1043
                %v1045 = vld [vmem:[%s897 + $0x248] sm:%s890]
                %1046 = vst [vmem:[%s898 + $0x448] sm:%s890] %v1045
                %v1047 = vld [vmem:[%s897 + $0x250] sm:%s890]
                %1048 = vst [vmem:[%s898 + $0x450] sm:%s890] %v1047
                %v1049 = vld [vmem:[%s897 + $0x258] sm:%s890]
                %1050 = vst [vmem:[%s898 + $0x458] sm:%s890] %v1049
                %v1051 = vld [vmem:[%s897 + $0x260] sm:%s890]
                %1052 = vst [vmem:[%s898 + $0x460] sm:%s890] %v1051
                %v1053 = vld [vmem:[%s897 + $0x268] sm:%s890]
                %1054 = vst [vmem:[%s898 + $0x468] sm:%s890] %v1053
                %v1055 = vld [vmem:[%s897 + $0x270] sm:%s890]
                %1056 = vst [vmem:[%s898 + $0x470] sm:%s890] %v1055
                %v1057 = vld [vmem:[%s897 + $0x278] sm:%s890]
                %1058 = vst [vmem:[%s898 + $0x478] sm:%s890] %v1057
                %v1059 = vld [vmem:[%s897 + $0x280] sm:%s890]
                %1060 = vst [vmem:[%s898 + $0x480] sm:%s890] %v1059
                %v1061 = vld [vmem:[%s897 + $0x288] sm:%s890]
                %1062 = vst [vmem:[%s898 + $0x488] sm:%s890] %v1061
                %v1063 = vld [vmem:[%s897 + $0x290] sm:%s890]
                %1064 = vst [vmem:[%s898 + $0x490] sm:%s890] %v1063
                %v1065 = vld [vmem:[%s897 + $0x298] sm:%s890]
                %1066 = vst [vmem:[%s898 + $0x498] sm:%s890] %v1065
                %v1067 = vld [vmem:[%s897 + $0x2a0] sm:%s890]
                %1068 = vst [vmem:[%s898 + $0x4a0] sm:%s890] %v1067
                %v1069 = vld [vmem:[%s897 + $0x2a8] sm:%s890]
                %1070 = vst [vmem:[%s898 + $0x4a8] sm:%s890] %v1069
                %v1071 = vld [vmem:[%s897 + $0x2b0] sm:%s890]
                %1072 = vst [vmem:[%s898 + $0x4b0] sm:%s890] %v1071
                %v1073 = vld [vmem:[%s897 + $0x2b8] sm:%s890]
                %1074 = vst [vmem:[%s898 + $0x4b8] sm:%s890] %v1073
                %v1075 = vld [vmem:[%s897 + $0x2c0] sm:%s890]
                %1076 = vst [vmem:[%s898 + $0x4c0] sm:%s890] %v1075
                %v1077 = vld [vmem:[%s897 + $0x2c8] sm:%s890]
                %1078 = vst [vmem:[%s898 + $0x4c8] sm:%s890] %v1077
                %v1079 = vld [vmem:[%s897 + $0x2d0] sm:%s890]
                %1080 = vst [vmem:[%s898 + $0x4d0] sm:%s890] %v1079
                %v1081 = vld [vmem:[%s897 + $0x2d8] sm:%s890]
                %1082 = vst [vmem:[%s898 + $0x4d8] sm:%s890] %v1081
                %v1083 = vld [vmem:[%s897 + $0x2e0] sm:%s890]
                %1084 = vst [vmem:[%s898 + $0x4e0] sm:%s890] %v1083
                %v1085 = vld [vmem:[%s897 + $0x2e8] sm:%s890]
                %1086 = vst [vmem:[%s898 + $0x4e8] sm:%s890] %v1085
                %v1087 = vld [vmem:[%s897 + $0x2f0] sm:%s890]
                %1088 = vst [vmem:[%s898 + $0x4f0] sm:%s890] %v1087
                %v1089 = vld [vmem:[%s897 + $0x2f8] sm:%s890]
                %1090 = vst [vmem:[%s898 + $0x4f8] sm:%s890] %v1089
                %v1091 = vld [vmem:[%s897 + $0x300] sm:%s890]
                %1092 = vst [vmem:[%s898 + $0x600] sm:%s890] %v1091
                %v1093 = vld [vmem:[%s897 + $0x308] sm:%s890]
                %1094 = vst [vmem:[%s898 + $0x608] sm:%s890] %v1093
                %v1095 = vld [vmem:[%s897 + $0x310] sm:%s890]
                %1096 = vst [vmem:[%s898 + $0x610] sm:%s890] %v1095
                %v1097 = vld [vmem:[%s897 + $0x318] sm:%s890]
                %1098 = vst [vmem:[%s898 + $0x618] sm:%s890] %v1097
                %v1099 = vld [vmem:[%s897 + $0x320] sm:%s890]
                %1100 = vst [vmem:[%s898 + $0x620] sm:%s890] %v1099
                %v1101 = vld [vmem:[%s897 + $0x328] sm:%s890]
                %1102 = vst [vmem:[%s898 + $0x628] sm:%s890] %v1101
                %v1103 = vld [vmem:[%s897 + $0x330] sm:%s890]
                %1104 = vst [vmem:[%s898 + $0x630] sm:%s890] %v1103
                %v1105 = vld [vmem:[%s897 + $0x338] sm:%s890]
                %1106 = vst [vmem:[%s898 + $0x638] sm:%s890] %v1105
                %v1107 = vld [vmem:[%s897 + $0x340] sm:%s890]
                %1108 = vst [vmem:[%s898 + $0x640] sm:%s890] %v1107
                %v1109 = vld [vmem:[%s897 + $0x348] sm:%s890]
                %1110 = vst [vmem:[%s898 + $0x648] sm:%s890] %v1109
                %v1111 = vld [vmem:[%s897 + $0x350] sm:%s890]
                %1112 = vst [vmem:[%s898 + $0x650] sm:%s890] %v1111
                %v1113 = vld [vmem:[%s897 + $0x358] sm:%s890]
                %1114 = vst [vmem:[%s898 + $0x658] sm:%s890] %v1113
                %v1115 = vld [vmem:[%s897 + $0x360] sm:%s890]
                %1116 = vst [vmem:[%s898 + $0x660] sm:%s890] %v1115
                %v1117 = vld [vmem:[%s897 + $0x368] sm:%s890]
                %1118 = vst [vmem:[%s898 + $0x668] sm:%s890] %v1117
                %v1119 = vld [vmem:[%s897 + $0x370] sm:%s890]
                %1120 = vst [vmem:[%s898 + $0x670] sm:%s890] %v1119
                %v1121 = vld [vmem:[%s897 + $0x378] sm:%s890]
                %1122 = vst [vmem:[%s898 + $0x678] sm:%s890] %v1121
                %v1123 = vld [vmem:[%s897 + $0x380] sm:%s890]
                %1124 = vst [vmem:[%s898 + $0x680] sm:%s890] %v1123
                %v1125 = vld [vmem:[%s897 + $0x388] sm:%s890]
                %1126 = vst [vmem:[%s898 + $0x688] sm:%s890] %v1125
                %v1127 = vld [vmem:[%s897 + $0x390] sm:%s890]
                %1128 = vst [vmem:[%s898 + $0x690] sm:%s890] %v1127
                %v1129 = vld [vmem:[%s897 + $0x398] sm:%s890]
                %1130 = vst [vmem:[%s898 + $0x698] sm:%s890] %v1129
                %v1131 = vld [vmem:[%s897 + $0x3a0] sm:%s890]
                %1132 = vst [vmem:[%s898 + $0x6a0] sm:%s890] %v1131
                %v1133 = vld [vmem:[%s897 + $0x3a8] sm:%s890]
                %1134 = vst [vmem:[%s898 + $0x6a8] sm:%s890] %v1133
                %v1135 = vld [vmem:[%s897 + $0x3b0] sm:%s890]
                %1136 = vst [vmem:[%s898 + $0x6b0] sm:%s890] %v1135
                %v1137 = vld [vmem:[%s897 + $0x3b8] sm:%s890]
                %1138 = vst [vmem:[%s898 + $0x6b8] sm:%s890] %v1137
                %v1139 = vld [vmem:[%s897 + $0x3c0] sm:%s890]
                %1140 = vst [vmem:[%s898 + $0x6c0] sm:%s890] %v1139
                %v1141 = vld [vmem:[%s897 + $0x3c8] sm:%s890]
                %1142 = vst [vmem:[%s898 + $0x6c8] sm:%s890] %v1141
                %v1143 = vld [vmem:[%s897 + $0x3d0] sm:%s890]
                %1144 = vst [vmem:[%s898 + $0x6d0] sm:%s890] %v1143
                %v1145 = vld [vmem:[%s897 + $0x3d8] sm:%s890]
                %1146 = vst [vmem:[%s898 + $0x6d8] sm:%s890] %v1145
                %v1147 = vld [vmem:[%s897 + $0x3e0] sm:%s890]
                %1148 = vst [vmem:[%s898 + $0x6e0] sm:%s890] %v1147
                %v1149 = vld [vmem:[%s897 + $0x3e8] sm:%s890]
                %1150 = vst [vmem:[%s898 + $0x6e8] sm:%s890] %v1149
                %v1151 = vld [vmem:[%s897 + $0x3f0] sm:%s890]
                %1152 = vst [vmem:[%s898 + $0x6f0] sm:%s890] %v1151
                %v1153 = vld [vmem:[%s897 + $0x3f8] sm:%s890]
                %1154 = vst [vmem:[%s898 + $0x6f8] sm:%s890] %v1153
                %v1155 = vld [vmem:[%s897 + $0x400] sm:%s890]
                %1156 = vst [vmem:[%s898 + $0x800] sm:%s890] %v1155
                %v1157 = vld [vmem:[%s897 + $0x408] sm:%s890]
                %1158 = vst [vmem:[%s898 + $0x808] sm:%s890] %v1157
                %v1159 = vld [vmem:[%s897 + $0x410] sm:%s890]
                %1160 = vst [vmem:[%s898 + $0x810] sm:%s890] %v1159
                %v1161 = vld [vmem:[%s897 + $0x418] sm:%s890]
                %1162 = vst [vmem:[%s898 + $0x818] sm:%s890] %v1161
                %v1163 = vld [vmem:[%s897 + $0x420] sm:%s890]
                %1164 = vst [vmem:[%s898 + $0x820] sm:%s890] %v1163
                %v1165 = vld [vmem:[%s897 + $0x428] sm:%s890]
                %1166 = vst [vmem:[%s898 + $0x828] sm:%s890] %v1165
                %v1167 = vld [vmem:[%s897 + $0x430] sm:%s890]
                %1168 = vst [vmem:[%s898 + $0x830] sm:%s890] %v1167
                %v1169 = vld [vmem:[%s897 + $0x438] sm:%s890]
                %1170 = vst [vmem:[%s898 + $0x838] sm:%s890] %v1169
                %v1171 = vld [vmem:[%s897 + $0x440] sm:%s890]
                %1172 = vst [vmem:[%s898 + $0x840] sm:%s890] %v1171
                %v1173 = vld [vmem:[%s897 + $0x448] sm:%s890]
                %1174 = vst [vmem:[%s898 + $0x848] sm:%s890] %v1173
                %v1175 = vld [vmem:[%s897 + $0x450] sm:%s890]
                %1176 = vst [vmem:[%s898 + $0x850] sm:%s890] %v1175
                %v1177 = vld [vmem:[%s897 + $0x458] sm:%s890]
                %1178 = vst [vmem:[%s898 + $0x858] sm:%s890] %v1177
                %v1179 = vld [vmem:[%s897 + $0x460] sm:%s890]
                %1180 = vst [vmem:[%s898 + $0x860] sm:%s890] %v1179
                %v1181 = vld [vmem:[%s897 + $0x468] sm:%s890]
                %1182 = vst [vmem:[%s898 + $0x868] sm:%s890] %v1181
                %v1183 = vld [vmem:[%s897 + $0x470] sm:%s890]
                %1184 = vst [vmem:[%s898 + $0x870] sm:%s890] %v1183
                %v1185 = vld [vmem:[%s897 + $0x478] sm:%s890]
                %1186 = vst [vmem:[%s898 + $0x878] sm:%s890] %v1185
                %v1187 = vld [vmem:[%s897 + $0x480] sm:%s890]
                %1188 = vst [vmem:[%s898 + $0x880] sm:%s890] %v1187
                %v1189 = vld [vmem:[%s897 + $0x488] sm:%s890]
                %1190 = vst [vmem:[%s898 + $0x888] sm:%s890] %v1189
                %v1191 = vld [vmem:[%s897 + $0x490] sm:%s890]
                %1192 = vst [vmem:[%s898 + $0x890] sm:%s890] %v1191
                %v1193 = vld [vmem:[%s897 + $0x498] sm:%s890]
                %1194 = vst [vmem:[%s898 + $0x898] sm:%s890] %v1193
                %v1195 = vld [vmem:[%s897 + $0x4a0] sm:%s890]
                %1196 = vst [vmem:[%s898 + $0x8a0] sm:%s890] %v1195
                %v1197 = vld [vmem:[%s897 + $0x4a8] sm:%s890]
                %1198 = vst [vmem:[%s898 + $0x8a8] sm:%s890] %v1197
                %v1199 = vld [vmem:[%s897 + $0x4b0] sm:%s890]
                %1200 = vst [vmem:[%s898 + $0x8b0] sm:%s890] %v1199
                %v1201 = vld [vmem:[%s897 + $0x4b8] sm:%s890]
                %1202 = vst [vmem:[%s898 + $0x8b8] sm:%s890] %v1201
                %v1203 = vld [vmem:[%s897 + $0x4c0] sm:%s890]
                %1204 = vst [vmem:[%s898 + $0x8c0] sm:%s890] %v1203
                %v1205 = vld [vmem:[%s897 + $0x4c8] sm:%s890]
                %1206 = vst [vmem:[%s898 + $0x8c8] sm:%s890] %v1205
                %v1207 = vld [vmem:[%s897 + $0x4d0] sm:%s890]
                %1208 = vst [vmem:[%s898 + $0x8d0] sm:%s890] %v1207
                %v1209 = vld [vmem:[%s897 + $0x4d8] sm:%s890]
                %1210 = vst [vmem:[%s898 + $0x8d8] sm:%s890] %v1209
                %v1211 = vld [vmem:[%s897 + $0x4e0] sm:%s890]
                %1212 = vst [vmem:[%s898 + $0x8e0] sm:%s890] %v1211
                %v1213 = vld [vmem:[%s897 + $0x4e8] sm:%s890]
                %1214 = vst [vmem:[%s898 + $0x8e8] sm:%s890] %v1213
                %v1215 = vld [vmem:[%s897 + $0x4f0] sm:%s890]
                %1216 = vst [vmem:[%s898 + $0x8f0] sm:%s890] %v1215
                %v1217 = vld [vmem:[%s897 + $0x4f8] sm:%s890]
                %1218 = vst [vmem:[%s898 + $0x8f8] sm:%s890] %v1217
                %v1219 = vld [vmem:[%s897 + $0x500] sm:%s890]
                %1220 = vst [vmem:[%s898 + $0xa00] sm:%s890] %v1219
                %v1221 = vld [vmem:[%s897 + $0x508] sm:%s890]
                %1222 = vst [vmem:[%s898 + $0xa08] sm:%s890] %v1221
                %v1223 = vld [vmem:[%s897 + $0x510] sm:%s890]
                %1224 = vst [vmem:[%s898 + $0xa10] sm:%s890] %v1223
                %v1225 = vld [vmem:[%s897 + $0x518] sm:%s890]
                %1226 = vst [vmem:[%s898 + $0xa18] sm:%s890] %v1225
                %v1227 = vld [vmem:[%s897 + $0x520] sm:%s890]
                %1228 = vst [vmem:[%s898 + $0xa20] sm:%s890] %v1227
                %v1229 = vld [vmem:[%s897 + $0x528] sm:%s890]
                %1230 = vst [vmem:[%s898 + $0xa28] sm:%s890] %v1229
                %v1231 = vld [vmem:[%s897 + $0x530] sm:%s890]
                %1232 = vst [vmem:[%s898 + $0xa30] sm:%s890] %v1231
                %v1233 = vld [vmem:[%s897 + $0x538] sm:%s890]
                %1234 = vst [vmem:[%s898 + $0xa38] sm:%s890] %v1233
                %v1235 = vld [vmem:[%s897 + $0x540] sm:%s890]
                %1236 = vst [vmem:[%s898 + $0xa40] sm:%s890] %v1235
                %v1237 = vld [vmem:[%s897 + $0x548] sm:%s890]
                %1238 = vst [vmem:[%s898 + $0xa48] sm:%s890] %v1237
                %v1239 = vld [vmem:[%s897 + $0x550] sm:%s890]
                %1240 = vst [vmem:[%s898 + $0xa50] sm:%s890] %v1239
                %v1241 = vld [vmem:[%s897 + $0x558] sm:%s890]
                %1242 = vst [vmem:[%s898 + $0xa58] sm:%s890] %v1241
                %v1243 = vld [vmem:[%s897 + $0x560] sm:%s890]
                %1244 = vst [vmem:[%s898 + $0xa60] sm:%s890] %v1243
                %v1245 = vld [vmem:[%s897 + $0x568] sm:%s890]
                %1246 = vst [vmem:[%s898 + $0xa68] sm:%s890] %v1245
                %v1247 = vld [vmem:[%s897 + $0x570] sm:%s890]
                %1248 = vst [vmem:[%s898 + $0xa70] sm:%s890] %v1247
                %v1249 = vld [vmem:[%s897 + $0x578] sm:%s890]
                %1250 = vst [vmem:[%s898 + $0xa78] sm:%s890] %v1249
                %v1251 = vld [vmem:[%s897 + $0x580] sm:%s890]
                %1252 = vst [vmem:[%s898 + $0xa80] sm:%s890] %v1251
                %v1253 = vld [vmem:[%s897 + $0x588] sm:%s890]
                %1254 = vst [vmem:[%s898 + $0xa88] sm:%s890] %v1253
                %v1255 = vld [vmem:[%s897 + $0x590] sm:%s890]
                %1256 = vst [vmem:[%s898 + $0xa90] sm:%s890] %v1255
                %v1257 = vld [vmem:[%s897 + $0x598] sm:%s890]
                %1258 = vst [vmem:[%s898 + $0xa98] sm:%s890] %v1257
                %v1259 = vld [vmem:[%s897 + $0x5a0] sm:%s890]
                %1260 = vst [vmem:[%s898 + $0xaa0] sm:%s890] %v1259
                %v1261 = vld [vmem:[%s897 + $0x5a8] sm:%s890]
                %1262 = vst [vmem:[%s898 + $0xaa8] sm:%s890] %v1261
                %v1263 = vld [vmem:[%s897 + $0x5b0] sm:%s890]
                %1264 = vst [vmem:[%s898 + $0xab0] sm:%s890] %v1263
                %v1265 = vld [vmem:[%s897 + $0x5b8] sm:%s890]
                %1266 = vst [vmem:[%s898 + $0xab8] sm:%s890] %v1265
                %v1267 = vld [vmem:[%s897 + $0x5c0] sm:%s890]
                %1268 = vst [vmem:[%s898 + $0xac0] sm:%s890] %v1267
                %v1269 = vld [vmem:[%s897 + $0x5c8] sm:%s890]
                %1270 = vst [vmem:[%s898 + $0xac8] sm:%s890] %v1269
                %v1271 = vld [vmem:[%s897 + $0x5d0] sm:%s890]
                %1272 = vst [vmem:[%s898 + $0xad0] sm:%s890] %v1271
                %v1273 = vld [vmem:[%s897 + $0x5d8] sm:%s890]
                %1274 = vst [vmem:[%s898 + $0xad8] sm:%s890] %v1273
                %v1275 = vld [vmem:[%s897 + $0x5e0] sm:%s890]
                %1276 = vst [vmem:[%s898 + $0xae0] sm:%s890] %v1275
                %v1277 = vld [vmem:[%s897 + $0x5e8] sm:%s890]
                %1278 = vst [vmem:[%s898 + $0xae8] sm:%s890] %v1277
                %v1279 = vld [vmem:[%s897 + $0x5f0] sm:%s890]
                %1280 = vst [vmem:[%s898 + $0xaf0] sm:%s890] %v1279
                %v1281 = vld [vmem:[%s897 + $0x5f8] sm:%s890]
                %1282 = vst [vmem:[%s898 + $0xaf8] sm:%s890] %v1281
              $region53: #{mag_block_forward.5} parent=47 // loop_footer
                %s896 = sadd.s32 1, %s892
              $region54: #{mag_block_forward.5} parent=47 // loop_footer_branch
                %891 = sbr.rel target = $region50
              $region55: #{mag_block_forward.5} parent=47 // loop_exit
                _
            $region48: #{mag_block_forward.5} parent=39 // pred_fallthru
              _
          $region40: #{mag_block_forward.5} parent=35 // pred_fallthru
            _
          %1679 = vnop
        $region36: #{mag_block_forward.5} parent=31 // pred_fallthru
          _
      $region32: #{mag_block_forward.5} parent=5 // pred_fallthru
        _
      %p1680 = scmp.le.s32.totalorder 2, %s11
      // Predicated region
      $region71: #{mag_block_forward.5} parent=5 // pred_check
        %p1681 = pneg %p1680
      $region72: #{mag_block_forward.5} parent=5 // pred_check_branch
        %1683 = sbr.rel (%p1681) target = $region74
      $region73: #{mag_block_forward.5} parent=5 // pred_region
        %s1684 = ssub.s32 %s11, 2
        // Predicated region
        $region75: #{mag_block_forward.5} parent=73 // pred_check
          %p1685 = pneg %p113
        $region76: #{mag_block_forward.5} parent=73 // pred_check_branch
          %1687 = sbr.rel (%p1685) target = $region78
        $region77: #{mag_block_forward.5} parent=73 // pred_region
          %s1688 = sand.u32 %s98, 1
          %s1689 = sand.u32 %s98, 1
          %s1690 = smul.addr %s1689, 1536
          %s1691 = scalar_lea.vmem [#allocation3], %s1690
        $region78: #{mag_block_forward.5} parent=73 // pred_fallthru
          _
      $region74: #{mag_block_forward.5} parent=5 // pred_fallthru
        _
    $region6: #{mag_block_forward.5} parent=1 // loop_footer
      %s15 = sadd.s32 1, %s11
    $region7: #{mag_block_forward.5} parent=1 // loop_footer_branch
      %10 = sbr.rel target = $region3
    $region8: #{mag_block_forward.5} parent=1 // loop_exit
      _

</llo_original>
